<compile_context>
chip_gen: v5e
topology: v5e:2x2
jax: 0.10.0
libtpu: 0.0.40
codegen_flags: <defaults>
</compile_context>

<pallas_src>
import math
import functools

import jax
import jax.numpy as jnp
from jax import lax
from jax.experimental import pallas as pl
from jax.experimental.pallas import tpu as pltpu

_EPS = 1e-6  # LayerNorm eps (partial(nn.LayerNorm, eps=1e-06))


# ----------------------------- in-kernel helpers -----------------------------

def _layernorm(x, w, b):
    """LayerNorm over the last axis. x:[R,H] (f32), w/b:[1,H] (f32)."""
    mu = jnp.mean(x, axis=-1, keepdims=True)
    d = x - mu
    var = jnp.mean(d * d, axis=-1, keepdims=True)
    return d * lax.rsqrt(var + _EPS) * w + b


def _erf(x):
    # Numerical-Recipes erfc rational approximation, abs err < 1.2e-7 (f32 level).
    a = jnp.abs(x)
    t = 1.0 / (1.0 + 0.5 * a)
    poly = -1.26551223 + t * (1.00002368 + t * (0.37409196 + t * (0.09678418 +
           t * (-0.18628806 + t * (0.27886807 + t * (-1.13520398 + t * (1.48851587 +
           t * (-0.82215223 + t * 0.17087277))))))))
    erfc_a = t * jnp.exp(-a * a + poly)
    return jnp.where(x >= 0, 1.0 - erfc_a, erfc_a - 1.0)


def _gelu_exact(x):
    # matches torch.nn.GELU() (approximate='none')
    return 0.5 * x * (1.0 + _erf(x * (1.0 / math.sqrt(2.0))))


# ----------------------------- fused encoder-stack kernel --------------------

def _encoder_stack_kernel(x_ref, pos_ref, prompt_ref,
                          ln1w_ref, ln1b_ref, wqkv_ref, bqkv_ref,
                          wo_ref, bo_ref, ln2w_ref, ln2b_ref,
                          w1_ref, b1_ref, w2_ref, b2_ref,
                          lnfw_ref, lnfb_ref,
                          o_ref, xc_ref, *, num_heads, approx_recip):
    """grid = (B//Bt, L). One grid step = one encoder layer for one batch block.

    Blocks (VMEM):
      x:[Bt,S,H]  pos:[1,S,H]  prompt:[1,P,H]
      ln*:[1,1,H]  wqkv:[1,H,3H]  bqkv:[1,1,3H]  wo:[1,H,H]  bo:[1,1,H]
      w1:[1,H,M]  b1:[1,1,M]  w2:[1,M,H]  b2:[1,1,H]  lnf*:[1,H]
      out:[Bt,S,H]
    Scratch: xc:[Bt,S,H] f32 — kept-row activation carried across the layer axis.
    """
    Bt, S, H = x_ref.shape
    P = prompt_ref.shape[1]
    hd = H // num_heads
    R = Bt * S
    l = pl.program_id(1)
    last_l = pl.num_programs(1) - 1

    cdt = wqkv_ref.dtype  # matmul-operand dtype (bf16 or f32); accumulation is f32

    def mm(a, w):  # activation @ weight, f32 accumulation
        return jnp.dot(a.astype(cdt), w.astype(cdt),
                       preferred_element_type=jnp.float32)

    def mm_nt(a, b):  # a @ b.T without materializing a transpose
        return lax.dot_general(a.astype(cdt), b.astype(cdt),
                               (((1,), (1,)), ((), ())),
                               preferred_element_type=jnp.float32)

    # Layer 0: load the input once per batch block (+ positional embedding).
    @pl.when(l == 0)
    def _():
        xc_ref[...] = x_ref[...] + pos_ref[...]

    xcur = xc_ref[...]                                    # [Bt, S, H] f32
    ln1w, ln1b = ln1w_ref[0], ln1b_ref[0]

    # ---- ln_1 + packed QKV on the kept rows (batch-blocked M = Bt*S) ----
    y = _layernorm(xcur.reshape(R, H), ln1w, ln1b)        # [R, H]
    qkv = (mm(y, wqkv_ref[0]) + bqkv_ref[0]).reshape(Bt, S, 3 * H)

    # ---- prompt rows: batch-independent -> LN1 + K/V ONCE per layer step ----
    # (their attention/MLP outputs are discarded by the module, so only K/V are
    #  ever needed; the folded Q scale in the first H columns is simply unused)
    yp = _layernorm(prompt_ref[0].astype(jnp.float32), ln1w, ln1b)   # [P, H]
    kvp = mm(yp, wqkv_ref[0]) + bqkv_ref[0]                          # [P, 3H]

    q = qkv[:, :, 0:H]
    k = qkv[:, :, H:2 * H]
    v = qkv[:, :, 2 * H:3 * H]

    wo = wo_ref[0]                                        # [H, H] cdt

    # ---- multi-head self-attention (exact softmax); per-head output is
    # accumulated directly into the out-projection (no head concat). ----
    attn = jnp.zeros((R, H), jnp.float32)
    for h in range(num_heads):
        lo = h * hd
        q_h = q[:, :, lo:lo + hd]                         # [Bt, S, hd]
        k_h = k[:, :, lo:lo + hd]
        v_h = v[:, :, lo:lo + hd]
        k_ph = kvp[:, H + lo:H + lo + hd]                 # [P, hd] (shared)
        v_ph = kvp[:, 2 * H + lo:2 * H + lo + hd]

        # scores against the per-batch sequence keys and the shared prompt keys
        s_seq = jnp.einsum('bqd,bkd->bqk', q_h.astype(cdt), k_h.astype(cdt),
                           preferred_element_type=jnp.float32)       # [Bt,S,S]
        s_p = mm_nt(q_h.reshape(R, hd), k_ph).reshape(Bt, S, P)      # [Bt,S,P]

        m = jnp.maximum(jnp.max(s_seq, axis=-1, keepdims=True),
                        jnp.max(s_p, axis=-1, keepdims=True))
        p_seq = jnp.exp(s_seq - m)
        p_p = jnp.exp(s_p - m)
        denom = (jnp.sum(p_seq, axis=-1, keepdims=True)
                 + jnp.sum(p_p, axis=-1, keepdims=True))             # [Bt,S,1]

        oh = jnp.einsum('bqk,bkd->bqd', p_seq.astype(cdt), v_h.astype(cdt),
                        preferred_element_type=jnp.float32)          # [Bt,S,hd]
        oh = oh + mm(p_p.reshape(R, P), v_ph).reshape(Bt, S, hd)
        # fold 1/sum into the O(S*hd) head output instead of the O(S*(S+P)) probs
        oh = oh * pl.reciprocal(denom, approx=approx_recip)

        attn = attn + mm(oh.reshape(R, hd), wo[lo:lo + hd, :])       # [R, H]

    attn = attn + bo_ref[0]
    x2 = xcur + attn.reshape(Bt, S, H)                    # residual 1 (dropout=id)

    # ---- ln_2 + MLP (exact GELU) on the kept rows, batch-blocked ----
    y2 = _layernorm(x2.reshape(R, H), ln2w_ref[0], ln2b_ref[0])
    h1 = _gelu_exact(mm(y2, w1_ref[0]) + b1_ref[0])       # [R, M]
    x3 = x2 + (mm(h1, w2_ref[0]) + b2_ref[0]).reshape(Bt, S, H)      # residual 2

    xc_ref[...] = x3                                      # carry to next layer

    # ---- final LayerNorm, written once per batch block ----
    @pl.when(l == last_l)
    def _():
        o_ref[...] = _layernorm(x3.reshape(R, H),
                                lnfw_ref[...], lnfb_ref[...]).reshape(Bt, S, H)


# ----------------------------- parameter packing -----------------------------

def _pack_params(params, *, num_heads, compute_dtype):
    """Stack per-layer params into [L, ...] arrays for BlockSpec streaming and
    fold the attention scale into the Q projection."""
    layers = params["layers"]
    H = layers[0]["ln1_w"].shape[0]
    hd = H // num_heads
    scale = 1.0 / math.sqrt(hd)
    qscale = jnp.concatenate([jnp.full((H,), scale, jnp.float32),
                              jnp.ones((2 * H,), jnp.float32)])

    def stack(fn):
        return jnp.stack([fn(lp) for lp in layers], axis=0)

    return dict(
        ln1_w=stack(lambda p: p["ln1_w"].reshape(1, H)),
        ln1_b=stack(lambda p: p["ln1_b"].reshape(1, H)),
        # nn.MultiheadAttention in_proj_weight is [3H, H] -> wqkv = [H, 3H]
        wqkv=stack(lambda p: (p["in_proj_w"].T * qscale).astype(compute_dtype)),
        bqkv=stack(lambda p: (p["in_proj_b"] * qscale).reshape(1, 3 * H)),
        wo=stack(lambda p: p["out_proj_w"].T.astype(compute_dtype)),
        bo=stack(lambda p: p["out_proj_b"].reshape(1, H)),
        ln2_w=stack(lambda p: p["ln2_w"].reshape(1, H)),
        ln2_b=stack(lambda p: p["ln2_b"].reshape(1, H)),
        w1=stack(lambda p: p["lin1_w"].T.astype(compute_dtype)),
        b1=stack(lambda p: p["lin1_b"].reshape(1, -1)),
        w2=stack(lambda p: p["lin2_w"].T.astype(compute_dtype)),
        b2=stack(lambda p: p["lin2_b"].reshape(1, H)),
        ln_f_w=params["ln_w"].reshape(1, H),
        ln_f_b=params["ln_b"].reshape(1, H),
    )


def _pick_batch_block(B):
    """Largest divisor Bt of B that still leaves >= 2 parallel blocks (so a v7x
    megacore keeps both TensorCores busy); falls back to 1."""
    best = 1
    for bt in range(1, B + 1):
        if B % bt == 0 and B // bt >= 2:
            best = bt
    return best


# ----------------------------- Encoder forward --------------------------------

def encoder_forward(x, prompts, params, *, num_heads,
                    compute_dtype=jnp.bfloat16, batch_block=None):
    """Mirrors Encoder.forward(input, prompts).

    x:       [B, S, H] float32
    prompts: [1, num_layers, P, H] float32 (shared across the batch, as in the
             PyTorch call: index_select(1,[i]).squeeze(1).repeat_interleave(B,0))

    compute_dtype: matmul-operand dtype (bf16 default; accumulation, LayerNorm,
      softmax and residuals stay f32 — expect ~1e-2 relative tolerance vs the
      f32 PyTorch reference; pass jnp.float32 for the closest match).
    """
    B, S, H = x.shape
    assert prompts.shape[0] == 1, "prompts are shared across the batch"
    assert S % 8 == 0, "TODO(synk): pad S to a sublane multiple for general seq lengths"
    prompts_l = prompts[0]                     # [L, P, H] — no repeat over batch
    L, P, _ = prompts_l.shape

    Bt = batch_block if batch_block is not None else _pick_batch_block(B)
    assert B % Bt == 0

    pk = _pack_params(params, num_heads=num_heads, compute_dtype=compute_dtype)
    M = pk["w1"].shape[-1]

    def lspec(r, c):  # per-layer streamed weight/prompt block
        return pl.BlockSpec((1, r, c), lambda b, l: (l, 0, 0))

    in_specs = [
        pl.BlockSpec((Bt, S, H), lambda b, l: (b, 0, 0)),  # x (batch block)
        pl.BlockSpec((1, S, H), lambda b, l: (0, 0, 0)),   # pos_embedding
        lspec(P, H),                                       # prompts
        lspec(1, H), lspec(1, H),                          # ln1 w, b
        lspec(H, 3 * H), lspec(1, 3 * H),                  # wqkv, bqkv
        lspec(H, H), lspec(1, H),                          # wo, bo
        lspec(1, H), lspec(1, H),                          # ln2 w, b
        lspec(H, M), lspec(1, M),                          # w1, b1
        lspec(M, H), lspec(1, H),                          # w2, b2
        pl.BlockSpec((1, H), lambda b, l: (0, 0)),         # final ln w
        pl.BlockSpec((1, H), lambda b, l: (0, 0)),         # final ln b
    ]
    out_specs = pl.BlockSpec((Bt, S, H), lambda b, l: (b, 0, 0))

    kernel = functools.partial(_encoder_stack_kernel, num_heads=num_heads,
                               approx_recip=(compute_dtype != jnp.float32))

    return pl.pallas_call(
        kernel,
        out_shape=jax.ShapeDtypeStruct((B, S, H), jnp.float32),
        grid_spec=pltpu.PrefetchScalarGridSpec(
            num_scalar_prefetch=0,
            grid=(B // Bt, L),
            in_specs=in_specs,
            out_specs=out_specs,
            scratch_shapes=[pltpu.VMEM((Bt, S, H), jnp.float32)],
        ),
        compiler_params=pltpu.CompilerParams(
            # batch blocks are independent (megacore-shardable); layers are a
            # sequential carry through the VMEM scratch and must stay arbitrary.
            dimension_semantics=("parallel", "arbitrary"),
            vmem_limit_bytes=64 * 1024 * 1024),
    )(x, params["pos_embedding"], prompts_l,
      pk["ln1_w"], pk["ln1_b"], pk["wqkv"], pk["bqkv"],
      pk["wo"], pk["bo"], pk["ln2_w"], pk["ln2_b"],
      pk["w1"], pk["b1"], pk["w2"], pk["b2"],
      pk["ln_f_w"], pk["ln_f_b"])


# ----------------------------- deterministic params ---------------------------

def init_params(key, seq_len, num_layers, num_heads, hidden, mlp_dim):
    """Parameters in the same layout as the PyTorch module (transposed/packed
    later by _pack_params)."""
    keys = iter(jax.random.split(key, 4 * num_layers + 1))

    def nrm(shape, std):
        return (std * jax.random.normal(next(keys), shape)).astype(jnp.float32)

    layers = []
    for _ in range(num_layers):
        layers.append(dict(
            ln1_w=jnp.ones((hidden,), jnp.float32),
            ln1_b=jnp.zeros((hidden,), jnp.float32),
            in_proj_w=nrm((3 * hidden, hidden), 0.05),        # packed QKV, torch layout
            in_proj_b=jnp.zeros((3 * hidden,), jnp.float32),
            out_proj_w=nrm((hidden, hidden), 0.05),
            out_proj_b=jnp.zeros((hidden,), jnp.float32),
            ln2_w=jnp.ones((hidden,), jnp.float32),
            ln2_b=jnp.zeros((hidden,), jnp.float32),
            lin1_w=nrm((mlp_dim, hidden), 0.05),              # xavier-style small init
            lin1_b=jnp.zeros((mlp_dim,), jnp.float32),        # bias init std=1e-6 ~ 0
            lin2_w=nrm((hidden, mlp_dim), 0.05),
            lin2_b=jnp.zeros((hidden,), jnp.float32),
        ))
    return dict(
        pos_embedding=nrm((1, seq_len, hidden), 0.02),
        layers=layers,
        ln_w=jnp.ones((hidden,), jnp.float32),
        ln_b=jnp.zeros((hidden,), jnp.float32),
    )


# ----------------------------- demo -------------------------------------------

if __name__ == "__main__":
    # Small but lane-friendly shapes (hidden = 128 keeps the last dim lane-dense);
    # batch=4 so batch blocking (Bt=2) kicks in while keeping 2 parallel blocks.
    B, SEQ, NUM_LAYERS, NUM_HEADS, HIDDEN, MLP_DIM, PROMPT_LEN = 4, 8, 2, 4, 128, 256, 2

    key = jax.random.PRNGKey(0)
    k_x, k_p, k_w = jax.random.split(key, 3)
    x = jax.random.normal(k_x, (B, SEQ, HIDDEN), jnp.float32)
    prompts = jax.random.normal(k_p, (1, NUM_LAYERS, PROMPT_LEN, HIDDEN), jnp.float32)
    params = init_params(k_w, SEQ, NUM_LAYERS, NUM_HEADS, HIDDEN, MLP_DIM)

    fwd = jax.jit(functools.partial(encoder_forward, num_heads=NUM_HEADS))
    out = jax.block_until_ready(fwd(x, prompts, params))
    assert out.shape == (B, SEQ, HIDDEN) and out.dtype == jnp.float32
    assert bool(jnp.all(jnp.isfinite(out)))
    print("KERNEL_OK")
</pallas_src>

<mosaic_0001>
module attributes {stable_mosaic.version = 11 : i64} {
  func.func @_encoder_stack_kernel(%arg0: i32, %arg1: i32, %arg2: memref<2x8x128xf32, #tpu.memory_space<vmem>>, %arg3: memref<1x8x128xf32, #tpu.memory_space<vmem>>, %arg4: memref<1x2x128xf32, #tpu.memory_space<vmem>>, %arg5: memref<1x1x128xf32, #tpu.memory_space<vmem>>, %arg6: memref<1x1x128xf32, #tpu.memory_space<vmem>>, %arg7: memref<1x128x384xbf16, #tpu.memory_space<vmem>>, %arg8: memref<1x1x384xf32, #tpu.memory_space<vmem>>, %arg9: memref<1x128x128xbf16, #tpu.memory_space<vmem>>, %arg10: memref<1x1x128xf32, #tpu.memory_space<vmem>>, %arg11: memref<1x1x128xf32, #tpu.memory_space<vmem>>, %arg12: memref<1x1x128xf32, #tpu.memory_space<vmem>>, %arg13: memref<1x128x256xbf16, #tpu.memory_space<vmem>>, %arg14: memref<1x1x256xf32, #tpu.memory_space<vmem>>, %arg15: memref<1x256x128xbf16, #tpu.memory_space<vmem>>, %arg16: memref<1x1x128xf32, #tpu.memory_space<vmem>>, %arg17: memref<1x128xf32, #tpu.memory_space<vmem>>, %arg18: memref<1x128xf32, #tpu.memory_space<vmem>>, %arg19: memref<2x8x128xf32, #tpu.memory_space<vmem>>, %arg20: memref<2x8x128xf32, #tpu.memory_space<vmem>>) attributes {dimension_semantics = [#tpu.dimension_semantics<parallel>, #tpu.dimension_semantics<arbitrary>], iteration_bounds = array<i64: 2, 2>, scalar_prefetch = 0 : i64, scratch_operands = 1 : i64, tpu.core_type = #tpu.core_type<tc>, window_params = [{transform_indices = @transform_0, window_bounds = array<i64: 2, 8, 128>}, {pipeline_mode = #tpu.pipeline_mode<synchronous>, transform_indices = @transform_1, window_bounds = array<i64: 1, 8, 128>}, {transform_indices = @transform_2, window_bounds = array<i64: 1, 2, 128>}, {transform_indices = @transform_3, window_bounds = array<i64: 1, 1, 128>}, {transform_indices = @transform_4, window_bounds = array<i64: 1, 1, 128>}, {transform_indices = @transform_5, window_bounds = array<i64: 1, 128, 384>}, {transform_indices = @transform_6, window_bounds = array<i64: 1, 1, 384>}, {transform_indices = @transform_7, window_bounds = array<i64: 1, 128, 128>}, {transform_indices = @transform_8, window_bounds = array<i64: 1, 1, 128>}, {transform_indices = @transform_9, window_bounds = array<i64: 1, 1, 128>}, {transform_indices = @transform_10, window_bounds = array<i64: 1, 1, 128>}, {transform_indices = @transform_11, window_bounds = array<i64: 1, 128, 256>}, {transform_indices = @transform_12, window_bounds = array<i64: 1, 1, 256>}, {transform_indices = @transform_13, window_bounds = array<i64: 1, 256, 128>}, {transform_indices = @transform_14, window_bounds = array<i64: 1, 1, 128>}, {pipeline_mode = #tpu.pipeline_mode<synchronous>, transform_indices = @transform_15, window_bounds = array<i64: 1, 128>}, {pipeline_mode = #tpu.pipeline_mode<synchronous>, transform_indices = @transform_16, window_bounds = array<i64: 1, 128>}, {transform_indices = @transform_17, window_bounds = array<i64: 2, 8, 128>}]} {
    %c0_i32 = arith.constant 0 : i32
    %0 = arith.cmpi eq, %arg1, %c0_i32 : i32
    %1 = arith.extui %0 : i1 to i32
    %c0_i32_0 = arith.constant 0 : i32
    %2 = arith.cmpi ne, %1, %c0_i32_0 : i32
    scf.if %2 {
      %c0_127 = arith.constant 0 : index
      %c0_128 = arith.constant 0 : index
      %c0_129 = arith.constant 0 : index
      %366 = vector.load %arg2[%c0_127, %c0_128, %c0_129] : memref<2x8x128xf32, #tpu.memory_space<vmem>>, vector<2x8x128xf32>
      %c0_130 = arith.constant 0 : index
      %c0_131 = arith.constant 0 : index
      %c0_132 = arith.constant 0 : index
      %367 = vector.load %arg3[%c0_130, %c0_131, %c0_132] : memref<1x8x128xf32, #tpu.memory_space<vmem>>, vector<1x8x128xf32>
      %368 = vector.broadcast %367 : vector<1x8x128xf32> to vector<2x8x128xf32>
      %369 = arith.addf %366, %368 : vector<2x8x128xf32>
      %c0_133 = arith.constant 0 : index
      %c0_134 = arith.constant 0 : index
      %c0_135 = arith.constant 0 : index
      %370 = vector.load %arg20[%c0_133, %c0_134, %c0_135] : memref<2x8x128xf32, #tpu.memory_space<vmem>>, vector<2x8x128xf32>
      tpu.vector_store %arg20[%c0_133, %c0_134, %c0_135], %369 {strides = array<i32>} : memref<2x8x128xf32, #tpu.memory_space<vmem>>, vector<2x8x128xf32>,
    } else {
    }
    %c0 = arith.constant 0 : index
    %c0_1 = arith.constant 0 : index
    %c0_2 = arith.constant 0 : index
    %3 = vector.load %arg20[%c0, %c0_1, %c0_2] : memref<2x8x128xf32, #tpu.memory_space<vmem>>, vector<2x8x128xf32>
    %c0_3 = arith.constant 0 : index
    %c0_4 = arith.constant 0 : index
    %c0_5 = arith.constant 0 : index
    %4 = vector.load %arg5[%c0_3, %c0_4, %c0_5] : memref<1x1x128xf32, #tpu.memory_space<vmem>>, vector<1x1x128xf32>
    %5 = vector.shape_cast %4 : vector<1x1x128xf32> to vector<1x128xf32>
    %c0_6 = arith.constant 0 : index
    %c0_7 = arith.constant 0 : index
    %c0_8 = arith.constant 0 : index
    %6 = vector.load %arg6[%c0_6, %c0_7, %c0_8] : memref<1x1x128xf32, #tpu.memory_space<vmem>>, vector<1x1x128xf32>
    %7 = vector.shape_cast %6 : vector<1x1x128xf32> to vector<1x128xf32>
    %8 = vector.shape_cast %3 : vector<2x8x128xf32> to vector<16x128xf32>
    %cst = arith.constant dense<0.000000e+00> : vector<16xf32>
    %9 = vector.multi_reduction <add>, %8, %cst [1] : vector<16x128xf32> to vector<16xf32>
    %10 = vector.shape_cast %9 : vector<16xf32> to vector<16x1xf32>
    %cst_9 = arith.constant 1.280000e+02 : f32
    %11 = vector.broadcast %cst_9 : f32 to vector<16x1xf32>
    %12 = arith.divf %10, %11 : vector<16x1xf32>
    %13 = vector.broadcast %12 : vector<16x1xf32> to vector<16x128xf32>
    %14 = arith.subf %8, %13 : vector<16x128xf32>
    %15 = arith.mulf %14, %14 : vector<16x128xf32>
    %cst_10 = arith.constant dense<0.000000e+00> : vector<16xf32>
    %16 = vector.multi_reduction <add>, %15, %cst_10 [1] : vector<16x128xf32> to vector<16xf32>
    %17 = vector.shape_cast %16 : vector<16xf32> to vector<16x1xf32>
    %cst_11 = arith.constant 1.280000e+02 : f32
    %18 = vector.broadcast %cst_11 : f32 to vector<16x1xf32>
    %19 = arith.divf %17, %18 : vector<16x1xf32>
    %cst_12 = arith.constant 9.99999997E-7 : f32
    %20 = vector.broadcast %cst_12 : f32 to vector<16x1xf32>
    %21 = arith.addf %19, %20 : vector<16x1xf32>
    %22 = math.rsqrt %21 : vector<16x1xf32>
    %23 = vector.broadcast %22 : vector<16x1xf32> to vector<16x128xf32>
    %24 = arith.mulf %14, %23 : vector<16x128xf32>
    %25 = vector.broadcast %5 : vector<1x128xf32> to vector<16x128xf32>
    %26 = arith.mulf %24, %25 : vector<16x128xf32>
    %27 = vector.broadcast %7 : vector<1x128xf32> to vector<16x128xf32>
    %28 = arith.addf %26, %27 : vector<16x128xf32>
    %c0_13 = arith.constant 0 : index
    %c0_14 = arith.constant 0 : index
    %c0_15 = arith.constant 0 : index
    %29 = vector.load %arg7[%c0_13, %c0_14, %c0_15] : memref<1x128x384xbf16, #tpu.memory_space<vmem>>, vector<1x128x384xbf16>
    %30 = vector.shape_cast %29 : vector<1x128x384xbf16> to vector<128x384xbf16>
    %31 = arith.truncf %28 : vector<16x128xf32> to vector<16x128xbf16>
    %cst_16 = arith.constant dense<0.000000e+00> : vector<16x384xf32>
    %32 = tpu.matmul %31, %30, %cst_16 {dimension_numbers = #tpu.dot_dimension_numbers<[1], [0], [0], [1], [0, 0, 1, 1], [], []>} : vector<16x128xbf16>, vector<128x384xbf16>, vector<16x384xf32> -> vector<16x384xf32>
    %c0_17 = arith.constant 0 : index
    %c0_18 = arith.constant 0 : index
    %c0_19 = arith.constant 0 : index
    %33 = vector.load %arg8[%c0_17, %c0_18, %c0_19] : memref<1x1x384xf32, #tpu.memory_space<vmem>>, vector<1x1x384xf32>
    %34 = vector.shape_cast %33 : vector<1x1x384xf32> to vector<1x384xf32>
    %35 = vector.broadcast %34 : vector<1x384xf32> to vector<16x384xf32>
    %36 = arith.addf %32, %35 : vector<16x384xf32>
    %37 = vector.shape_cast %36 : vector<16x384xf32> to vector<2x8x384xf32>
    %c0_20 = arith.constant 0 : index
    %c0_21 = arith.constant 0 : index
    %c0_22 = arith.constant 0 : index
    %38 = vector.load %arg4[%c0_20, %c0_21, %c0_22] : memref<1x2x128xf32, #tpu.memory_space<vmem>>, vector<1x2x128xf32>
    %39 = vector.shape_cast %38 : vector<1x2x128xf32> to vector<2x128xf32>
    %cst_23 = arith.constant dense<0.000000e+00> : vector<2xf32>
    %40 = vector.multi_reduction <add>, %39, %cst_23 [1] : vector<2x128xf32> to vector<2xf32>
    %41 = vector.shape_cast %40 : vector<2xf32> to vector<2x1xf32>
    %cst_24 = arith.constant 1.280000e+02 : f32
    %42 = vector.broadcast %cst_24 : f32 to vector<2x1xf32>
    %43 = arith.divf %41, %42 : vector<2x1xf32>
    %44 = vector.broadcast %43 : vector<2x1xf32> to vector<2x128xf32>
    %45 = arith.subf %39, %44 : vector<2x128xf32>
    %46 = arith.mulf %45, %45 : vector<2x128xf32>
    %cst_25 = arith.constant dense<0.000000e+00> : vector<2xf32>
    %47 = vector.multi_reduction <add>, %46, %cst_25 [1] : vector<2x128xf32> to vector<2xf32>
    %48 = vector.shape_cast %47 : vector<2xf32> to vector<2x1xf32>
    %cst_26 = arith.constant 1.280000e+02 : f32
    %49 = vector.broadcast %cst_26 : f32 to vector<2x1xf32>
    %50 = arith.divf %48, %49 : vector<2x1xf32>
    %cst_27 = arith.constant 9.99999997E-7 : f32
    %51 = vector.broadcast %cst_27 : f32 to vector<2x1xf32>
    %52 = arith.addf %50, %51 : vector<2x1xf32>
    %53 = math.rsqrt %52 : vector<2x1xf32>
    %54 = vector.broadcast %53 : vector<2x1xf32> to vector<2x128xf32>
    %55 = arith.mulf %45, %54 : vector<2x128xf32>
    %56 = vector.broadcast %5 : vector<1x128xf32> to vector<2x128xf32>
    %57 = arith.mulf %55, %56 : vector<2x128xf32>
    %58 = vector.broadcast %7 : vector<1x128xf32> to vector<2x128xf32>
    %59 = arith.addf %57, %58 : vector<2x128xf32>
    %c0_28 = arith.constant 0 : index
    %c0_29 = arith.constant 0 : index
    %c0_30 = arith.constant 0 : index
    %60 = vector.load %arg7[%c0_28, %c0_29, %c0_30] : memref<1x128x384xbf16, #tpu.memory_space<vmem>>, vector<1x128x384xbf16>
    %61 = vector.shape_cast %60 : vector<1x128x384xbf16> to vector<128x384xbf16>
    %62 = arith.truncf %59 : vector<2x128xf32> to vector<2x128xbf16>
    %cst_31 = arith.constant dense<0.000000e+00> : vector<2x384xf32>
    %63 = tpu.matmul %62, %61, %cst_31 {dimension_numbers = #tpu.dot_dimension_numbers<[1], [0], [0], [1], [0, 0, 1, 1], [], []>} : vector<2x128xbf16>, vector<128x384xbf16>, vector<2x384xf32> -> vector<2x384xf32>
    %c0_32 = arith.constant 0 : index
    %c0_33 = arith.constant 0 : index
    %c0_34 = arith.constant 0 : index
    %64 = vector.load %arg8[%c0_32, %c0_33, %c0_34] : memref<1x1x384xf32, #tpu.memory_space<vmem>>, vector<1x1x384xf32>
    %65 = vector.shape_cast %64 : vector<1x1x384xf32> to vector<1x384xf32>
    %66 = vector.broadcast %65 : vector<1x384xf32> to vector<2x384xf32>
    %67 = arith.addf %63, %66 : vector<2x384xf32>
    %68 = vector.extract_strided_slice %37 {offsets = [0, 0, 0], sizes = [2, 8, 128], strides = [1, 1, 1]} : vector<2x8x384xf32> to vector<2x8x128xf32>
    %69 = vector.extract_strided_slice %37 {offsets = [0, 0, 128], sizes = [2, 8, 128], strides = [1, 1, 1]} : vector<2x8x384xf32> to vector<2x8x128xf32>
    %70 = vector.extract_strided_slice %37 {offsets = [0, 0, 256], sizes = [2, 8, 128], strides = [1, 1, 1]} : vector<2x8x384xf32> to vector<2x8x128xf32>
    %c0_35 = arith.constant 0 : index
    %c0_36 = arith.constant 0 : index
    %c0_37 = arith.constant 0 : index
    %71 = vector.load %arg9[%c0_35, %c0_36, %c0_37] : memref<1x128x128xbf16, #tpu.memory_space<vmem>>, vector<1x128x128xbf16>
    %72 = vector.shape_cast %71 : vector<1x128x128xbf16> to vector<128x128xbf16>
    %cst_38 = arith.constant 0.000000e+00 : f32
    %73 = vector.broadcast %cst_38 : f32 to vector<16x128xf32>
    %74 = vector.extract_strided_slice %68 {offsets = [0, 0, 0], sizes = [2, 8, 32], strides = [1, 1, 1]} : vector<2x8x128xf32> to vector<2x8x32xf32>
    %75 = vector.extract_strided_slice %69 {offsets = [0, 0, 0], sizes = [2, 8, 32], strides = [1, 1, 1]} : vector<2x8x128xf32> to vector<2x8x32xf32>
    %76 = vector.extract_strided_slice %70 {offsets = [0, 0, 0], sizes = [2, 8, 32], strides = [1, 1, 1]} : vector<2x8x128xf32> to vector<2x8x32xf32>
    %77 = vector.extract_strided_slice %67 {offsets = [0, 128], sizes = [2, 32], strides = [1, 1]} : vector<2x384xf32> to vector<2x32xf32>
    %78 = vector.extract_strided_slice %67 {offsets = [0, 256], sizes = [2, 32], strides = [1, 1]} : vector<2x384xf32> to vector<2x32xf32>
    %79 = arith.truncf %74 : vector<2x8x32xf32> to vector<2x8x32xbf16>
    %80 = arith.truncf %75 : vector<2x8x32xf32> to vector<2x8x32xbf16>
    "tpu.trace_start"() <{level = 10 : i32, message = "bqd,bkd->bqk"}> : () -> ()
    %cst_39 = arith.constant dense<0.000000e+00> : vector<2x8x8xf32>
    %81 = tpu.matmul %79, %80, %cst_39 {dimension_numbers = #tpu.dot_dimension_numbers<[2], [2], [1], [1], [0, 0, 0, 1, 1, 1], [0], [0]>} : vector<2x8x32xbf16>, vector<2x8x32xbf16>, vector<2x8x8xf32> -> vector<2x8x8xf32>
    "tpu.trace_stop"() : () -> ()
    %82 = vector.shape_cast %74 : vector<2x8x32xf32> to vector<16x32xf32>
    %83 = arith.truncf %82 : vector<16x32xf32> to vector<16x32xbf16>
    %84 = arith.truncf %77 : vector<2x32xf32> to vector<2x32xbf16>
    %cst_40 = arith.constant dense<0.000000e+00> : vector<16x2xf32>
    %85 = tpu.matmul %83, %84, %cst_40 {dimension_numbers = #tpu.dot_dimension_numbers<[1], [1], [0], [0], [0, 0, 1, 0], [], []>} : vector<16x32xbf16>, vector<2x32xbf16>, vector<16x2xf32> -> vector<16x2xf32>
    %86 = vector.shape_cast %85 : vector<16x2xf32> to vector<2x8x2xf32>
    %cst_41 = arith.constant dense<0xFF800000> : vector<2x8xf32>
    %87 = vector.multi_reduction <maximumf>, %81, %cst_41 [2] : vector<2x8x8xf32> to vector<2x8xf32>
    %88 = vector.shape_cast %87 : vector<2x8xf32> to vector<2x8x1xf32>
    %cst_42 = arith.constant dense<0xFF800000> : vector<2x8xf32>
    %89 = vector.multi_reduction <maximumf>, %86, %cst_42 [2] : vector<2x8x2xf32> to vector<2x8xf32>
    %90 = vector.shape_cast %89 : vector<2x8xf32> to vector<2x8x1xf32>
    %91 = arith.maximumf %88, %90 : vector<2x8x1xf32>
    %92 = vector.broadcast %91 : vector<2x8x1xf32> to vector<2x8x8xf32>
    %93 = arith.subf %81, %92 : vector<2x8x8xf32>
    %94 = math.exp %93 : vector<2x8x8xf32>
    %95 = vector.broadcast %91 : vector<2x8x1xf32> to vector<2x8x2xf32>
    %96 = arith.subf %86, %95 : vector<2x8x2xf32>
    %97 = math.exp %96 : vector<2x8x2xf32>
    %cst_43 = arith.constant dense<0.000000e+00> : vector<2x8xf32>
    %98 = vector.multi_reduction <add>, %94, %cst_43 [2] : vector<2x8x8xf32> to vector<2x8xf32>
    %99 = vector.shape_cast %98 : vector<2x8xf32> to vector<2x8x1xf32>
    %cst_44 = arith.constant dense<0.000000e+00> : vector<2x8xf32>
    %100 = vector.multi_reduction <add>, %97, %cst_44 [2] : vector<2x8x2xf32> to vector<2x8xf32>
    %101 = vector.shape_cast %100 : vector<2x8xf32> to vector<2x8x1xf32>
    %102 = arith.addf %99, %101 : vector<2x8x1xf32>
    %103 = arith.truncf %94 : vector<2x8x8xf32> to vector<2x8x8xbf16>
    %104 = arith.truncf %76 : vector<2x8x32xf32> to vector<2x8x32xbf16>
    "tpu.trace_start"() <{level = 10 : i32, message = "bqk,bkd->bqd"}> : () -> ()
    %cst_45 = arith.constant dense<0.000000e+00> : vector<2x8x32xf32>
    %105 = tpu.matmul %103, %104, %cst_45 {dimension_numbers = #tpu.dot_dimension_numbers<[2], [1], [1], [2], [0, 0, 0, 1, 1, 2], [0], [0]>} : vector<2x8x8xbf16>, vector<2x8x32xbf16>, vector<2x8x32xf32> -> vector<2x8x32xf32>
    "tpu.trace_stop"() : () -> ()
    %106 = vector.shape_cast %97 : vector<2x8x2xf32> to vector<16x2xf32>
    %107 = arith.truncf %106 : vector<16x2xf32> to vector<16x2xbf16>
    %108 = arith.truncf %78 : vector<2x32xf32> to vector<2x32xbf16>
    %cst_46 = arith.constant dense<0.000000e+00> : vector<16x32xf32>
    %109 = tpu.matmul %107, %108, %cst_46 {dimension_numbers = #tpu.dot_dimension_numbers<[1], [0], [0], [1], [0, 0, 1, 1], [], []>} : vector<16x2xbf16>, vector<2x32xbf16>, vector<16x32xf32> -> vector<16x32xf32>
    %110 = vector.shape_cast %109 : vector<16x32xf32> to vector<2x8x32xf32>
    %111 = arith.addf %105, %110 : vector<2x8x32xf32>
    %112 = tpu.reciprocal %102 {approx = true} : vector<2x8x1xf32> -> vector<2x8x1xf32>
    %113 = vector.broadcast %112 : vector<2x8x1xf32> to vector<2x8x32xf32>
    %114 = arith.mulf %111, %113 : vector<2x8x32xf32>
    %115 = vector.shape_cast %114 : vector<2x8x32xf32> to vector<16x32xf32>
    %116 = vector.extract_strided_slice %72 {offsets = [0, 0], sizes = [32, 128], strides = [1, 1]} : vector<128x128xbf16> to vector<32x128xbf16>
    %117 = arith.truncf %115 : vector<16x32xf32> to vector<16x32xbf16>
    %cst_47 = arith.constant dense<0.000000e+00> : vector<16x128xf32>
    %118 = tpu.matmul %117, %116, %cst_47 {dimension_numbers = #tpu.dot_dimension_numbers<[1], [0], [0], [1], [0, 0, 1, 1], [], []>} : vector<16x32xbf16>, vector<32x128xbf16>, vector<16x128xf32> -> vector<16x128xf32>
    %119 = arith.addf %73, %118 : vector<16x128xf32>
    %120 = vector.extract_strided_slice %68 {offsets = [0, 0, 32], sizes = [2, 8, 32], strides = [1, 1, 1]} : vector<2x8x128xf32> to vector<2x8x32xf32>
    %121 = vector.extract_strided_slice %69 {offsets = [0, 0, 32], sizes = [2, 8, 32], strides = [1, 1, 1]} : vector<2x8x128xf32> to vector<2x8x32xf32>
    %122 = vector.extract_strided_slice %70 {offsets = [0, 0, 32], sizes = [2, 8, 32], strides = [1, 1, 1]} : vector<2x8x128xf32> to vector<2x8x32xf32>
    %123 = vector.extract_strided_slice %67 {offsets = [0, 160], sizes = [2, 32], strides = [1, 1]} : vector<2x384xf32> to vector<2x32xf32>
    %124 = vector.extract_strided_slice %67 {offsets = [0, 288], sizes = [2, 32], strides = [1, 1]} : vector<2x384xf32> to vector<2x32xf32>
    %125 = arith.truncf %120 : vector<2x8x32xf32> to vector<2x8x32xbf16>
    %126 = arith.truncf %121 : vector<2x8x32xf32> to vector<2x8x32xbf16>
    "tpu.trace_start"() <{level = 10 : i32, message = "bqd,bkd->bqk"}> : () -> ()
    %cst_48 = arith.constant dense<0.000000e+00> : vector<2x8x8xf32>
    %127 = tpu.matmul %125, %126, %cst_48 {dimension_numbers = #tpu.dot_dimension_numbers<[2], [2], [1], [1], [0, 0, 0, 1, 1, 1], [0], [0]>} : vector<2x8x32xbf16>, vector<2x8x32xbf16>, vector<2x8x8xf32> -> vector<2x8x8xf32>
    "tpu.trace_stop"() : () -> ()
    %128 = vector.shape_cast %120 : vector<2x8x32xf32> to vector<16x32xf32>
    %129 = arith.truncf %128 : vector<16x32xf32> to vector<16x32xbf16>
    %130 = arith.truncf %123 : vector<2x32xf32> to vector<2x32xbf16>
    %cst_49 = arith.constant dense<0.000000e+00> : vector<16x2xf32>
    %131 = tpu.matmul %129, %130, %cst_49 {dimension_numbers = #tpu.dot_dimension_numbers<[1], [1], [0], [0], [0, 0, 1, 0], [], []>} : vector<16x32xbf16>, vector<2x32xbf16>, vector<16x2xf32> -> vector<16x2xf32>
    %132 = vector.shape_cast %131 : vector<16x2xf32> to vector<2x8x2xf32>
    %cst_50 = arith.constant dense<0xFF800000> : vector<2x8xf32>
    %133 = vector.multi_reduction <maximumf>, %127, %cst_50 [2] : vector<2x8x8xf32> to vector<2x8xf32>
    %134 = vector.shape_cast %133 : vector<2x8xf32> to vector<2x8x1xf32>
    %cst_51 = arith.constant dense<0xFF800000> : vector<2x8xf32>
    %135 = vector.multi_reduction <maximumf>, %132, %cst_51 [2] : vector<2x8x2xf32> to vector<2x8xf32>
    %136 = vector.shape_cast %135 : vector<2x8xf32> to vector<2x8x1xf32>
    %137 = arith.maximumf %134, %136 : vector<2x8x1xf32>
    %138 = vector.broadcast %137 : vector<2x8x1xf32> to vector<2x8x8xf32>
    %139 = arith.subf %127, %138 : vector<2x8x8xf32>
    %140 = math.exp %139 : vector<2x8x8xf32>
    %141 = vector.broadcast %137 : vector<2x8x1xf32> to vector<2x8x2xf32>
    %142 = arith.subf %132, %141 : vector<2x8x2xf32>
    %143 = math.exp %142 : vector<2x8x2xf32>
    %cst_52 = arith.constant dense<0.000000e+00> : vector<2x8xf32>
    %144 = vector.multi_reduction <add>, %140, %cst_52 [2] : vector<2x8x8xf32> to vector<2x8xf32>
    %145 = vector.shape_cast %144 : vector<2x8xf32> to vector<2x8x1xf32>
    %cst_53 = arith.constant dense<0.000000e+00> : vector<2x8xf32>
    %146 = vector.multi_reduction <add>, %143, %cst_53 [2] : vector<2x8x2xf32> to vector<2x8xf32>
    %147 = vector.shape_cast %146 : vector<2x8xf32> to vector<2x8x1xf32>
    %148 = arith.addf %145, %147 : vector<2x8x1xf32>
    %149 = arith.truncf %140 : vector<2x8x8xf32> to vector<2x8x8xbf16>
    %150 = arith.truncf %122 : vector<2x8x32xf32> to vector<2x8x32xbf16>
    "tpu.trace_start"() <{level = 10 : i32, message = "bqk,bkd->bqd"}> : () -> ()
    %cst_54 = arith.constant dense<0.000000e+00> : vector<2x8x32xf32>
    %151 = tpu.matmul %149, %150, %cst_54 {dimension_numbers = #tpu.dot_dimension_numbers<[2], [1], [1], [2], [0, 0, 0, 1, 1, 2], [0], [0]>} : vector<2x8x8xbf16>, vector<2x8x32xbf16>, vector<2x8x32xf32> -> vector<2x8x32xf32>
    "tpu.trace_stop"() : () -> ()
    %152 = vector.shape_cast %143 : vector<2x8x2xf32> to vector<16x2xf32>
    %153 = arith.truncf %152 : vector<16x2xf32> to vector<16x2xbf16>
    %154 = arith.truncf %124 : vector<2x32xf32> to vector<2x32xbf16>
    %cst_55 = arith.constant dense<0.000000e+00> : vector<16x32xf32>
    %155 = tpu.matmul %153, %154, %cst_55 {dimension_numbers = #tpu.dot_dimension_numbers<[1], [0], [0], [1], [0, 0, 1, 1], [], []>} : vector<16x2xbf16>, vector<2x32xbf16>, vector<16x32xf32> -> vector<16x32xf32>
    %156 = vector.shape_cast %155 : vector<16x32xf32> to vector<2x8x32xf32>
    %157 = arith.addf %151, %156 : vector<2x8x32xf32>
    %158 = tpu.reciprocal %148 {approx = true} : vector<2x8x1xf32> -> vector<2x8x1xf32>
    %159 = vector.broadcast %158 : vector<2x8x1xf32> to vector<2x8x32xf32>
    %160 = arith.mulf %157, %159 : vector<2x8x32xf32>
    %161 = vector.shape_cast %160 : vector<2x8x32xf32> to vector<16x32xf32>
    %162 = vector.extract_strided_slice %72 {offsets = [32, 0], sizes = [32, 128], strides = [1, 1]} : vector<128x128xbf16> to vector<32x128xbf16>
    %163 = arith.truncf %161 : vector<16x32xf32> to vector<16x32xbf16>
    %cst_56 = arith.constant dense<0.000000e+00> : vector<16x128xf32>
    %164 = tpu.matmul %163, %162, %cst_56 {dimension_numbers = #tpu.dot_dimension_numbers<[1], [0], [0], [1], [0, 0, 1, 1], [], []>} : vector<16x32xbf16>, vector<32x128xbf16>, vector<16x128xf32> -> vector<16x128xf32>
    %165 = arith.addf %119, %164 : vector<16x128xf32>
    %166 = vector.extract_strided_slice %68 {offsets = [0, 0, 64], sizes = [2, 8, 32], strides = [1, 1, 1]} : vector<2x8x128xf32> to vector<2x8x32xf32>
    %167 = vector.extract_strided_slice %69 {offsets = [0, 0, 64], sizes = [2, 8, 32], strides = [1, 1, 1]} : vector<2x8x128xf32> to vector<2x8x32xf32>
    %168 = vector.extract_strided_slice %70 {offsets = [0, 0, 64], sizes = [2, 8, 32], strides = [1, 1, 1]} : vector<2x8x128xf32> to vector<2x8x32xf32>
    %169 = vector.extract_strided_slice %67 {offsets = [0, 192], sizes = [2, 32], strides = [1, 1]} : vector<2x384xf32> to vector<2x32xf32>
    %170 = vector.extract_strided_slice %67 {offsets = [0, 320], sizes = [2, 32], strides = [1, 1]} : vector<2x384xf32> to vector<2x32xf32>
    %171 = arith.truncf %166 : vector<2x8x32xf32> to vector<2x8x32xbf16>
    %172 = arith.truncf %167 : vector<2x8x32xf32> to vector<2x8x32xbf16>
    "tpu.trace_start"() <{level = 10 : i32, message = "bqd,bkd->bqk"}> : () -> ()
    %cst_57 = arith.constant dense<0.000000e+00> : vector<2x8x8xf32>
    %173 = tpu.matmul %171, %172, %cst_57 {dimension_numbers = #tpu.dot_dimension_numbers<[2], [2], [1], [1], [0, 0, 0, 1, 1, 1], [0], [0]>} : vector<2x8x32xbf16>, vector<2x8x32xbf16>, vector<2x8x8xf32> -> vector<2x8x8xf32>
    "tpu.trace_stop"() : () -> ()
    %174 = vector.shape_cast %166 : vector<2x8x32xf32> to vector<16x32xf32>
    %175 = arith.truncf %174 : vector<16x32xf32> to vector<16x32xbf16>
    %176 = arith.truncf %169 : vector<2x32xf32> to vector<2x32xbf16>
    %cst_58 = arith.constant dense<0.000000e+00> : vector<16x2xf32>
    %177 = tpu.matmul %175, %176, %cst_58 {dimension_numbers = #tpu.dot_dimension_numbers<[1], [1], [0], [0], [0, 0, 1, 0], [], []>} : vector<16x32xbf16>, vector<2x32xbf16>, vector<16x2xf32> -> vector<16x2xf32>
    %178 = vector.shape_cast %177 : vector<16x2xf32> to vector<2x8x2xf32>
    %cst_59 = arith.constant dense<0xFF800000> : vector<2x8xf32>
    %179 = vector.multi_reduction <maximumf>, %173, %cst_59 [2] : vector<2x8x8xf32> to vector<2x8xf32>
    %180 = vector.shape_cast %179 : vector<2x8xf32> to vector<2x8x1xf32>
    %cst_60 = arith.constant dense<0xFF800000> : vector<2x8xf32>
    %181 = vector.multi_reduction <maximumf>, %178, %cst_60 [2] : vector<2x8x2xf32> to vector<2x8xf32>
    %182 = vector.shape_cast %181 : vector<2x8xf32> to vector<2x8x1xf32>
    %183 = arith.maximumf %180, %182 : vector<2x8x1xf32>
    %184 = vector.broadcast %183 : vector<2x8x1xf32> to vector<2x8x8xf32>
    %185 = arith.subf %173, %184 : vector<2x8x8xf32>
    %186 = math.exp %185 : vector<2x8x8xf32>
    %187 = vector.broadcast %183 : vector<2x8x1xf32> to vector<2x8x2xf32>
    %188 = arith.subf %178, %187 : vector<2x8x2xf32>
    %189 = math.exp %188 : vector<2x8x2xf32>
    %cst_61 = arith.constant dense<0.000000e+00> : vector<2x8xf32>
    %190 = vector.multi_reduction <add>, %186, %cst_61 [2] : vector<2x8x8xf32> to vector<2x8xf32>
    %191 = vector.shape_cast %190 : vector<2x8xf32> to vector<2x8x1xf32>
    %cst_62 = arith.constant dense<0.000000e+00> : vector<2x8xf32>
    %192 = vector.multi_reduction <add>, %189, %cst_62 [2] : vector<2x8x2xf32> to vector<2x8xf32>
    %193 = vector.shape_cast %192 : vector<2x8xf32> to vector<2x8x1xf32>
    %194 = arith.addf %191, %193 : vector<2x8x1xf32>
    %195 = arith.truncf %186 : vector<2x8x8xf32> to vector<2x8x8xbf16>
    %196 = arith.truncf %168 : vector<2x8x32xf32> to vector<2x8x32xbf16>
    "tpu.trace_start"() <{level = 10 : i32, message = "bqk,bkd->bqd"}> : () -> ()
    %cst_63 = arith.constant dense<0.000000e+00> : vector<2x8x32xf32>
    %197 = tpu.matmul %195, %196, %cst_63 {dimension_numbers = #tpu.dot_dimension_numbers<[2], [1], [1], [2], [0, 0, 0, 1, 1, 2], [0], [0]>} : vector<2x8x8xbf16>, vector<2x8x32xbf16>, vector<2x8x32xf32> -> vector<2x8x32xf32>
    "tpu.trace_stop"() : () -> ()
    %198 = vector.shape_cast %189 : vector<2x8x2xf32> to vector<16x2xf32>
    %199 = arith.truncf %198 : vector<16x2xf32> to vector<16x2xbf16>
    %200 = arith.truncf %170 : vector<2x32xf32> to vector<2x32xbf16>
    %cst_64 = arith.constant dense<0.000000e+00> : vector<16x32xf32>
    %201 = tpu.matmul %199, %200, %cst_64 {dimension_numbers = #tpu.dot_dimension_numbers<[1], [0], [0], [1], [0, 0, 1, 1], [], []>} : vector<16x2xbf16>, vector<2x32xbf16>, vector<16x32xf32> -> vector<16x32xf32>
    %202 = vector.shape_cast %201 : vector<16x32xf32> to vector<2x8x32xf32>
    %203 = arith.addf %197, %202 : vector<2x8x32xf32>
    %204 = tpu.reciprocal %194 {approx = true} : vector<2x8x1xf32> -> vector<2x8x1xf32>
    %205 = vector.broadcast %204 : vector<2x8x1xf32> to vector<2x8x32xf32>
    %206 = arith.mulf %203, %205 : vector<2x8x32xf32>
    %207 = vector.shape_cast %206 : vector<2x8x32xf32> to vector<16x32xf32>
    %208 = vector.extract_strided_slice %72 {offsets = [64, 0], sizes = [32, 128], strides = [1, 1]} : vector<128x128xbf16> to vector<32x128xbf16>
    %209 = arith.truncf %207 : vector<16x32xf32> to vector<16x32xbf16>
    %cst_65 = arith.constant dense<0.000000e+00> : vector<16x128xf32>
    %210 = tpu.matmul %209, %208, %cst_65 {dimension_numbers = #tpu.dot_dimension_numbers<[1], [0], [0], [1], [0, 0, 1, 1], [], []>} : vector<16x32xbf16>, vector<32x128xbf16>, vector<16x128xf32> -> vector<16x128xf32>
    %211 = arith.addf %165, %210 : vector<16x128xf32>
    %212 = vector.extract_strided_slice %68 {offsets = [0, 0, 96], sizes = [2, 8, 32], strides = [1, 1, 1]} : vector<2x8x128xf32> to vector<2x8x32xf32>
    %213 = vector.extract_strided_slice %69 {offsets = [0, 0, 96], sizes = [2, 8, 32], strides = [1, 1, 1]} : vector<2x8x128xf32> to vector<2x8x32xf32>
    %214 = vector.extract_strided_slice %70 {offsets = [0, 0, 96], sizes = [2, 8, 32], strides = [1, 1, 1]} : vector<2x8x128xf32> to vector<2x8x32xf32>
    %215 = vector.extract_strided_slice %67 {offsets = [0, 224], sizes = [2, 32], strides = [1, 1]} : vector<2x384xf32> to vector<2x32xf32>
    %216 = vector.extract_strided_slice %67 {offsets = [0, 352], sizes = [2, 32], strides = [1, 1]} : vector<2x384xf32> to vector<2x32xf32>
    %217 = arith.truncf %212 : vector<2x8x32xf32> to vector<2x8x32xbf16>
    %218 = arith.truncf %213 : vector<2x8x32xf32> to vector<2x8x32xbf16>
    "tpu.trace_start"() <{level = 10 : i32, message = "bqd,bkd->bqk"}> : () -> ()
    %cst_66 = arith.constant dense<0.000000e+00> : vector<2x8x8xf32>
    %219 = tpu.matmul %217, %218, %cst_66 {dimension_numbers = #tpu.dot_dimension_numbers<[2], [2], [1], [1], [0, 0, 0, 1, 1, 1], [0], [0]>} : vector<2x8x32xbf16>, vector<2x8x32xbf16>, vector<2x8x8xf32> -> vector<2x8x8xf32>
    "tpu.trace_stop"() : () -> ()
    %220 = vector.shape_cast %212 : vector<2x8x32xf32> to vector<16x32xf32>
    %221 = arith.truncf %220 : vector<16x32xf32> to vector<16x32xbf16>
    %222 = arith.truncf %215 : vector<2x32xf32> to vector<2x32xbf16>
    %cst_67 = arith.constant dense<0.000000e+00> : vector<16x2xf32>
    %223 = tpu.matmul %221, %222, %cst_67 {dimension_numbers = #tpu.dot_dimension_numbers<[1], [1], [0], [0], [0, 0, 1, 0], [], []>} : vector<16x32xbf16>, vector<2x32xbf16>, vector<16x2xf32> -> vector<16x2xf32>
    %224 = vector.shape_cast %223 : vector<16x2xf32> to vector<2x8x2xf32>
    %cst_68 = arith.constant dense<0xFF800000> : vector<2x8xf32>
    %225 = vector.multi_reduction <maximumf>, %219, %cst_68 [2] : vector<2x8x8xf32> to vector<2x8xf32>
    %226 = vector.shape_cast %225 : vector<2x8xf32> to vector<2x8x1xf32>
    %cst_69 = arith.constant dense<0xFF800000> : vector<2x8xf32>
    %227 = vector.multi_reduction <maximumf>, %224, %cst_69 [2] : vector<2x8x2xf32> to vector<2x8xf32>
    %228 = vector.shape_cast %227 : vector<2x8xf32> to vector<2x8x1xf32>
    %229 = arith.maximumf %226, %228 : vector<2x8x1xf32>
    %230 = vector.broadcast %229 : vector<2x8x1xf32> to vector<2x8x8xf32>
    %231 = arith.subf %219, %230 : vector<2x8x8xf32>
    %232 = math.exp %231 : vector<2x8x8xf32>
    %233 = vector.broadcast %229 : vector<2x8x1xf32> to vector<2x8x2xf32>
    %234 = arith.subf %224, %233 : vector<2x8x2xf32>
    %235 = math.exp %234 : vector<2x8x2xf32>
    %cst_70 = arith.constant dense<0.000000e+00> : vector<2x8xf32>
    %236 = vector.multi_reduction <add>, %232, %cst_70 [2] : vector<2x8x8xf32> to vector<2x8xf32>
    %237 = vector.shape_cast %236 : vector<2x8xf32> to vector<2x8x1xf32>
    %cst_71 = arith.constant dense<0.000000e+00> : vector<2x8xf32>
    %238 = vector.multi_reduction <add>, %235, %cst_71 [2] : vector<2x8x2xf32> to vector<2x8xf32>
    %239 = vector.shape_cast %238 : vector<2x8xf32> to vector<2x8x1xf32>
    %240 = arith.addf %237, %239 : vector<2x8x1xf32>
    %241 = arith.truncf %232 : vector<2x8x8xf32> to vector<2x8x8xbf16>
    %242 = arith.truncf %214 : vector<2x8x32xf32> to vector<2x8x32xbf16>
    "tpu.trace_start"() <{level = 10 : i32, message = "bqk,bkd->bqd"}> : () -> ()
    %cst_72 = arith.constant dense<0.000000e+00> : vector<2x8x32xf32>
    %243 = tpu.matmul %241, %242, %cst_72 {dimension_numbers = #tpu.dot_dimension_numbers<[2], [1], [1], [2], [0, 0, 0, 1, 1, 2], [0], [0]>} : vector<2x8x8xbf16>, vector<2x8x32xbf16>, vector<2x8x32xf32> -> vector<2x8x32xf32>
    "tpu.trace_stop"() : () -> ()
    %244 = vector.shape_cast %235 : vector<2x8x2xf32> to vector<16x2xf32>
    %245 = arith.truncf %244 : vector<16x2xf32> to vector<16x2xbf16>
    %246 = arith.truncf %216 : vector<2x32xf32> to vector<2x32xbf16>
    %cst_73 = arith.constant dense<0.000000e+00> : vector<16x32xf32>
    %247 = tpu.matmul %245, %246, %cst_73 {dimension_numbers = #tpu.dot_dimension_numbers<[1], [0], [0], [1], [0, 0, 1, 1], [], []>} : vector<16x2xbf16>, vector<2x32xbf16>, vector<16x32xf32> -> vector<16x32xf32>
    %248 = vector.shape_cast %247 : vector<16x32xf32> to vector<2x8x32xf32>
    %249 = arith.addf %243, %248 : vector<2x8x32xf32>
    %250 = tpu.reciprocal %240 {approx = true} : vector<2x8x1xf32> -> vector<2x8x1xf32>
    %251 = vector.broadcast %250 : vector<2x8x1xf32> to vector<2x8x32xf32>
    %252 = arith.mulf %249, %251 : vector<2x8x32xf32>
    %253 = vector.shape_cast %252 : vector<2x8x32xf32> to vector<16x32xf32>
    %254 = vector.extract_strided_slice %72 {offsets = [96, 0], sizes = [32, 128], strides = [1, 1]} : vector<128x128xbf16> to vector<32x128xbf16>
    %255 = arith.truncf %253 : vector<16x32xf32> to vector<16x32xbf16>
    %cst_74 = arith.constant dense<0.000000e+00> : vector<16x128xf32>
    %256 = tpu.matmul %255, %254, %cst_74 {dimension_numbers = #tpu.dot_dimension_numbers<[1], [0], [0], [1], [0, 0, 1, 1], [], []>} : vector<16x32xbf16>, vector<32x128xbf16>, vector<16x128xf32> -> vector<16x128xf32>
    %257 = arith.addf %211, %256 : vector<16x128xf32>
    %c0_75 = arith.constant 0 : index
    %c0_76 = arith.constant 0 : index
    %c0_77 = arith.constant 0 : index
    %258 = vector.load %arg10[%c0_75, %c0_76, %c0_77] : memref<1x1x128xf32, #tpu.memory_space<vmem>>, vector<1x1x128xf32>
    %259 = vector.shape_cast %258 : vector<1x1x128xf32> to vector<1x128xf32>
    %260 = vector.broadcast %259 : vector<1x128xf32> to vector<16x128xf32>
    %261 = arith.addf %257, %260 : vector<16x128xf32>
    %262 = vector.shape_cast %261 : vector<16x128xf32> to vector<2x8x128xf32>
    %263 = arith.addf %3, %262 : vector<2x8x128xf32>
    %264 = vector.shape_cast %263 : vector<2x8x128xf32> to vector<16x128xf32>
    %c0_78 = arith.constant 0 : index
    %c0_79 = arith.constant 0 : index
    %c0_80 = arith.constant 0 : index
    %265 = vector.load %arg11[%c0_78, %c0_79, %c0_80] : memref<1x1x128xf32, #tpu.memory_space<vmem>>, vector<1x1x128xf32>
    %266 = vector.shape_cast %265 : vector<1x1x128xf32> to vector<1x128xf32>
    %c0_81 = arith.constant 0 : index
    %c0_82 = arith.constant 0 : index
    %c0_83 = arith.constant 0 : index
    %267 = vector.load %arg12[%c0_81, %c0_82, %c0_83] : memref<1x1x128xf32, #tpu.memory_space<vmem>>, vector<1x1x128xf32>
    %268 = vector.shape_cast %267 : vector<1x1x128xf32> to vector<1x128xf32>
    %cst_84 = arith.constant dense<0.000000e+00> : vector<16xf32>
    %269 = vector.multi_reduction <add>, %264, %cst_84 [1] : vector<16x128xf32> to vector<16xf32>
    %270 = vector.shape_cast %269 : vector<16xf32> to vector<16x1xf32>
    %cst_85 = arith.constant 1.280000e+02 : f32
    %271 = vector.broadcast %cst_85 : f32 to vector<16x1xf32>
    %272 = arith.divf %270, %271 : vector<16x1xf32>
    %273 = vector.broadcast %272 : vector<16x1xf32> to vector<16x128xf32>
    %274 = arith.subf %264, %273 : vector<16x128xf32>
    %275 = arith.mulf %274, %274 : vector<16x128xf32>
    %cst_86 = arith.constant dense<0.000000e+00> : vector<16xf32>
    %276 = vector.multi_reduction <add>, %275, %cst_86 [1] : vector<16x128xf32> to vector<16xf32>
    %277 = vector.shape_cast %276 : vector<16xf32> to vector<16x1xf32>
    %cst_87 = arith.constant 1.280000e+02 : f32
    %278 = vector.broadcast %cst_87 : f32 to vector<16x1xf32>
    %279 = arith.divf %277, %278 : vector<16x1xf32>
    %cst_88 = arith.constant 9.99999997E-7 : f32
    %280 = vector.broadcast %cst_88 : f32 to vector<16x1xf32>
    %281 = arith.addf %279, %280 : vector<16x1xf32>
    %282 = math.rsqrt %281 : vector<16x1xf32>
    %283 = vector.broadcast %282 : vector<16x1xf32> to vector<16x128xf32>
    %284 = arith.mulf %274, %283 : vector<16x128xf32>
    %285 = vector.broadcast %266 : vector<1x128xf32> to vector<16x128xf32>
    %286 = arith.mulf %284, %285 : vector<16x128xf32>
    %287 = vector.broadcast %268 : vector<1x128xf32> to vector<16x128xf32>
    %288 = arith.addf %286, %287 : vector<16x128xf32>
    %c0_89 = arith.constant 0 : index
    %c0_90 = arith.constant 0 : index
    %c0_91 = arith.constant 0 : index
    %289 = vector.load %arg13[%c0_89, %c0_90, %c0_91] : memref<1x128x256xbf16, #tpu.memory_space<vmem>>, vector<1x128x256xbf16>
    %290 = vector.shape_cast %289 : vector<1x128x256xbf16> to vector<128x256xbf16>
    %291 = arith.truncf %288 : vector<16x128xf32> to vector<16x128xbf16>
    %cst_92 = arith.constant dense<0.000000e+00> : vector<16x256xf32>
    %292 = tpu.matmul %291, %290, %cst_92 {dimension_numbers = #tpu.dot_dimension_numbers<[1], [0], [0], [1], [0, 0, 1, 1], [], []>} : vector<16x128xbf16>, vector<128x256xbf16>, vector<16x256xf32> -> vector<16x256xf32>
    %c0_93 = arith.constant 0 : index
    %c0_94 = arith.constant 0 : index
    %c0_95 = arith.constant 0 : index
    %293 = vector.load %arg14[%c0_93, %c0_94, %c0_95] : memref<1x1x256xf32, #tpu.memory_space<vmem>>, vector<1x1x256xf32>
    %294 = vector.shape_cast %293 : vector<1x1x256xf32> to vector<1x256xf32>
    %295 = vector.broadcast %294 : vector<1x256xf32> to vector<16x256xf32>
    %296 = arith.addf %292, %295 : vector<16x256xf32>
    %cst_96 = arith.constant 5.000000e-01 : f32
    %297 = vector.broadcast %cst_96 : f32 to vector<16x256xf32>
    %298 = arith.mulf %297, %296 : vector<16x256xf32>
    %cst_97 = arith.constant 0.707106769 : f32
    %299 = vector.broadcast %cst_97 : f32 to vector<16x256xf32>
    %300 = arith.mulf %296, %299 : vector<16x256xf32>
    %301 = math.absf %300 : vector<16x256xf32>
    %cst_98 = arith.constant 5.000000e-01 : f32
    %302 = vector.broadcast %cst_98 : f32 to vector<16x256xf32>
    %303 = arith.mulf %302, %301 : vector<16x256xf32>
    %cst_99 = arith.constant 1.000000e+00 : f32
    %304 = vector.broadcast %cst_99 : f32 to vector<16x256xf32>
    %305 = arith.addf %304, %303 : vector<16x256xf32>
    %cst_100 = arith.constant 1.000000e+00 : f32
    %306 = vector.broadcast %cst_100 : f32 to vector<16x256xf32>
    %307 = arith.divf %306, %305 : vector<16x256xf32>
    %cst_101 = arith.constant 0.170872763 : f32
    %308 = vector.broadcast %cst_101 : f32 to vector<16x256xf32>
    %309 = arith.mulf %307, %308 : vector<16x256xf32>
    %cst_102 = arith.constant -0.822152256 : f32
    %310 = vector.broadcast %cst_102 : f32 to vector<16x256xf32>
    %311 = arith.addf %310, %309 : vector<16x256xf32>
    %312 = arith.mulf %307, %311 : vector<16x256xf32>
    %cst_103 = arith.constant 1.48851585 : f32
    %313 = vector.broadcast %cst_103 : f32 to vector<16x256xf32>
    %314 = arith.addf %313, %312 : vector<16x256xf32>
    %315 = arith.mulf %307, %314 : vector<16x256xf32>
    %cst_104 = arith.constant -1.13520396 : f32
    %316 = vector.broadcast %cst_104 : f32 to vector<16x256xf32>
    %317 = arith.addf %316, %315 : vector<16x256xf32>
    %318 = arith.mulf %307, %317 : vector<16x256xf32>
    %cst_105 = arith.constant 0.278868079 : f32
    %319 = vector.broadcast %cst_105 : f32 to vector<16x256xf32>
    %320 = arith.addf %319, %318 : vector<16x256xf32>
    %321 = arith.mulf %307, %320 : vector<16x256xf32>
    %cst_106 = arith.constant -0.186288059 : f32
    %322 = vector.broadcast %cst_106 : f32 to vector<16x256xf32>
    %323 = arith.addf %322, %321 : vector<16x256xf32>
    %324 = arith.mulf %307, %323 : vector<16x256xf32>
    %cst_107 = arith.constant 0.0967841818 : f32
    %325 = vector.broadcast %cst_107 : f32 to vector<16x256xf32>
    %326 = arith.addf %325, %324 : vector<16x256xf32>
    %327 = arith.mulf %307, %326 : vector<16x256xf32>
    %cst_108 = arith.constant 0.374091953 : f32
    %328 = vector.broadcast %cst_108 : f32 to vector<16x256xf32>
    %329 = arith.addf %328, %327 : vector<16x256xf32>
    %330 = arith.mulf %307, %329 : vector<16x256xf32>
    %cst_109 = arith.constant 1.00002372 : f32
    %331 = vector.broadcast %cst_109 : f32 to vector<16x256xf32>
    %332 = arith.addf %331, %330 : vector<16x256xf32>
    %333 = arith.mulf %307, %332 : vector<16x256xf32>
    %cst_110 = arith.constant -1.26551223 : f32
    %334 = vector.broadcast %cst_110 : f32 to vector<16x256xf32>
    %335 = arith.addf %334, %333 : vector<16x256xf32>
    %cst_111 = arith.constant 0.000000e+00 : f32
    %336 = vector.broadcast %cst_111 : f32 to vector<16x256xf32>
    %337 = arith.subf %336, %301 : vector<16x256xf32>
    %338 = arith.mulf %337, %301 : vector<16x256xf32>
    %339 = arith.addf %338, %335 : vector<16x256xf32>
    %340 = math.exp %339 : vector<16x256xf32>
    %341 = arith.mulf %307, %340 : vector<16x256xf32>
    %cst_112 = arith.constant 0.000000e+00 : f32
    %342 = vector.broadcast %cst_112 : f32 to vector<16x256xf32>
    %343 = arith.cmpf oge, %300, %342 : vector<16x256xf32>
    %cst_113 = arith.constant 1.000000e+00 : f32
    %344 = vector.broadcast %cst_113 : f32 to vector<16x256xf32>
    %345 = arith.subf %344, %341 : vector<16x256xf32>
    %cst_114 = arith.constant 1.000000e+00 : f32
    %346 = vector.broadcast %cst_114 : f32 to vector<16x256xf32>
    %347 = arith.subf %341, %346 : vector<16x256xf32>
    %348 = arith.select %343, %345, %347 : vector<16x256xi1>, vector<16x256xf32>
    %cst_115 = arith.constant 1.000000e+00 : f32
    %349 = vector.broadcast %cst_115 : f32 to vector<16x256xf32>
    %350 = arith.addf %349, %348 : vector<16x256xf32>
    %351 = arith.mulf %298, %350 : vector<16x256xf32>
    %c0_116 = arith.constant 0 : index
    %c0_117 = arith.constant 0 : index
    %c0_118 = arith.constant 0 : index
    %352 = vector.load %arg15[%c0_116, %c0_117, %c0_118] : memref<1x256x128xbf16, #tpu.memory_space<vmem>>, vector<1x256x128xbf16>
    %353 = vector.shape_cast %352 : vector<1x256x128xbf16> to vector<256x128xbf16>
    %354 = arith.truncf %351 : vector<16x256xf32> to vector<16x256xbf16>
    %cst_119 = arith.constant dense<0.000000e+00> : vector<16x128xf32>
    %355 = tpu.matmul %354, %353, %cst_119 {dimension_numbers = #tpu.dot_dimension_numbers<[1], [0], [0], [1], [0, 0, 1, 1], [], []>} : vector<16x256xbf16>, vector<256x128xbf16>, vector<16x128xf32> -> vector<16x128xf32>
    %c0_120 = arith.constant 0 : index
    %c0_121 = arith.constant 0 : index
    %c0_122 = arith.constant 0 : index
    %356 = vector.load %arg16[%c0_120, %c0_121, %c0_122] : memref<1x1x128xf32, #tpu.memory_space<vmem>>, vector<1x1x128xf32>
    %357 = vector.shape_cast %356 : vector<1x1x128xf32> to vector<1x128xf32>
    %358 = vector.broadcast %357 : vector<1x128xf32> to vector<16x128xf32>
    %359 = arith.addf %355, %358 : vector<16x128xf32>
    %360 = vector.shape_cast %359 : vector<16x128xf32> to vector<2x8x128xf32>
    %361 = arith.addf %263, %360 : vector<2x8x128xf32>
    %c0_123 = arith.constant 0 : index
    %c0_124 = arith.constant 0 : index
    %c0_125 = arith.constant 0 : index
    %362 = vector.load %arg20[%c0_123, %c0_124, %c0_125] : memref<2x8x128xf32, #tpu.memory_space<vmem>>, vector<2x8x128xf32>
    tpu.vector_store %arg20[%c0_123, %c0_124, %c0_125], %361 {strides = array<i32>} : memref<2x8x128xf32, #tpu.memory_space<vmem>>, vector<2x8x128xf32>,
    %c1_i32 = arith.constant 1 : i32
    %363 = arith.cmpi eq, %arg1, %c1_i32 : i32
    %364 = arith.extui %363 : i1 to i32
    %c0_i32_126 = arith.constant 0 : i32
    %365 = arith.cmpi ne, %364, %c0_i32_126 : i32
    scf.if %365 {
      %366 = vector.shape_cast %361 : vector<2x8x128xf32> to vector<16x128xf32>
      %c0_127 = arith.constant 0 : index
      %c0_128 = arith.constant 0 : index
      %367 = vector.load %arg17[%c0_127, %c0_128] : memref<1x128xf32, #tpu.memory_space<vmem>>, vector<1x128xf32>
      %c0_129 = arith.constant 0 : index
      %c0_130 = arith.constant 0 : index
      %368 = vector.load %arg18[%c0_129, %c0_130] : memref<1x128xf32, #tpu.memory_space<vmem>>, vector<1x128xf32>
      %cst_131 = arith.constant dense<0.000000e+00> : vector<16xf32>
      %369 = vector.multi_reduction <add>, %366, %cst_131 [1] : vector<16x128xf32> to vector<16xf32>
      %370 = vector.shape_cast %369 : vector<16xf32> to vector<16x1xf32>
      %cst_132 = arith.constant 1.280000e+02 : f32
      %371 = vector.broadcast %cst_132 : f32 to vector<16x1xf32>
      %372 = arith.divf %370, %371 : vector<16x1xf32>
      %373 = vector.broadcast %372 : vector<16x1xf32> to vector<16x128xf32>
      %374 = arith.subf %366, %373 : vector<16x128xf32>
      %375 = arith.mulf %374, %374 : vector<16x128xf32>
      %cst_133 = arith.constant dense<0.000000e+00> : vector<16xf32>
      %376 = vector.multi_reduction <add>, %375, %cst_133 [1] : vector<16x128xf32> to vector<16xf32>
      %377 = vector.shape_cast %376 : vector<16xf32> to vector<16x1xf32>
      %cst_134 = arith.constant 1.280000e+02 : f32
      %378 = vector.broadcast %cst_134 : f32 to vector<16x1xf32>
      %379 = arith.divf %377, %378 : vector<16x1xf32>
      %cst_135 = arith.constant 9.99999997E-7 : f32
      %380 = vector.broadcast %cst_135 : f32 to vector<16x1xf32>
      %381 = arith.addf %379, %380 : vector<16x1xf32>
      %382 = math.rsqrt %381 : vector<16x1xf32>
      %383 = vector.broadcast %382 : vector<16x1xf32> to vector<16x128xf32>
      %384 = arith.mulf %374, %383 : vector<16x128xf32>
      %385 = vector.broadcast %367 : vector<1x128xf32> to vector<16x128xf32>
      %386 = arith.mulf %384, %385 : vector<16x128xf32>
      %387 = vector.broadcast %368 : vector<1x128xf32> to vector<16x128xf32>
      %388 = arith.addf %386, %387 : vector<16x128xf32>
      %389 = vector.shape_cast %388 : vector<16x128xf32> to vector<2x8x128xf32>
      %c0_136 = arith.constant 0 : index
      %c0_137 = arith.constant 0 : index
      %c0_138 = arith.constant 0 : index
      %390 = vector.load %arg19[%c0_136, %c0_137, %c0_138] : memref<2x8x128xf32, #tpu.memory_space<vmem>>, vector<2x8x128xf32>
      tpu.vector_store %arg19[%c0_136, %c0_137, %c0_138], %389 {strides = array<i32>} : memref<2x8x128xf32, #tpu.memory_space<vmem>>, vector<2x8x128xf32>,
    } else {
    }
    return
  }
  func.func @transform_0(%arg0: i32, %arg1: i32) -> (i32, i32, i32) {
    %c0_i32 = arith.constant 0 : i32
    %c0_i32_0 = arith.constant 0 : i32
    %c0_i32_1 = arith.constant 0 : i32
    return %arg0, %c0_i32, %c0_i32_0 : i32, i32, i32
  }
  func.func @transform_1(%arg0: i32, %arg1: i32) -> (i32, i32, i32) {
    %c0_i32 = arith.constant 0 : i32
    %c0_i32_0 = arith.constant 0 : i32
    %c0_i32_1 = arith.constant 0 : i32
    %c0_i32_2 = arith.constant 0 : i32
    return %c0_i32, %c0_i32_0, %c0_i32_1 : i32, i32, i32
  }
  func.func @transform_2(%arg0: i32, %arg1: i32) -> (i32, i32, i32) {
    %c0_i32 = arith.constant 0 : i32
    %c0_i32_0 = arith.constant 0 : i32
    %c0_i32_1 = arith.constant 0 : i32
    return %arg1, %c0_i32, %c0_i32_0 : i32, i32, i32
  }
  func.func @transform_3(%arg0: i32, %arg1: i32) -> (i32, i32, i32) {
    %c0_i32 = arith.constant 0 : i32
    %c0_i32_0 = arith.constant 0 : i32
    %c0_i32_1 = arith.constant 0 : i32
    return %arg1, %c0_i32, %c0_i32_0 : i32, i32, i32
  }
  func.func @transform_4(%arg0: i32, %arg1: i32) -> (i32, i32, i32) {
    %c0_i32 = arith.constant 0 : i32
    %c0_i32_0 = arith.constant 0 : i32
    %c0_i32_1 = arith.constant 0 : i32
    return %arg1, %c0_i32, %c0_i32_0 : i32, i32, i32
  }
  func.func @transform_5(%arg0: i32, %arg1: i32) -> (i32, i32, i32) {
    %c0_i32 = arith.constant 0 : i32
    %c0_i32_0 = arith.constant 0 : i32
    %c0_i32_1 = arith.constant 0 : i32
    return %arg1, %c0_i32, %c0_i32_0 : i32, i32, i32
  }
  func.func @transform_6(%arg0: i32, %arg1: i32) -> (i32, i32, i32) {
    %c0_i32 = arith.constant 0 : i32
    %c0_i32_0 = arith.constant 0 : i32
    %c0_i32_1 = arith.constant 0 : i32
    return %arg1, %c0_i32, %c0_i32_0 : i32, i32, i32
  }
  func.func @transform_7(%arg0: i32, %arg1: i32) -> (i32, i32, i32) {
    %c0_i32 = arith.constant 0 : i32
    %c0_i32_0 = arith.constant 0 : i32
    %c0_i32_1 = arith.constant 0 : i32
    return %arg1, %c0_i32, %c0_i32_0 : i32, i32, i32
  }
  func.func @transform_8(%arg0: i32, %arg1: i32) -> (i32, i32, i32) {
    %c0_i32 = arith.constant 0 : i32
    %c0_i32_0 = arith.constant 0 : i32
    %c0_i32_1 = arith.constant 0 : i32
    return %arg1, %c0_i32, %c0_i32_0 : i32, i32, i32
  }
  func.func @transform_9(%arg0: i32, %arg1: i32) -> (i32, i32, i32) {
    %c0_i32 = arith.constant 0 : i32
    %c0_i32_0 = arith.constant 0 : i32
    %c0_i32_1 = arith.constant 0 : i32
    return %arg1, %c0_i32, %c0_i32_0 : i32, i32, i32
  }
  func.func @transform_10(%arg0: i32, %arg1: i32) -> (i32, i32, i32) {
    %c0_i32 = arith.constant 0 : i32
    %c0_i32_0 = arith.constant 0 : i32
    %c0_i32_1 = arith.constant 0 : i32
    return %arg1, %c0_i32, %c0_i32_0 : i32, i32, i32
  }
  func.func @transform_11(%arg0: i32, %arg1: i32) -> (i32, i32, i32) {
    %c0_i32 = arith.constant 0 : i32
    %c0_i32_0 = arith.constant 0 : i32
    %c0_i32_1 = arith.constant 0 : i32
    return %arg1, %c0_i32, %c0_i32_0 : i32, i32, i32
  }
  func.func @transform_12(%arg0: i32, %arg1: i32) -> (i32, i32, i32) {
    %c0_i32 = arith.constant 0 : i32
    %c0_i32_0 = arith.constant 0 : i32
    %c0_i32_1 = arith.constant 0 : i32
    return %arg1, %c0_i32, %c0_i32_0 : i32, i32, i32
  }
  func.func @transform_13(%arg0: i32, %arg1: i32) -> (i32, i32, i32) {
    %c0_i32 = arith.constant 0 : i32
    %c0_i32_0 = arith.constant 0 : i32
    %c0_i32_1 = arith.constant 0 : i32
    return %arg1, %c0_i32, %c0_i32_0 : i32, i32, i32
  }
  func.func @transform_14(%arg0: i32, %arg1: i32) -> (i32, i32, i32) {
    %c0_i32 = arith.constant 0 : i32
    %c0_i32_0 = arith.constant 0 : i32
    %c0_i32_1 = arith.constant 0 : i32
    return %arg1, %c0_i32, %c0_i32_0 : i32, i32, i32
  }
  func.func @transform_15(%arg0: i32, %arg1: i32) -> (i32, i32) {
    %c0_i32 = arith.constant 0 : i32
    %c0_i32_0 = arith.constant 0 : i32
    %c0_i32_1 = arith.constant 0 : i32
    return %c0_i32, %c0_i32_0 : i32, i32
  }
  func.func @transform_16(%arg0: i32, %arg1: i32) -> (i32, i32) {
    %c0_i32 = arith.constant 0 : i32
    %c0_i32_0 = arith.constant 0 : i32
    %c0_i32_1 = arith.constant 0 : i32
    return %c0_i32, %c0_i32_0 : i32, i32
  }
  func.func @transform_17(%arg0: i32, %arg1: i32) -> (i32, i32, i32) {
    %c0_i32 = arith.constant 0 : i32
    %c0_i32_0 = arith.constant 0 : i32
    %c0_i32_1 = arith.constant 0 : i32
    return %arg0, %c0_i32, %c0_i32_0 : i32, i32, i32
  }
}

</mosaic_0001>

<llo_original>
// kernel: encoder_forward.1
$region0: #{encoder_forward.1}
  #allocation0 [shape = 'u32[]', space=smem, size = 0x4, offset = 0x4, fixed_abs, tag = 'smem constant byte address 0x4 - core index']
  #allocation1 [shape = 'u32[72,128]{1,0:T(1,128)}', space=vmem, size = 0x9000, scoped, tag = 'internal scratch']
  #allocation2 [shape = 'f32[2,8,128]{2,1,0:T(8,128)}', space=vmem, size = 0x2000, scoped, tag = 'scratch operand']
  %s0 = inlined_call_operand.vmem [shape: f32[4,8,128], index: 0, kind: input, shape index: {}]
  %s1 = inlined_call_operand.vmem [shape: f32[1,8,128], index: 1, kind: input, shape index: {}]
  %s2 = inlined_call_operand.vmem [shape: f32[2,2,128], index: 2, kind: input, shape index: {}]
  %s3 = inlined_call_operand.vmem [shape: f32[2,1,128], index: 3, kind: input, shape index: {}]
  %s4 = inlined_call_operand.vmem [shape: f32[2,1,128], index: 4, kind: input, shape index: {}]
  %s5 = inlined_call_operand.vmem [shape: bf16[2,128,384], index: 5, kind: input, shape index: {}]
  %s6 = inlined_call_operand.vmem [shape: f32[2,1,384], index: 6, kind: input, shape index: {}]
  %s7 = inlined_call_operand.vmem [shape: bf16[2,128,128], index: 7, kind: input, shape index: {}]
  %s8 = inlined_call_operand.vmem [shape: f32[2,1,128], index: 8, kind: input, shape index: {}]
  %s9 = inlined_call_operand.vmem [shape: f32[2,1,128], index: 9, kind: input, shape index: {}]
  %s10 = inlined_call_operand.vmem [shape: f32[2,1,128], index: 10, kind: input, shape index: {}]
  %s11 = inlined_call_operand.vmem [shape: bf16[2,128,256], index: 11, kind: input, shape index: {}]
  %s12 = inlined_call_operand.vmem [shape: f32[2,1,256], index: 12, kind: input, shape index: {}]
  %s13 = inlined_call_operand.vmem [shape: bf16[2,256,128], index: 13, kind: input, shape index: {}]
  %s14 = inlined_call_operand.vmem [shape: f32[2,1,128], index: 14, kind: input, shape index: {}]
  %s15 = inlined_call_operand.vmem [shape: f32[1,128], index: 15, kind: input, shape index: {}]
  %s16 = inlined_call_operand.vmem [shape: f32[1,128], index: 16, kind: input, shape index: {}]
  %s17 = inlined_call_operand.hbm [shape: f32[4,8,128], index: 17, kind: output, shape index: {}]
  %s18 = sld [smem:[#allocation0]]
  $region109: #{encoder_forward.1} parent=0
    _
  %s20 = ssub.s32 1, %s18
  %s21 = scalar_select 0, %s20, %s18
  $region1: #{encoder_forward.1} parent=0
    #allocation3 [shape = 'u8[16384]{0}', space=vmem, size = 0x4000, scoped, tag = 'output window, operand 0']
    #allocation4 [shape = 's32[2]{0}', space=sflag, size = 0x8, scoped, tag = 'scoped memory for encoder_forward.1']
    %22 = vsyncpa [#allocation4], 0
    %s23 = scalar_lea.sflag [#allocation4], 1
    %24 = vsyncpa %s23, 0
    loop: start=0, step=1, limit=6
    $region2: #{encoder_forward.1} parent=1 // loop_pre_header
      _
    $region3: #{encoder_forward.1} parent=1 // loop_header
      %s26 = sphi 0, %s30
      %p27 = scmp.ge.s32.totalorder %s26, 6
      %s33 = sphi 0, %s45
      %s34 = sphi 0, %s41
      %s35 = sphi 0, %s33
      %s36 = sphi 0, %s34
      %s37 = sphi 0, %s35
      %s38 = sphi 0, %s36
      %s48 = sphi 0, %s50
      %s51 = sphi 0, %s48
      %s52 = sphi 0, %s51
      %s68 = sphi 0, %s52
      %s72 = sphi 0, %s72
      %s74 = sphi 0, %s72
      %s75 = sphi 0, %s74
      %s89 = sphi 0, %s75
      %s95 = sphi 0, %s97
      %s98 = sphi 0, %s95
      %s99 = sphi 0, %s98
      %s115 = sphi 0, %s99
      %s121 = sphi 0, %s123
      %s124 = sphi 0, %s121
      %s125 = sphi 0, %s124
      %s141 = sphi 0, %s125
      %s147 = sphi 0, %s149
      %s150 = sphi 0, %s147
      %s151 = sphi 0, %s150
      %s167 = sphi 0, %s151
      %s173 = sphi 0, %s175
      %s176 = sphi 0, %s173
      %s177 = sphi 0, %s176
      %s193 = sphi 0, %s177
      %s199 = sphi 0, %s201
      %s202 = sphi 0, %s199
      %s203 = sphi 0, %s202
      %s219 = sphi 0, %s203
      %s225 = sphi 0, %s227
      %s228 = sphi 0, %s225
      %s229 = sphi 0, %s228
      %s245 = sphi 0, %s229
      %s251 = sphi 0, %s253
      %s254 = sphi 0, %s251
      %s255 = sphi 0, %s254
      %s271 = sphi 0, %s255
      %s277 = sphi 0, %s279
      %s280 = sphi 0, %s277
      %s281 = sphi 0, %s280
      %s297 = sphi 0, %s281
      %s303 = sphi 0, %s305
      %s306 = sphi 0, %s303
      %s307 = sphi 0, %s306
      %s323 = sphi 0, %s307
      %s329 = sphi 0, %s331
      %s332 = sphi 0, %s329
      %s333 = sphi 0, %s332
      %s349 = sphi 0, %s333
      %s355 = sphi 0, %s357
      %s358 = sphi 0, %s355
      %s359 = sphi 0, %s358
      %s375 = sphi 0, %s359
      %s381 = sphi 0, %s383
      %s384 = sphi 0, %s381
      %s385 = sphi 0, %s384
      %s401 = sphi 0, %s385
      %s407 = sphi 0, %s409
      %s410 = sphi 0, %s407
      %s411 = sphi 0, %s410
      %s427 = sphi 0, %s411
      %s431 = sphi 0, %s431
      %s433 = sphi 0, %s431
      %s434 = sphi 0, %s433
      %s448 = sphi 0, %s434
      %s452 = sphi 0, %s452
      %s454 = sphi 0, %s452
      %s455 = sphi 0, %s454
      %s469 = sphi 0, %s455
      %s475 = sphi 0, %s477
      %s478 = sphi 0, %s475
      %s479 = sphi 0, %s478
      %s495 = sphi 0, %s479
    $region4: #{encoder_forward.1} parent=1 // loop_header_branch
      %29 = sbr.rel (%p27) target = $region8
    $region5: #{encoder_forward.1} parent=1 // loop_body
      %s31 = ssub.s32 %s26, 1
      %s32 = ssub.s32 %s26, 2
      %s39 = sadd.s32 1, %s34
      %p40 = scmp.ge.s32.totalorder %s39, 2
      %s41 = scalar_select %p40, 0, %s39
      %s42 = sadd.s32 1, %s33
      %s43 = scalar_select %p40, %s42, %s33
      %p44 = scmp.ge.s32.totalorder %s43, 2
      %s45 = scalar_select %p44, 0, %s43
      %s46 = ssub.s32 %s33, %s45
      %p47 = scmp.eq.s32.totalorder %s46, 0
      %s49 = sadd.s32 %s48, 1
      %s50 = scalar_select %p47, %s48, %s49
      %p53 = pneg %p47
      %p54 = scmp.eq.s32.totalorder %s26, 3
      %p55 = por %p53, %p54
      %p56 = scmp.ne.s32.totalorder %s48, %s51
      %p57 = scmp.eq.s32.totalorder %s26, 0
      %p58 = por %p56, %p57
      %p59 = scmp.ne.s32.totalorder %s48, %s51
      %p60 = scmp.eq.s32.totalorder %s31, 3
      %p61 = por %p59, %p60
      %p62 = scmp.ne.s32.totalorder %s51, %s52
      %p63 = scmp.eq.s32.totalorder %s31, 0
      %p64 = por %p62, %p63
      %p65 = scmp.ne.s32.totalorder %s51, %s52
      %p66 = scmp.eq.s32.totalorder %s32, 3
      %p67 = por %p65, %p66
      %p69 = scmp.ne.s32.totalorder %s52, %s68
      %p70 = scmp.eq.s32.totalorder %s32, 0
      %p71 = por %p69, %p70
      %s73 = sadd.s32 %s72, 1
      %p76 = scmp.eq.s32.totalorder %s26, 3
      %p77 = scmp.ne.s32.totalorder %s72, %s74
      %p78 = scmp.eq.s32.totalorder %s26, 0
      %p79 = por %p77, %p78
      %p80 = scmp.ne.s32.totalorder %s72, %s74
      %p81 = scmp.eq.s32.totalorder %s31, 3
      %p82 = por %p80, %p81
      %p83 = scmp.ne.s32.totalorder %s74, %s75
      %p84 = scmp.eq.s32.totalorder %s31, 0
      %p85 = por %p83, %p84
      %p86 = scmp.ne.s32.totalorder %s74, %s75
      %p87 = scmp.eq.s32.totalorder %s32, 3
      %p88 = por %p86, %p87
      %p90 = scmp.ne.s32.totalorder %s75, %s89
      %p91 = scmp.eq.s32.totalorder %s32, 0
      %p92 = por %p90, %p91
      %s93 = ssub.s32 %s34, %s41
      %p94 = scmp.eq.s32.totalorder %s93, 0
      %s96 = sadd.s32 %s95, 1
      %s97 = scalar_select %p94, %s95, %s96
      %p100 = pneg %p94
      %p101 = scmp.eq.s32.totalorder %s26, 3
      %p102 = por %p100, %p101
      %p103 = scmp.ne.s32.totalorder %s95, %s98
      %p104 = scmp.eq.s32.totalorder %s26, 0
      %p105 = por %p103, %p104
      %p106 = scmp.ne.s32.totalorder %s95, %s98
      %p107 = scmp.eq.s32.totalorder %s31, 3
      %p108 = por %p106, %p107
      %p109 = scmp.ne.s32.totalorder %s98, %s99
      %p110 = scmp.eq.s32.totalorder %s31, 0
      %p111 = por %p109, %p110
      %p112 = scmp.ne.s32.totalorder %s98, %s99
      %p113 = scmp.eq.s32.totalorder %s32, 3
      %p114 = por %p112, %p113
      %p116 = scmp.ne.s32.totalorder %s99, %s115
      %p117 = scmp.eq.s32.totalorder %s32, 0
      %p118 = por %p116, %p117
      %s119 = ssub.s32 %s34, %s41
      %p120 = scmp.eq.s32.totalorder %s119, 0
      %s122 = sadd.s32 %s121, 1
      %s123 = scalar_select %p120, %s121, %s122
      %p126 = pneg %p120
      %p127 = scmp.eq.s32.totalorder %s26, 3
      %p128 = por %p126, %p127
      %p129 = scmp.ne.s32.totalorder %s121, %s124
      %p130 = scmp.eq.s32.totalorder %s26, 0
      %p131 = por %p129, %p130
      %p132 = scmp.ne.s32.totalorder %s121, %s124
      %p133 = scmp.eq.s32.totalorder %s31, 3
      %p134 = por %p132, %p133
      %p135 = scmp.ne.s32.totalorder %s124, %s125
      %p136 = scmp.eq.s32.totalorder %s31, 0
      %p137 = por %p135, %p136
      %p138 = scmp.ne.s32.totalorder %s124, %s125
      %p139 = scmp.eq.s32.totalorder %s32, 3
      %p140 = por %p138, %p139
      %p142 = scmp.ne.s32.totalorder %s125, %s141
      %p143 = scmp.eq.s32.totalorder %s32, 0
      %p144 = por %p142, %p143
      %s145 = ssub.s32 %s34, %s41
      %p146 = scmp.eq.s32.totalorder %s145, 0
      %s148 = sadd.s32 %s147, 1
      %s149 = scalar_select %p146, %s147, %s148
      %p152 = pneg %p146
      %p153 = scmp.eq.s32.totalorder %s26, 3
      %p154 = por %p152, %p153
      %p155 = scmp.ne.s32.totalorder %s147, %s150
      %p156 = scmp.eq.s32.totalorder %s26, 0
      %p157 = por %p155, %p156
      %p158 = scmp.ne.s32.totalorder %s147, %s150
      %p159 = scmp.eq.s32.totalorder %s31, 3
      %p160 = por %p158, %p159
      %p161 = scmp.ne.s32.totalorder %s150, %s151
      %p162 = scmp.eq.s32.totalorder %s31, 0
      %p163 = por %p161, %p162
      %p164 = scmp.ne.s32.totalorder %s150, %s151
      %p165 = scmp.eq.s32.totalorder %s32, 3
      %p166 = por %p164, %p165
      %p168 = scmp.ne.s32.totalorder %s151, %s167
      %p169 = scmp.eq.s32.totalorder %s32, 0
      %p170 = por %p168, %p169
      %s171 = ssub.s32 %s34, %s41
      %p172 = scmp.eq.s32.totalorder %s171, 0
      %s174 = sadd.s32 %s173, 1
      %s175 = scalar_select %p172, %s173, %s174
      %p178 = pneg %p172
      %p179 = scmp.eq.s32.totalorder %s26, 3
      %p180 = por %p178, %p179
      %p181 = scmp.ne.s32.totalorder %s173, %s176
      %p182 = scmp.eq.s32.totalorder %s26, 0
      %p183 = por %p181, %p182
      %p184 = scmp.ne.s32.totalorder %s173, %s176
      %p185 = scmp.eq.s32.totalorder %s31, 3
      %p186 = por %p184, %p185
      %p187 = scmp.ne.s32.totalorder %s176, %s177
      %p188 = scmp.eq.s32.totalorder %s31, 0
      %p189 = por %p187, %p188
      %p190 = scmp.ne.s32.totalorder %s176, %s177
      %p191 = scmp.eq.s32.totalorder %s32, 3
      %p192 = por %p190, %p191
      %p194 = scmp.ne.s32.totalorder %s177, %s193
      %p195 = scmp.eq.s32.totalorder %s32, 0
      %p196 = por %p194, %p195
      %s197 = ssub.s32 %s34, %s41
      %p198 = scmp.eq.s32.totalorder %s197, 0
      %s200 = sadd.s32 %s199, 1
      %s201 = scalar_select %p198, %s199, %s200
      %p204 = pneg %p198
      %p205 = scmp.eq.s32.totalorder %s26, 3
      %p206 = por %p204, %p205
      %p207 = scmp.ne.s32.totalorder %s199, %s202
      %p208 = scmp.eq.s32.totalorder %s26, 0
      %p209 = por %p207, %p208
      %p210 = scmp.ne.s32.totalorder %s199, %s202
      %p211 = scmp.eq.s32.totalorder %s31, 3
      %p212 = por %p210, %p211
      %p213 = scmp.ne.s32.totalorder %s202, %s203
      %p214 = scmp.eq.s32.totalorder %s31, 0
      %p215 = por %p213, %p214
      %p216 = scmp.ne.s32.totalorder %s202, %s203
      %p217 = scmp.eq.s32.totalorder %s32, 3
      %p218 = por %p216, %p217
      %p220 = scmp.ne.s32.totalorder %s203, %s219
      %p221 = scmp.eq.s32.totalorder %s32, 0
      %p222 = por %p220, %p221
      %s223 = ssub.s32 %s34, %s41
      %p224 = scmp.eq.s32.totalorder %s223, 0
      %s226 = sadd.s32 %s225, 1
      %s227 = scalar_select %p224, %s225, %s226
      %p230 = pneg %p224
      %p231 = scmp.eq.s32.totalorder %s26, 3
      %p232 = por %p230, %p231
      %p233 = scmp.ne.s32.totalorder %s225, %s228
      %p234 = scmp.eq.s32.totalorder %s26, 0
      %p235 = por %p233, %p234
      %p236 = scmp.ne.s32.totalorder %s225, %s228
      %p237 = scmp.eq.s32.totalorder %s31, 3
      %p238 = por %p236, %p237
      %p239 = scmp.ne.s32.totalorder %s228, %s229
      %p240 = scmp.eq.s32.totalorder %s31, 0
      %p241 = por %p239, %p240
      %p242 = scmp.ne.s32.totalorder %s228, %s229
      %p243 = scmp.eq.s32.totalorder %s32, 3
      %p244 = por %p242, %p243
      %p246 = scmp.ne.s32.totalorder %s229, %s245
      %p247 = scmp.eq.s32.totalorder %s32, 0
      %p248 = por %p246, %p247
      %s249 = ssub.s32 %s34, %s41
      %p250 = scmp.eq.s32.totalorder %s249, 0
      %s252 = sadd.s32 %s251, 1
      %s253 = scalar_select %p250, %s251, %s252
      %p256 = pneg %p250
      %p257 = scmp.eq.s32.totalorder %s26, 3
      %p258 = por %p256, %p257
      %p259 = scmp.ne.s32.totalorder %s251, %s254
      %p260 = scmp.eq.s32.totalorder %s26, 0
      %p261 = por %p259, %p260
      %p262 = scmp.ne.s32.totalorder %s251, %s254
      %p263 = scmp.eq.s32.totalorder %s31, 3
      %p264 = por %p262, %p263
      %p265 = scmp.ne.s32.totalorder %s254, %s255
      %p266 = scmp.eq.s32.totalorder %s31, 0
      %p267 = por %p265, %p266
      %p268 = scmp.ne.s32.totalorder %s254, %s255
      %p269 = scmp.eq.s32.totalorder %s32, 3
      %p270 = por %p268, %p269
      %p272 = scmp.ne.s32.totalorder %s255, %s271
      %p273 = scmp.eq.s32.totalorder %s32, 0
      %p274 = por %p272, %p273
      %s275 = ssub.s32 %s34, %s41
      %p276 = scmp.eq.s32.totalorder %s275, 0
      %s278 = sadd.s32 %s277, 1
      %s279 = scalar_select %p276, %s277, %s278
      %p282 = pneg %p276
      %p283 = scmp.eq.s32.totalorder %s26, 3
      %p284 = por %p282, %p283
      %p285 = scmp.ne.s32.totalorder %s277, %s280
      %p286 = scmp.eq.s32.totalorder %s26, 0
      %p287 = por %p285, %p286
      %p288 = scmp.ne.s32.totalorder %s277, %s280
      %p289 = scmp.eq.s32.totalorder %s31, 3
      %p290 = por %p288, %p289
      %p291 = scmp.ne.s32.totalorder %s280, %s281
      %p292 = scmp.eq.s32.totalorder %s31, 0
      %p293 = por %p291, %p292
      %p294 = scmp.ne.s32.totalorder %s280, %s281
      %p295 = scmp.eq.s32.totalorder %s32, 3
      %p296 = por %p294, %p295
      %p298 = scmp.ne.s32.totalorder %s281, %s297
      %p299 = scmp.eq.s32.totalorder %s32, 0
      %p300 = por %p298, %p299
      %s301 = ssub.s32 %s34, %s41
      %p302 = scmp.eq.s32.totalorder %s301, 0
      %s304 = sadd.s32 %s303, 1
      %s305 = scalar_select %p302, %s303, %s304
      %p308 = pneg %p302
      %p309 = scmp.eq.s32.totalorder %s26, 3
      %p310 = por %p308, %p309
      %p311 = scmp.ne.s32.totalorder %s303, %s306
      %p312 = scmp.eq.s32.totalorder %s26, 0
      %p313 = por %p311, %p312
      %p314 = scmp.ne.s32.totalorder %s303, %s306
      %p315 = scmp.eq.s32.totalorder %s31, 3
      %p316 = por %p314, %p315
      %p317 = scmp.ne.s32.totalorder %s306, %s307
      %p318 = scmp.eq.s32.totalorder %s31, 0
      %p319 = por %p317, %p318
      %p320 = scmp.ne.s32.totalorder %s306, %s307
      %p321 = scmp.eq.s32.totalorder %s32, 3
      %p322 = por %p320, %p321
      %p324 = scmp.ne.s32.totalorder %s307, %s323
      %p325 = scmp.eq.s32.totalorder %s32, 0
      %p326 = por %p324, %p325
      %s327 = ssub.s32 %s34, %s41
      %p328 = scmp.eq.s32.totalorder %s327, 0
      %s330 = sadd.s32 %s329, 1
      %s331 = scalar_select %p328, %s329, %s330
      %p334 = pneg %p328
      %p335 = scmp.eq.s32.totalorder %s26, 3
      %p336 = por %p334, %p335
      %p337 = scmp.ne.s32.totalorder %s329, %s332
      %p338 = scmp.eq.s32.totalorder %s26, 0
      %p339 = por %p337, %p338
      %p340 = scmp.ne.s32.totalorder %s329, %s332
      %p341 = scmp.eq.s32.totalorder %s31, 3
      %p342 = por %p340, %p341
      %p343 = scmp.ne.s32.totalorder %s332, %s333
      %p344 = scmp.eq.s32.totalorder %s31, 0
      %p345 = por %p343, %p344
      %p346 = scmp.ne.s32.totalorder %s332, %s333
      %p347 = scmp.eq.s32.totalorder %s32, 3
      %p348 = por %p346, %p347
      %p350 = scmp.ne.s32.totalorder %s333, %s349
      %p351 = scmp.eq.s32.totalorder %s32, 0
      %p352 = por %p350, %p351
      %s353 = ssub.s32 %s34, %s41
      %p354 = scmp.eq.s32.totalorder %s353, 0
      %s356 = sadd.s32 %s355, 1
      %s357 = scalar_select %p354, %s355, %s356
      %p360 = pneg %p354
      %p361 = scmp.eq.s32.totalorder %s26, 3
      %p362 = por %p360, %p361
      %p363 = scmp.ne.s32.totalorder %s355, %s358
      %p364 = scmp.eq.s32.totalorder %s26, 0
      %p365 = por %p363, %p364
      %p366 = scmp.ne.s32.totalorder %s355, %s358
      %p367 = scmp.eq.s32.totalorder %s31, 3
      %p368 = por %p366, %p367
      %p369 = scmp.ne.s32.totalorder %s358, %s359
      %p370 = scmp.eq.s32.totalorder %s31, 0
      %p371 = por %p369, %p370
      %p372 = scmp.ne.s32.totalorder %s358, %s359
      %p373 = scmp.eq.s32.totalorder %s32, 3
      %p374 = por %p372, %p373
      %p376 = scmp.ne.s32.totalorder %s359, %s375
      %p377 = scmp.eq.s32.totalorder %s32, 0
      %p378 = por %p376, %p377
      %s379 = ssub.s32 %s34, %s41
      %p380 = scmp.eq.s32.totalorder %s379, 0
      %s382 = sadd.s32 %s381, 1
      %s383 = scalar_select %p380, %s381, %s382
      %p386 = pneg %p380
      %p387 = scmp.eq.s32.totalorder %s26, 3
      %p388 = por %p386, %p387
      %p389 = scmp.ne.s32.totalorder %s381, %s384
      %p390 = scmp.eq.s32.totalorder %s26, 0
      %p391 = por %p389, %p390
      %p392 = scmp.ne.s32.totalorder %s381, %s384
      %p393 = scmp.eq.s32.totalorder %s31, 3
      %p394 = por %p392, %p393
      %p395 = scmp.ne.s32.totalorder %s384, %s385
      %p396 = scmp.eq.s32.totalorder %s31, 0
      %p397 = por %p395, %p396
      %p398 = scmp.ne.s32.totalorder %s384, %s385
      %p399 = scmp.eq.s32.totalorder %s32, 3
      %p400 = por %p398, %p399
      %p402 = scmp.ne.s32.totalorder %s385, %s401
      %p403 = scmp.eq.s32.totalorder %s32, 0
      %p404 = por %p402, %p403
      %s405 = ssub.s32 %s34, %s41
      %p406 = scmp.eq.s32.totalorder %s405, 0
      %s408 = sadd.s32 %s407, 1
      %s409 = scalar_select %p406, %s407, %s408
      %p412 = pneg %p406
      %p413 = scmp.eq.s32.totalorder %s26, 3
      %p414 = por %p412, %p413
      %p415 = scmp.ne.s32.totalorder %s407, %s410
      %p416 = scmp.eq.s32.totalorder %s26, 0
      %p417 = por %p415, %p416
      %p418 = scmp.ne.s32.totalorder %s407, %s410
      %p419 = scmp.eq.s32.totalorder %s31, 3
      %p420 = por %p418, %p419
      %p421 = scmp.ne.s32.totalorder %s410, %s411
      %p422 = scmp.eq.s32.totalorder %s31, 0
      %p423 = por %p421, %p422
      %p424 = scmp.ne.s32.totalorder %s410, %s411
      %p425 = scmp.eq.s32.totalorder %s32, 3
      %p426 = por %p424, %p425
      %p428 = scmp.ne.s32.totalorder %s411, %s427
      %p429 = scmp.eq.s32.totalorder %s32, 0
      %p430 = por %p428, %p429
      %s432 = sadd.s32 %s431, 1
      %p435 = scmp.eq.s32.totalorder %s26, 3
      %p436 = scmp.ne.s32.totalorder %s431, %s433
      %p437 = scmp.eq.s32.totalorder %s26, 0
      %p438 = por %p436, %p437
      %p439 = scmp.ne.s32.totalorder %s431, %s433
      %p440 = scmp.eq.s32.totalorder %s31, 3
      %p441 = por %p439, %p440
      %p442 = scmp.ne.s32.totalorder %s433, %s434
      %p443 = scmp.eq.s32.totalorder %s31, 0
      %p444 = por %p442, %p443
      %p445 = scmp.ne.s32.totalorder %s433, %s434
      %p446 = scmp.eq.s32.totalorder %s32, 3
      %p447 = por %p445, %p446
      %p449 = scmp.ne.s32.totalorder %s434, %s448
      %p450 = scmp.eq.s32.totalorder %s32, 0
      %p451 = por %p449, %p450
      %s453 = sadd.s32 %s452, 1
      %p456 = scmp.eq.s32.totalorder %s26, 3
      %p457 = scmp.ne.s32.totalorder %s452, %s454
      %p458 = scmp.eq.s32.totalorder %s26, 0
      %p459 = por %p457, %p458
      %p460 = scmp.ne.s32.totalorder %s452, %s454
      %p461 = scmp.eq.s32.totalorder %s31, 3
      %p462 = por %p460, %p461
      %p463 = scmp.ne.s32.totalorder %s454, %s455
      %p464 = scmp.eq.s32.totalorder %s31, 0
      %p465 = por %p463, %p464
      %p466 = scmp.ne.s32.totalorder %s454, %s455
      %p467 = scmp.eq.s32.totalorder %s32, 3
      %p468 = por %p466, %p467
      %p470 = scmp.ne.s32.totalorder %s455, %s469
      %p471 = scmp.eq.s32.totalorder %s32, 0
      %p472 = por %p470, %p471
      %s473 = ssub.s32 %s33, %s45
      %p474 = scmp.eq.s32.totalorder %s473, 0
      %s476 = sadd.s32 %s475, 1
      %s477 = scalar_select %p474, %s475, %s476
      %p480 = pneg %p474
      %p481 = scmp.eq.s32.totalorder %s26, 3
      %p482 = por %p480, %p481
      %p483 = scmp.ne.s32.totalorder %s475, %s478
      %p484 = scmp.eq.s32.totalorder %s26, 0
      %p485 = por %p483, %p484
      %p486 = scmp.ne.s32.totalorder %s475, %s478
      %p487 = scmp.eq.s32.totalorder %s31, 3
      %p488 = por %p486, %p487
      %p489 = scmp.ne.s32.totalorder %s478, %s479
      %p490 = scmp.eq.s32.totalorder %s31, 0
      %p491 = por %p489, %p490
      %p492 = scmp.ne.s32.totalorder %s478, %s479
      %p493 = scmp.eq.s32.totalorder %s32, 3
      %p494 = por %p492, %p493
      %p496 = scmp.ne.s32.totalorder %s479, %s495
      %p497 = scmp.eq.s32.totalorder %s32, 0
      %p498 = por %p496, %p497
      %p499 = scmp.le.s32.totalorder 1, %s26
      %p500 = scmp.lt.s32.totalorder %s26, 5
      %p501 = pnand %p499, %p500
      %p502 = pneg %p501
      // Predicated region
      $region9: #{encoder_forward.1} parent=5 // pred_check
        _
      $region10: #{encoder_forward.1} parent=5 // pred_check_branch
        %504 = sbr.rel (%p501) target = $region12
      $region11: #{encoder_forward.1} parent=5 // pred_region
        %s505 = ssub.s32 %s26, 1
        // Predicated region
        $region13: #{encoder_forward.1} parent=11 // pred_check
          %p506 = pneg %p85
        $region14: #{encoder_forward.1} parent=11 // pred_check_branch
          %508 = sbr.rel (%p506) target = $region16
        $region15: #{encoder_forward.1} parent=11 // pred_region
          _
        $region16: #{encoder_forward.1} parent=11 // pred_fallthru
          _
        // Predicated region
        $region17: #{encoder_forward.1} parent=11 // pred_check
          %p509 = pneg %p444
        $region18: #{encoder_forward.1} parent=11 // pred_check_branch
          %511 = sbr.rel (%p509) target = $region20
        $region19: #{encoder_forward.1} parent=11 // pred_region
          _
        $region20: #{encoder_forward.1} parent=11 // pred_fallthru
          _
        // Predicated region
        $region21: #{encoder_forward.1} parent=11 // pred_check
          %p512 = pneg %p465
        $region22: #{encoder_forward.1} parent=11 // pred_check_branch
          %514 = sbr.rel (%p512) target = $region24
        $region23: #{encoder_forward.1} parent=11 // pred_region
          _
        $region24: #{encoder_forward.1} parent=11 // pred_fallthru
          _
      $region12: #{encoder_forward.1} parent=5 // pred_fallthru
        _
      %p515 = scmp.lt.s32.totalorder %s26, 4
      // Predicated region
      $region25: #{encoder_forward.1} parent=5 // pred_check
        %p516 = pneg %p515
      $region26: #{encoder_forward.1} parent=5 // pred_check_branch
        %518 = sbr.rel (%p516) target = $region28
      $region27: #{encoder_forward.1} parent=5 // pred_region
        // Predicated region
        $region29: #{encoder_forward.1} parent=27 // pred_check
          %p519 = pneg %p58
        $region30: #{encoder_forward.1} parent=27 // pred_check_branch
          %521 = sbr.rel (%p519) target = $region32
        $region31: #{encoder_forward.1} parent=27 // pred_region
          %s522 = smul.u32 2, %s33
          %p523 = scmp.lt.s32.totalorder %s522, 3
          %s524 = scalar_select %p523, %s522, 3
          %s525 = smul.addr %s524, 8
          %s526 = scalar_lea.vmem %s0, %s525
          %s527 = smul.u32 2, %s33
        $region32: #{encoder_forward.1} parent=27 // pred_fallthru
          _
        // Predicated region
        $region33: #{encoder_forward.1} parent=27 // pred_check
          %p528 = pneg %p105
        $region34: #{encoder_forward.1} parent=27 // pred_check_branch
          %530 = sbr.rel (%p528) target = $region36
        $region35: #{encoder_forward.1} parent=27 // pred_region
          %p531 = scmp.lt.s32.totalorder %s34, 1
          %s532 = scalar_select %p531, %s34, 1
          %s533 = smul.addr %s532, 2
          %s534 = scalar_lea.vmem %s2, %s533
        $region36: #{encoder_forward.1} parent=27 // pred_fallthru
          _
        // Predicated region
        $region37: #{encoder_forward.1} parent=27 // pred_check
          %p535 = pneg %p131
        $region38: #{encoder_forward.1} parent=27 // pred_check_branch
          %537 = sbr.rel (%p535) target = $region40
        $region39: #{encoder_forward.1} parent=27 // pred_region
          %p538 = scmp.lt.s32.totalorder %s34, 1
          %s539 = scalar_select %p538, %s34, 1
          %s540 = scalar_lea.vmem %s3, %s539
        $region40: #{encoder_forward.1} parent=27 // pred_fallthru
          _
        // Predicated region
        $region41: #{encoder_forward.1} parent=27 // pred_check
          %p541 = pneg %p157
        $region42: #{encoder_forward.1} parent=27 // pred_check_branch
          %543 = sbr.rel (%p541) target = $region44
        $region43: #{encoder_forward.1} parent=27 // pred_region
          %p544 = scmp.lt.s32.totalorder %s34, 1
          %s545 = scalar_select %p544, %s34, 1
          %s546 = scalar_lea.vmem %s4, %s545
        $region44: #{encoder_forward.1} parent=27 // pred_fallthru
          _
        // Predicated region
        $region45: #{encoder_forward.1} parent=27 // pred_check
          %p547 = pneg %p183
        $region46: #{encoder_forward.1} parent=27 // pred_check_branch
          %549 = sbr.rel (%p547) target = $region48
        $region47: #{encoder_forward.1} parent=27 // pred_region
          %p550 = scmp.lt.s32.totalorder %s34, 1
          %s551 = scalar_select %p550, %s34, 1
          %s552 = smul.addr %s551, 48
          %s553 = smul.addr %s552, 4
          %s554 = scalar_lea.vmem %s5, %s553
        $region48: #{encoder_forward.1} parent=27 // pred_fallthru
          _
        // Predicated region
        $region49: #{encoder_forward.1} parent=27 // pred_check
          %p555 = pneg %p209
        $region50: #{encoder_forward.1} parent=27 // pred_check_branch
          %557 = sbr.rel (%p555) target = $region52
        $region51: #{encoder_forward.1} parent=27 // pred_region
          %p558 = scmp.lt.s32.totalorder %s34, 1
          %s559 = scalar_select %p558, %s34, 1
          %s560 = smul.addr %s559, 3
          %s561 = scalar_lea.vmem %s6, %s560
        $region52: #{encoder_forward.1} parent=27 // pred_fallthru
          _
        // Predicated region
        $region53: #{encoder_forward.1} parent=27 // pred_check
          %p562 = pneg %p235
        $region54: #{encoder_forward.1} parent=27 // pred_check_branch
          %564 = sbr.rel (%p562) target = $region56
        $region55: #{encoder_forward.1} parent=27 // pred_region
          %p565 = scmp.lt.s32.totalorder %s34, 1
          %s566 = scalar_select %p565, %s34, 1
          %s567 = smul.addr %s566, 16
          %s568 = smul.addr %s567, 4
          %s569 = scalar_lea.vmem %s7, %s568
        $region56: #{encoder_forward.1} parent=27 // pred_fallthru
          _
        // Predicated region
        $region57: #{encoder_forward.1} parent=27 // pred_check
          %p570 = pneg %p261
        $region58: #{encoder_forward.1} parent=27 // pred_check_branch
          %572 = sbr.rel (%p570) target = $region60
        $region59: #{encoder_forward.1} parent=27 // pred_region
          %p573 = scmp.lt.s32.totalorder %s34, 1
          %s574 = scalar_select %p573, %s34, 1
          %s575 = scalar_lea.vmem %s8, %s574
        $region60: #{encoder_forward.1} parent=27 // pred_fallthru
          _
        // Predicated region
        $region61: #{encoder_forward.1} parent=27 // pred_check
          %p576 = pneg %p287
        $region62: #{encoder_forward.1} parent=27 // pred_check_branch
          %578 = sbr.rel (%p576) target = $region64
        $region63: #{encoder_forward.1} parent=27 // pred_region
          %p579 = scmp.lt.s32.totalorder %s34, 1
          %s580 = scalar_select %p579, %s34, 1
          %s581 = scalar_lea.vmem %s9, %s580
        $region64: #{encoder_forward.1} parent=27 // pred_fallthru
          _
        // Predicated region
        $region65: #{encoder_forward.1} parent=27 // pred_check
          %p582 = pneg %p313
        $region66: #{encoder_forward.1} parent=27 // pred_check_branch
          %584 = sbr.rel (%p582) target = $region68
        $region67: #{encoder_forward.1} parent=27 // pred_region
          %p585 = scmp.lt.s32.totalorder %s34, 1
          %s586 = scalar_select %p585, %s34, 1
          %s587 = scalar_lea.vmem %s10, %s586
        $region68: #{encoder_forward.1} parent=27 // pred_fallthru
          _
        // Predicated region
        $region69: #{encoder_forward.1} parent=27 // pred_check
          %p588 = pneg %p339
        $region70: #{encoder_forward.1} parent=27 // pred_check_branch
          %590 = sbr.rel (%p588) target = $region72
        $region71: #{encoder_forward.1} parent=27 // pred_region
          %p591 = scmp.lt.s32.totalorder %s34, 1
          %s592 = scalar_select %p591, %s34, 1
          %s593 = smul.addr %s592, 32
          %s594 = smul.addr %s593, 4
          %s595 = scalar_lea.vmem %s11, %s594
        $region72: #{encoder_forward.1} parent=27 // pred_fallthru
          _
        // Predicated region
        $region73: #{encoder_forward.1} parent=27 // pred_check
          %p596 = pneg %p365
        $region74: #{encoder_forward.1} parent=27 // pred_check_branch
          %598 = sbr.rel (%p596) target = $region76
        $region75: #{encoder_forward.1} parent=27 // pred_region
          %p599 = scmp.lt.s32.totalorder %s34, 1
          %s600 = scalar_select %p599, %s34, 1
          %s601 = smul.addr %s600, 2
          %s602 = scalar_lea.vmem %s12, %s601
        $region76: #{encoder_forward.1} parent=27 // pred_fallthru
          _
        // Predicated region
        $region77: #{encoder_forward.1} parent=27 // pred_check
          %p603 = pneg %p391
        $region78: #{encoder_forward.1} parent=27 // pred_check_branch
          %605 = sbr.rel (%p603) target = $region80
        $region79: #{encoder_forward.1} parent=27 // pred_region
          %p606 = scmp.lt.s32.totalorder %s34, 1
          %s607 = scalar_select %p606, %s34, 1
          %s608 = smul.addr %s607, 32
          %s609 = smul.addr %s608, 4
          %s610 = scalar_lea.vmem %s13, %s609
        $region80: #{encoder_forward.1} parent=27 // pred_fallthru
          _
        // Predicated region
        $region81: #{encoder_forward.1} parent=27 // pred_check
          %p611 = pneg %p417
        $region82: #{encoder_forward.1} parent=27 // pred_check_branch
          %613 = sbr.rel (%p611) target = $region84
        $region83: #{encoder_forward.1} parent=27 // pred_region
          %p614 = scmp.lt.s32.totalorder %s34, 1
          %s615 = scalar_select %p614, %s34, 1
          %s616 = scalar_lea.vmem %s14, %s615
        $region84: #{encoder_forward.1} parent=27 // pred_fallthru
          _
      $region28: #{encoder_forward.1} parent=5 // pred_fallthru
        _
      %p617 = scmp.le.s32.totalorder 1, %s26
      %p618 = scmp.lt.s32.totalorder %s26, 5
      %p619 = pnand %p617, %p618
      %p620 = pneg %p619
      // Predicated region
      $region85: #{encoder_forward.1} parent=5 // pred_check
        _
      $region86: #{encoder_forward.1} parent=5 // pred_check_branch
        %622 = sbr.rel (%p619) target = $region88
      $region87: #{encoder_forward.1} parent=5 // pred_region
        %s623 = ssub.s32 %s26, 1
        %s624 = smul.u32 2, %s35
        %p625 = scmp.lt.s32.totalorder %s624, 3
        %s626 = scalar_select %p625, %s624, 3
        %s627 = smul.addr %s626, 8
        %s628 = scalar_lea.vmem %s0, %s627
        %p629 = pneg %p64
        %p630 = pneg %p61
        %p631 = pneg %p85
        %p632 = pneg %p82
        %p633 = scmp.lt.s32.totalorder %s36, 1
        %s634 = scalar_select %p633, %s36, 1
        %s635 = smul.addr %s634, 2
        %s636 = scalar_lea.vmem %s2, %s635
        %p637 = pneg %p111
        %p638 = pneg %p108
        %p639 = scmp.lt.s32.totalorder %s36, 1
        %s640 = scalar_select %p639, %s36, 1
        %s641 = scalar_lea.vmem %s3, %s640
        %p642 = pneg %p137
        %p643 = pneg %p134
        %p644 = scmp.lt.s32.totalorder %s36, 1
        %s645 = scalar_select %p644, %s36, 1
        %s646 = scalar_lea.vmem %s4, %s645
        %p647 = pneg %p163
        %p648 = pneg %p160
        %p649 = scmp.lt.s32.totalorder %s36, 1
        %s650 = scalar_select %p649, %s36, 1
        %s651 = smul.addr %s650, 48
        %s652 = smul.addr %s651, 4
        %s653 = scalar_lea.vmem %s5, %s652
        %p654 = pneg %p189
        %p655 = pneg %p186
        %p656 = scmp.lt.s32.totalorder %s36, 1
        %s657 = scalar_select %p656, %s36, 1
        %s658 = smul.addr %s657, 3
        %s659 = scalar_lea.vmem %s6, %s658
        %p660 = pneg %p215
        %p661 = pneg %p212
        %p662 = scmp.lt.s32.totalorder %s36, 1
        %s663 = scalar_select %p662, %s36, 1
        %s664 = smul.addr %s663, 16
        %s665 = smul.addr %s664, 4
        %s666 = scalar_lea.vmem %s7, %s665
        %p667 = pneg %p241
        %p668 = pneg %p238
        %p669 = scmp.lt.s32.totalorder %s36, 1
        %s670 = scalar_select %p669, %s36, 1
        %s671 = scalar_lea.vmem %s8, %s670
        %p672 = pneg %p267
        %p673 = pneg %p264
        %p674 = scmp.lt.s32.totalorder %s36, 1
        %s675 = scalar_select %p674, %s36, 1
        %s676 = scalar_lea.vmem %s9, %s675
        %p677 = pneg %p293
        %p678 = pneg %p290
        %p679 = scmp.lt.s32.totalorder %s36, 1
        %s680 = scalar_select %p679, %s36, 1
        %s681 = scalar_lea.vmem %s10, %s680
        %p682 = pneg %p319
        %p683 = pneg %p316
        %p684 = scmp.lt.s32.totalorder %s36, 1
        %s685 = scalar_select %p684, %s36, 1
        %s686 = smul.addr %s685, 32
        %s687 = smul.addr %s686, 4
        %s688 = scalar_lea.vmem %s11, %s687
        %p689 = pneg %p345
        %p690 = pneg %p342
        %p691 = scmp.lt.s32.totalorder %s36, 1
        %s692 = scalar_select %p691, %s36, 1
        %s693 = smul.addr %s692, 2
        %s694 = scalar_lea.vmem %s12, %s693
        %p695 = pneg %p371
        %p696 = pneg %p368
        %p697 = scmp.lt.s32.totalorder %s36, 1
        %s698 = scalar_select %p697, %s36, 1
        %s699 = smul.addr %s698, 32
        %s700 = smul.addr %s699, 4
        %s701 = scalar_lea.vmem %s13, %s700
        %p702 = pneg %p397
        %p703 = pneg %p394
        %p704 = scmp.lt.s32.totalorder %s36, 1
        %s705 = scalar_select %p704, %s36, 1
        %s706 = scalar_lea.vmem %s14, %s705
        %p707 = pneg %p423
        %p708 = pneg %p420
        %p709 = pneg %p444
        %p710 = pneg %p441
        %p711 = pneg %p465
        %p712 = pneg %p462
        %p713 = pneg %p491
        %p714 = pneg %p488
        %s715 = sand.u32 %s478, 1
        %s716 = scalar_lea.sflag [#allocation4], %s715
        %s717 = sand.u32 %s478, 1
        %s718 = smul.addr %s717, 16
        %s719 = scalar_lea.vmem [#allocation3], %s718
        %s720 = smul.u32 2, %s35
        %p721 = scmp.lt.s32.totalorder %s720, 3
        %s722 = scalar_select %p721, %s720, 3
        %s723 = smul.addr %s722, 8
        %s724 = scalar_lea.vmem %s0, %s723
        %s725 = smul.u32 2, %s35
        %p726 = scmp.lt.s32.totalorder %s36, 1
        %s727 = scalar_select %p726, %s36, 1
        %s728 = smul.addr %s727, 2
        %s729 = scalar_lea.vmem %s2, %s728
        %p730 = scmp.lt.s32.totalorder %s36, 1
        %s731 = scalar_select %p730, %s36, 1
        %s732 = scalar_lea.vmem %s3, %s731
        %p733 = scmp.lt.s32.totalorder %s36, 1
        %s734 = scalar_select %p733, %s36, 1
        %s735 = scalar_lea.vmem %s4, %s734
        %p736 = scmp.lt.s32.totalorder %s36, 1
        %s737 = scalar_select %p736, %s36, 1
        %s738 = smul.addr %s737, 48
        %s739 = smul.addr %s738, 4
        %s740 = scalar_lea.vmem %s5, %s739
        %p741 = scmp.lt.s32.totalorder %s36, 1
        %s742 = scalar_select %p741, %s36, 1
        %s743 = smul.addr %s742, 3
        %s744 = scalar_lea.vmem %s6, %s743
        %p745 = scmp.lt.s32.totalorder %s36, 1
        %s746 = scalar_select %p745, %s36, 1
        %s747 = smul.addr %s746, 16
        %s748 = smul.addr %s747, 4
        %s749 = scalar_lea.vmem %s7, %s748
        %p750 = scmp.lt.s32.totalorder %s36, 1
        %s751 = scalar_select %p750, %s36, 1
        %s752 = scalar_lea.vmem %s8, %s751
        %p753 = scmp.lt.s32.totalorder %s36, 1
        %s754 = scalar_select %p753, %s36, 1
        %s755 = scalar_lea.vmem %s9, %s754
        %p756 = scmp.lt.s32.totalorder %s36, 1
        %s757 = scalar_select %p756, %s36, 1
        %s758 = scalar_lea.vmem %s10, %s757
        %p759 = scmp.lt.s32.totalorder %s36, 1
        %s760 = scalar_select %p759, %s36, 1
        %s761 = smul.addr %s760, 32
        %s762 = smul.addr %s761, 4
        %s763 = scalar_lea.vmem %s11, %s762
        %p764 = scmp.lt.s32.totalorder %s36, 1
        %s765 = scalar_select %p764, %s36, 1
        %s766 = smul.addr %s765, 2
        %s767 = scalar_lea.vmem %s12, %s766
        %p768 = scmp.lt.s32.totalorder %s36, 1
        %s769 = scalar_select %p768, %s36, 1
        %s770 = smul.addr %s769, 32
        %s771 = smul.addr %s770, 4
        %s772 = scalar_lea.vmem %s13, %s771
        %p773 = scmp.lt.s32.totalorder %s36, 1
        %s774 = scalar_select %p773, %s36, 1
        %s775 = scalar_lea.vmem %s14, %s774
        %s776 = smul.u32 2, %s35
        %p778 = scmp.eq.s32.totalorder %s36, 0
        // Predicated region
        $region89: #{encoder_forward.1} parent=87 // pred_check
          %p779 = pneg %p778
        $region90: #{encoder_forward.1} parent=87 // pred_check_branch
          %781 = sbr.rel (%p779) target = $region92
        $region91: #{encoder_forward.1} parent=87 // pred_region
          %v782 = vld [vmem:[%s724] sm:$0xff]
          %v783 = vld [vmem:[%s724 + $0x8] sm:$0xff]
          %v784 = vld [vmem:[%s1] sm:$0xff]
          %v785 = vadd.f32 %v782, %v784
          %v786 = vadd.f32 %v783, %v784
          %787 = vst [vmem:[#allocation2] sm:$0xff] %v785
          %788 = vst [vmem:[#allocation2 + $0x8] sm:$0xff] %v786
        $region92: #{encoder_forward.1} parent=87 // pred_fallthru
          _
        %v789 = vld [vmem:[#allocation2] sm:$0xff]
        %v790 = vld [vmem:[#allocation2 + $0x8] sm:$0xff]
        %v791 = vld [vmem:[%s732] sm:$0x1]
        %v792 = vld [vmem:[%s735] sm:$0x1]
        %793 = vadd.xlane.f32.xlu0 %v789
        %v794 = vpop.xlane.xlu0 %793
        %795 = vadd.xlane.f32.xlu0 %v790
        %v796 = vpop.xlane.xlu0 %795
        %v797 = vrcp.pop 128.0
        %v798 = vmul.f32 128.0, %v797
        %v799 = vsub.f32 1.0, %v798
        %v800 = vmul.f32 %v797, %v799
        %v801 = vadd.f32 %v797, %v800
        %vm802 = vweird.f32 %v797
        %v803 = vsel %vm802, %v797, %v801
        %v804 = vmul.f32 %v794, %v803
        %v805 = vmul.f32 %v796, %v803
        %v806 = vsub.f32 %v789, %v804
        %v807 = vsub.f32 %v790, %v805
        %v808 = vmul.f32 %v806, %v806
        %v809 = vmul.f32 %v807, %v807
        %810 = vadd.xlane.f32.xlu0 %v808
        %v811 = vpop.xlane.xlu0 %810
        %812 = vadd.xlane.f32.xlu0 %v809
        %v813 = vpop.xlane.xlu0 %812
        %v814 = vmul.f32 %v811, %v803
        %v815 = vmul.f32 %v813, %v803
        %v816 = vadd.f32 %v814, 1e-06
        %v817 = vadd.f32 %v815, 1e-06
        %v818 = vrsqrt.pop %v816
        %v819 = vmul.f32 %v818, %v816
        %v820 = vmul.f32 %v819, %v818
        %v821 = vmul.f32 0.5, %v820
        %v822 = vsub.f32 1.5, %v821
        %v823 = vmul.f32 %v818, %v822
        %vm824 = vweird.f32 %v816
        %vm825 = vweird.f32 %v818
        %vm826 = vmor %vm824, %vm825
        %v827 = vsel %vm826, %v818, %v823
        %v828 = vrsqrt.pop %v817
        %v829 = vmul.f32 %v828, %v817
        %v830 = vmul.f32 %v829, %v828
        %v831 = vmul.f32 0.5, %v830
        %v832 = vsub.f32 1.5, %v831
        %v833 = vmul.f32 %v828, %v832
        %vm834 = vweird.f32 %v817
        %vm835 = vweird.f32 %v828
        %vm836 = vmor %vm834, %vm835
        %v837 = vsel %vm836, %v828, %v833
        %v838 = vmul.f32 %v806, %v827
        %v839 = vmul.f32 %v807, %v837
        %v841 = vperm.slane %v791, 0
        %v843 = vmul.f32 %v838, %v841
        %v844 = vmul.f32 %v839, %v841
        %v846 = vperm.slane %v792, 0
        %v848 = vadd.f32 %v843, %v846
        %v849 = vadd.f32 %v844, %v846
        %v850 = vld [vmem:[%s740] sm:$0xff]
        %v851 = vld [vmem:[%s740 + $0x8] sm:$0xf]
        %v852 = vld [vmem:[%s740 + $0xc] sm:$0xff]
        %v853 = vld [vmem:[%s740 + $0x14] sm:$0xf]
        %v854 = vld [vmem:[%s740 + $0x18] sm:$0xff]
        %v855 = vld [vmem:[%s740 + $0x20] sm:$0xf]
        %v856 = vld [vmem:[%s740 + $0x24] sm:$0xff]
        %v857 = vld [vmem:[%s740 + $0x2c] sm:$0xf]
        %v858 = vld [vmem:[%s740 + $0x30] sm:$0xff]
        %v859 = vld [vmem:[%s740 + $0x38] sm:$0xf]
        %v860 = vld [vmem:[%s740 + $0x3c] sm:$0xff]
        %v861 = vld [vmem:[%s740 + $0x44] sm:$0xf]
        %v862 = vld [vmem:[%s740 + $0x48] sm:$0xff]
        %v863 = vld [vmem:[%s740 + $0x50] sm:$0xf]
        %v864 = vld [vmem:[%s740 + $0x54] sm:$0xff]
        %v865 = vld [vmem:[%s740 + $0x5c] sm:$0xf]
        %v866 = vld [vmem:[%s740 + $0x60] sm:$0xff]
        %v867 = vld [vmem:[%s740 + $0x68] sm:$0xf]
        %v868 = vld [vmem:[%s740 + $0x6c] sm:$0xff]
        %v869 = vld [vmem:[%s740 + $0x74] sm:$0xf]
        %v870 = vld [vmem:[%s740 + $0x78] sm:$0xff]
        %v871 = vld [vmem:[%s740 + $0x80] sm:$0xf]
        %v872 = vld [vmem:[%s740 + $0x84] sm:$0xff]
        %v873 = vld [vmem:[%s740 + $0x8c] sm:$0xf]
        %v874 = vld [vmem:[%s740 + $0x90] sm:$0xff]
        %v875 = vld [vmem:[%s740 + $0x98] sm:$0xf]
        %v876 = vld [vmem:[%s740 + $0x9c] sm:$0xff]
        %v877 = vld [vmem:[%s740 + $0xa4] sm:$0xf]
        %v878 = vld [vmem:[%s740 + $0xa8] sm:$0xff]
        %v879 = vld [vmem:[%s740 + $0xb0] sm:$0xf]
        %v880 = vld [vmem:[%s740 + $0xb4] sm:$0xff]
        %v881 = vld [vmem:[%s740 + $0xbc] sm:$0xf]
        %v882 = vpack.c.bf16 %v849, %v848
        %v883 = vld [vmem:[%s744] sm:$0x7]
        %v885 = vperm.slane %v883, 0
        %v886 = vperm.slane %v883, 1
        %v887 = vperm.slane %v883, 2
        %v923 = vunpack.c.l.b16 %v850
        %v924 = vunpack.c.h.b16 %v850
        %v925 = vunpack.c.l.b16 %v851
        %v926 = vunpack.c.l.b16 %v852
        %v927 = vunpack.c.h.b16 %v852
        %v928 = vunpack.c.l.b16 %v853
        %v929 = vunpack.c.l.b16 %v854
        %v930 = vunpack.c.h.b16 %v854
        %v931 = vunpack.c.l.b16 %v855
        %v932 = vunpack.c.l.b16 %v856
        %v933 = vunpack.c.h.b16 %v856
        %v934 = vunpack.c.l.b16 %v857
        %v935 = vunpack.c.l.b16 %v858
        %v936 = vunpack.c.h.b16 %v858
        %v937 = vunpack.c.l.b16 %v859
        %v938 = vunpack.c.l.b16 %v860
        %v939 = vunpack.c.h.b16 %v860
        %v940 = vunpack.c.l.b16 %v861
        %v941 = vunpack.c.l.b16 %v862
        %v942 = vunpack.c.h.b16 %v862
        %v943 = vunpack.c.l.b16 %v863
        %v944 = vunpack.c.l.b16 %v864
        %v945 = vunpack.c.h.b16 %v864
        %v946 = vunpack.c.l.b16 %v865
        %v947 = vunpack.c.l.b16 %v866
        %v948 = vunpack.c.h.b16 %v866
        %v949 = vunpack.c.l.b16 %v867
        %v950 = vunpack.c.l.b16 %v868
        %v951 = vunpack.c.h.b16 %v868
        %v952 = vunpack.c.l.b16 %v869
        %v953 = vunpack.c.l.b16 %v870
        %v954 = vunpack.c.h.b16 %v870
        %v955 = vunpack.c.l.b16 %v871
        %v956 = vunpack.c.l.b16 %v872
        %v957 = vunpack.c.h.b16 %v872
        %v958 = vunpack.c.l.b16 %v873
        %v959 = vunpack.c.l.b16 %v874
        %v960 = vunpack.c.h.b16 %v874
        %v961 = vunpack.c.l.b16 %v875
        %v962 = vunpack.c.l.b16 %v876
        %v963 = vunpack.c.h.b16 %v876
        %v964 = vunpack.c.l.b16 %v877
        %v965 = vunpack.c.l.b16 %v878
        %v966 = vunpack.c.h.b16 %v878
        %v967 = vunpack.c.l.b16 %v879
        %v968 = vunpack.c.l.b16 %v880
        %v969 = vunpack.c.h.b16 %v880
        %v970 = vunpack.c.l.b16 %v881
        %v971 = vpack.c.b16 %v926, %v923
        %v972 = vpack.c.b16 %v927, %v924
        %v973 = vpack.c.b16 %v928, %v925
        %v974 = vpack.c.b16 %v932, %v929
        %v975 = vpack.c.b16 %v933, %v930
        %v976 = vpack.c.b16 %v934, %v931
        %v977 = vpack.c.b16 %v938, %v935
        %v978 = vpack.c.b16 %v939, %v936
        %v979 = vpack.c.b16 %v940, %v937
        %v980 = vpack.c.b16 %v944, %v941
        %v981 = vpack.c.b16 %v945, %v942
        %v982 = vpack.c.b16 %v946, %v943
        %v983 = vpack.c.b16 %v950, %v947
        %v984 = vpack.c.b16 %v951, %v948
        %v985 = vpack.c.b16 %v952, %v949
        %v986 = vpack.c.b16 %v956, %v953
        %v987 = vpack.c.b16 %v957, %v954
        %v988 = vpack.c.b16 %v958, %v955
        %v989 = vpack.c.b16 %v962, %v959
        %v990 = vpack.c.b16 %v963, %v960
        %v991 = vpack.c.b16 %v964, %v961
        %v992 = vpack.c.b16 %v968, %v965
        %v993 = vpack.c.b16 %v969, %v966
        %v994 = vpack.c.b16 %v970, %v967
        %1019 = vmatpush.bf16.msra.mxu0 %v992
        %1020 = vmatpush.bf16.msra.mxu0 %v989
        %1021 = vmatpush.bf16.msra.mxu0 %v986
        %1022 = vmatpush.bf16.msra.mxu0 %v983
        %1023 = vmatpush.bf16.msra.mxu0 %v980
        %1024 = vmatpush.bf16.msra.mxu0 %v977
        %1025 = vmatpush.bf16.msra.mxu0 %v974
        %1026 = vmatpush.bf16.msra.mxu0 %v971
        %1027 = vmatmul.bf16.gmra.mxu0 %v882
        %v1028 = vpop.f32.mrf.mxu0
        %v1029 = vadd.f32 %v885, %v1028
        %v1030 = vpop.f32.mrf.mxu0
        %v1031 = vadd.f32 %v885, %v1030
        %1032 = vdwg.mxu0
        %1033 = vmatpush.bf16.msra.mxu0 %v993
        %1034 = vmatpush.bf16.msra.mxu0 %v990
        %1035 = vmatpush.bf16.msra.mxu0 %v987
        %1036 = vmatpush.bf16.msra.mxu0 %v984
        %1037 = vmatpush.bf16.msra.mxu0 %v981
        %1038 = vmatpush.bf16.msra.mxu0 %v978
        %1039 = vmatpush.bf16.msra.mxu0 %v975
        %1040 = vmatpush.bf16.msra.mxu0 %v972
        %1041 = vmatmul.bf16.gmra.mxu0 %v882
        %v1042 = vpop.f32.mrf.mxu0
        %v1043 = vadd.f32 %v886, %v1042
        %v1044 = vpop.f32.mrf.mxu0
        %v1045 = vadd.f32 %v886, %v1044
        %1046 = vdwg.mxu0
        %1047 = vmatpush.bf16.msra.mxu0 %v994
        %1048 = vmatpush.bf16.msra.mxu0 %v991
        %1049 = vmatpush.bf16.msra.mxu0 %v988
        %1050 = vmatpush.bf16.msra.mxu0 %v985
        %1051 = vmatpush.bf16.msra.mxu0 %v982
        %1052 = vmatpush.bf16.msra.mxu0 %v979
        %1053 = vmatpush.bf16.msra.mxu0 %v976
        %1054 = vmatpush.bf16.msra.mxu0 %v973
        %1055 = vmatmul.bf16.gmra.mxu0 %v882
        %v1056 = vpop.f32.mrf.mxu0
        %v1057 = vadd.f32 %v887, %v1056
        %v1058 = vpop.f32.mrf.mxu0
        %v1059 = vadd.f32 %v887, %v1058
        %1060 = vdwg.mxu0
        %v1061 = vld [vmem:[%s729] sm:$0x3]
        %vm1062 = vcmask 1041408
        %v1063 = vsel %vm1062, %v1061, 0.0
        %1064 = vadd.xlane.f32.xlu0 %v1063
        %v1065 = vpop.xlane.xlu0 %1064
        %v1066 = vmul.f32 %v1065, %v803
        %v1067 = vsub.f32 %v1061, %v1066
        %v1068 = vmul.f32 %v1067, %v1067
        %v1069 = vsel %vm1062, %v1068, 0.0
        %1070 = vadd.xlane.f32.xlu0 %v1069
        %v1071 = vpop.xlane.xlu0 %1070
        %v1072 = vmul.f32 %v1071, %v803
        %v1073 = vadd.f32 %v1072, 1e-06
        %v1074 = vrsqrt.pop %v1073
        %v1075 = vmul.f32 %v1074, %v1073
        %v1076 = vmul.f32 %v1075, %v1074
        %v1077 = vmul.f32 0.5, %v1076
        %v1078 = vsub.f32 1.5, %v1077
        %v1079 = vmul.f32 %v1074, %v1078
        %vm1080 = vweird.f32 %v1073
        %vm1081 = vweird.f32 %v1074
        %vm1082 = vmor %vm1080, %vm1081
        %v1083 = vsel %vm1082, %v1074, %v1079
        %v1084 = vmul.f32 %v1067, %v1083
        %v1085 = vmul.f32 %v1084, %v841
        %v1086 = vadd.f32 %v1085, %v846
        %v1087 = vpack.c.bf16 %v1086, %v1086
        %1088 = vmatpush.bf16.msra.mxu0 %v993
        %1089 = vmatpush.bf16.msra.mxu0 %v990
        %1090 = vmatpush.bf16.msra.mxu0 %v987
        %1091 = vmatpush.bf16.msra.mxu0 %v984
        %1092 = vmatpush.bf16.msra.mxu0 %v981
        %1093 = vmatpush.bf16.msra.mxu0 %v978
        %1094 = vmatpush.bf16.msra.mxu0 %v975
        %1095 = vmatpush.bf16.msra.mxu0 %v972
        %1096 = vmatmul.bf16.gmra.mxu0 %v1087
        %v1097 = vpop.f32.mrf.mxu0
        %v1098 = vadd.f32 %v886, %v1097
        %v1099 = vpop.f32.mrf.mxu0
        %1100 = vdwg.mxu0
        %1101 = vmatpush.bf16.msra.mxu0 %v994
        %1102 = vmatpush.bf16.msra.mxu0 %v991
        %1103 = vmatpush.bf16.msra.mxu0 %v988
        %1104 = vmatpush.bf16.msra.mxu0 %v985
        %1105 = vmatpush.bf16.msra.mxu0 %v982
        %1106 = vmatpush.bf16.msra.mxu0 %v979
        %1107 = vmatpush.bf16.msra.mxu0 %v976
        %1108 = vmatpush.bf16.msra.mxu0 %v973
        %1109 = vmatmul.bf16.gmra.mxu0 %v1087
        %v1110 = vpop.f32.mrf.mxu0
        %v1111 = vadd.f32 %v887, %v1110
        %v1112 = vpop.f32.mrf.mxu0
        %1113 = vdwg.mxu0
        %v1114 = vld [vmem:[%s749] sm:$0xf]
        %v1115 = vld [vmem:[%s749 + $0x4] sm:$0xf]
        %v1116 = vld [vmem:[%s749 + $0x8] sm:$0xf]
        %v1117 = vld [vmem:[%s749 + $0xc] sm:$0xf]
        %v1118 = vld [vmem:[%s749 + $0x10] sm:$0xf]
        %v1119 = vld [vmem:[%s749 + $0x14] sm:$0xf]
        %v1120 = vld [vmem:[%s749 + $0x18] sm:$0xf]
        %v1121 = vld [vmem:[%s749 + $0x1c] sm:$0xf]
        %v1122 = vld [vmem:[%s749 + $0x20] sm:$0xf]
        %v1123 = vld [vmem:[%s749 + $0x24] sm:$0xf]
        %v1124 = vld [vmem:[%s749 + $0x28] sm:$0xf]
        %v1125 = vld [vmem:[%s749 + $0x2c] sm:$0xf]
        %v1126 = vld [vmem:[%s749 + $0x30] sm:$0xf]
        %v1127 = vld [vmem:[%s749 + $0x34] sm:$0xf]
        %v1128 = vld [vmem:[%s749 + $0x38] sm:$0xf]
        %v1129 = vld [vmem:[%s749 + $0x3c] sm:$0xf]
        %v1130 = vpack.c.bf16 %v1029, %v1029
        %v1131 = vpack.c.bf16 %v1031, %v1031
        %v1132 = vpack.c.bf16 %v1043, %v1043
        %v1133 = vpack.c.bf16 %v1045, %v1045
        %vm1134 = vcmask 261120
        %v1136 = vsel %vm1134, %v1130, 0
        %v1139 = vsel %vm1134, %v1132, 0
        %1141 = vmatpush.bf16.xpose.msra.mxu0 0
        %1142 = vmatpush.bf16.xpose.msra.mxu0 0
        %1143 = vmatpush.bf16.xpose.msra.mxu0 0
        %1144 = vmatpush.bf16.xpose.msra.mxu0 0
        %1145 = vmatpush.bf16.xpose.msra.mxu0 0
        %1146 = vmatpush.bf16.xpose.msra.mxu0 0
        %1147 = vmatpush.bf16.xpose.msra.mxu0 0
        %1148 = vmatpush.bf16.xpose.msra.mxu0 %v1139
        %1149 = vmatmul.bf16.gmra.mxu0 %v1136
        %v1150 = vpop.f32.mrf.mxu0
        %v1151 = vadd.f32 0.0, %v1150
        %v1152 = vpop.f32.mrf.mxu0
        %1153 = vdwg.mxu0
        %v1155 = vsel %vm1134, %v1131, 0
        %v1158 = vsel %vm1134, %v1133, 0
        %1160 = vmatpush.bf16.xpose.msra.mxu0 0
        %1161 = vmatpush.bf16.xpose.msra.mxu0 0
        %1162 = vmatpush.bf16.xpose.msra.mxu0 0
        %1163 = vmatpush.bf16.xpose.msra.mxu0 0
        %1164 = vmatpush.bf16.xpose.msra.mxu0 0
        %1165 = vmatpush.bf16.xpose.msra.mxu0 0
        %1166 = vmatpush.bf16.xpose.msra.mxu0 0
        %1167 = vmatpush.bf16.xpose.msra.mxu0 %v1158
        %1168 = vmatmul.bf16.gmra.mxu0 %v1155
        %v1169 = vpop.f32.mrf.mxu0
        %v1170 = vadd.f32 0.0, %v1169
        %v1171 = vpop.f32.mrf.mxu0
        %1172 = vdwg.mxu0
        %v1173 = vpack.c.bf16 %v1031, %v1029
        %v1174 = vpack.c.bf16 %v1098, %v1098
        %v1176 = vsel %vm1134, %v1173, 0
        %v1179 = vsel %vm1134, %v1174, 0
        %1181 = vmatpush.bf16.xpose.msra.mxu0 0
        %1182 = vmatpush.bf16.xpose.msra.mxu0 0
        %1183 = vmatpush.bf16.xpose.msra.mxu0 0
        %1184 = vmatpush.bf16.xpose.msra.mxu0 0
        %1185 = vmatpush.bf16.xpose.msra.mxu0 0
        %1186 = vmatpush.bf16.xpose.msra.mxu0 0
        %1187 = vmatpush.bf16.xpose.msra.mxu0 0
        %1188 = vmatpush.bf16.xpose.msra.mxu0 %v1179
        %1189 = vmatmul.bf16.gmra.mxu0 %v1176
        %v1190 = vpop.f32.mrf.mxu0
        %v1191 = vadd.f32 0.0, %v1190
        %v1192 = vpop.f32.mrf.mxu0
        %v1193 = vadd.f32 0.0, %v1192
        %1194 = vdwg.mxu0
        %vm1195 = vcmask 64512
        %v1196 = vsel %vm1195, %v1151, -inf
        %1197 = vmax.xlane.f32.xlu0 %v1196
        %v1198 = vpop.xlane.xlu0 %1197
        %v1199 = vsel %vm1195, %v1170, -inf
        %1200 = vmax.xlane.f32.xlu0 %v1199
        %v1201 = vpop.xlane.xlu0 %1200
        %vm1202 = vcmask 15360
        %v1203 = vsel %vm1202, %v1191, -inf
        %1204 = vmax.xlane.f32.xlu0 %v1203
        %v1205 = vpop.xlane.xlu0 %1204
        %v1206 = vsel %vm1202, %v1193, -inf
        %1207 = vmax.xlane.f32.xlu0 %v1206
        %v1208 = vpop.xlane.xlu0 %1207
        %v1209 = vmax.f32 %v1198, %v1205
        %v1210 = vmax.f32 %v1201, %v1208
        %v1211 = vsub.f32 %v1151, %v1209
        %v1212 = vsub.f32 %v1170, %v1210
        %v1213 = vmul.f32 %v1211, 1.442695
        %v1214 = vpow.pop %v1213
        %v1215 = vmul.f32 %v1212, 1.442695
        %v1216 = vpow.pop %v1215
        %v1217 = vsub.f32 %v1191, %v1209
        %v1218 = vsub.f32 %v1193, %v1210
        %v1219 = vmul.f32 %v1217, 1.442695
        %v1220 = vpow.pop %v1219
        %v1221 = vmul.f32 %v1218, 1.442695
        %v1222 = vpow.pop %v1221
        %v1223 = vsel %vm1195, %v1214, 0.0
        %1224 = vadd.xlane.f32.xlu0 %v1223
        %v1225 = vpop.xlane.xlu0 %1224
        %v1226 = vsel %vm1195, %v1216, 0.0
        %1227 = vadd.xlane.f32.xlu0 %v1226
        %v1228 = vpop.xlane.xlu0 %1227
        %v1229 = vsel %vm1202, %v1220, 0.0
        %1230 = vadd.xlane.f32.xlu0 %v1229
        %v1231 = vpop.xlane.xlu0 %1230
        %v1232 = vsel %vm1202, %v1222, 0.0
        %1233 = vadd.xlane.f32.xlu0 %v1232
        %v1234 = vpop.xlane.xlu0 %1233
        %v1235 = vadd.f32 %v1225, %v1231
        %v1236 = vadd.f32 %v1228, %v1234
        %v1237 = vpack.c.bf16 %v1214, %v1214
        %v1238 = vpack.c.bf16 %v1216, %v1216
        %v1239 = vpack.c.bf16 %v1057, %v1057
        %v1240 = vpack.c.bf16 %v1059, %v1059
        %v1241 = vpack.c.bf16 %v1222, %v1220
        %v1242 = vpack.c.bf16 %v1111, %v1111
        %v1244 = vsel %vm1202, %v1241, 0
        %vm1246 = vcmask 1040384
        %v1248 = vsel %vm1246, %v1242, 0
        %1250 = vmatpush.bf16.msra.mxu0 0
        %1251 = vmatpush.bf16.msra.mxu0 0
        %1252 = vmatpush.bf16.msra.mxu0 0
        %1253 = vmatpush.bf16.msra.mxu0 0
        %1254 = vmatpush.bf16.msra.mxu0 0
        %1255 = vmatpush.bf16.msra.mxu0 0
        %1256 = vmatpush.bf16.msra.mxu0 0
        %1257 = vmatpush.bf16.msra.mxu0 %v1248
        %1258 = vmatmul.bf16.gmra.mxu0 %v1244
        %v1259 = vpop.f32.mrf.mxu0
        %v1260 = vadd.f32 0.0, %v1259
        %v1261 = vpop.f32.mrf.mxu0
        %v1262 = vadd.f32 0.0, %v1261
        %1263 = vdwg.mxu0
        %v1265 = vsel %vm1195, %v1237, 0
        %vm1267 = vcmask 1043456
        %v1269 = vsel %vm1267, %v1239, 0
        %1271 = vmatpush.bf16.msra.mxu0 0
        %1272 = vmatpush.bf16.msra.mxu0 0
        %1273 = vmatpush.bf16.msra.mxu0 0
        %1274 = vmatpush.bf16.msra.mxu0 0
        %1275 = vmatpush.bf16.msra.mxu0 0
        %1276 = vmatpush.bf16.msra.mxu0 0
        %1277 = vmatpush.bf16.msra.mxu0 0
        %1278 = vmatpush.bf16.msra.mxu0 %v1269
        %1279 = vmatmul.bf16.gmra.mxu0 %v1265
        %v1280 = vpop.f32.mrf.mxu0
        %v1281 = vadd.f32 %v1260, %v1280
        %v1282 = vpop.f32.mrf.mxu0
        %1283 = vdwg.mxu0
        %v1285 = vsel %vm1195, %v1238, 0
        %v1288 = vsel %vm1267, %v1240, 0
        %1290 = vmatpush.bf16.msra.mxu0 0
        %1291 = vmatpush.bf16.msra.mxu0 0
        %1292 = vmatpush.bf16.msra.mxu0 0
        %1293 = vmatpush.bf16.msra.mxu0 0
        %1294 = vmatpush.bf16.msra.mxu0 0
        %1295 = vmatpush.bf16.msra.mxu0 0
        %1296 = vmatpush.bf16.msra.mxu0 0
        %1297 = vmatpush.bf16.msra.mxu0 %v1288
        %1298 = vmatmul.bf16.gmra.mxu0 %v1285
        %v1299 = vpop.f32.mrf.mxu0
        %v1300 = vadd.f32 %v1262, %v1299
        %v1301 = vpop.f32.mrf.mxu0
        %1302 = vdwg.mxu0
        %v1303 = vrcp.pop %v1235
        %v1304 = vrcp.pop %v1236
        %v1305 = vmul.f32 %v1281, %v1303
        %v1306 = vmul.f32 %v1300, %v1304
        %v1307 = vpack.c.bf16 %v1306, %v1305
        %v1309 = vunpack.c.l.b16 %v1130
        %v1310 = vpack.c.b16 %v1309, %v1309
        %1311 = vrot.lane.b32.xlu0 %v1310, 96
        %v1312 = vpop.permute.xlu0 %1311
        %v1314 = vunpack.c.l.b16 %v1132
        %v1315 = vpack.c.b16 %v1314, %v1314
        %1316 = vrot.lane.b32.xlu0 %v1315, 96
        %v1317 = vpop.permute.xlu0 %1316
        %v1319 = vsel %vm1134, %v1312, 0
        %v1322 = vsel %vm1134, %v1317, 0
        %1324 = vmatpush.bf16.xpose.msra.mxu0 0
        %1325 = vmatpush.bf16.xpose.msra.mxu0 0
        %1326 = vmatpush.bf16.xpose.msra.mxu0 0
        %1327 = vmatpush.bf16.xpose.msra.mxu0 0
        %1328 = vmatpush.bf16.xpose.msra.mxu0 0
        %1329 = vmatpush.bf16.xpose.msra.mxu0 0
        %1330 = vmatpush.bf16.xpose.msra.mxu0 0
        %1331 = vmatpush.bf16.xpose.msra.mxu0 %v1322
        %1332 = vmatmul.bf16.gmra.mxu0 %v1319
        %v1333 = vpop.f32.mrf.mxu0
        %v1334 = vadd.f32 0.0, %v1333
        %v1335 = vpop.f32.mrf.mxu0
        %1336 = vdwg.mxu0
        %v1338 = vunpack.c.l.b16 %v1131
        %v1339 = vpack.c.b16 %v1338, %v1338
        %1340 = vrot.lane.b32.xlu0 %v1339, 96
        %v1341 = vpop.permute.xlu0 %1340
        %v1343 = vunpack.c.l.b16 %v1133
        %v1344 = vpack.c.b16 %v1343, %v1343
        %1345 = vrot.lane.b32.xlu0 %v1344, 96
        %v1346 = vpop.permute.xlu0 %1345
        %v1348 = vsel %vm1134, %v1341, 0
        %v1351 = vsel %vm1134, %v1346, 0
        %1353 = vmatpush.bf16.xpose.msra.mxu0 0
        %1354 = vmatpush.bf16.xpose.msra.mxu0 0
        %1355 = vmatpush.bf16.xpose.msra.mxu0 0
        %1356 = vmatpush.bf16.xpose.msra.mxu0 0
        %1357 = vmatpush.bf16.xpose.msra.mxu0 0
        %1358 = vmatpush.bf16.xpose.msra.mxu0 0
        %1359 = vmatpush.bf16.xpose.msra.mxu0 0
        %1360 = vmatpush.bf16.xpose.msra.mxu0 %v1351
        %1361 = vmatmul.bf16.gmra.mxu0 %v1348
        %v1362 = vpop.f32.mrf.mxu0
        %v1363 = vadd.f32 0.0, %v1362
        %v1364 = vpop.f32.mrf.mxu0
        %1365 = vdwg.mxu0
        %1367 = vrot.lane.b32.xlu0 %v1173, 96
        %v1368 = vpop.permute.xlu0 %1367
        %1370 = vrot.lane.b32.xlu0 %v1174, 96
        %v1371 = vpop.permute.xlu0 %1370
        %v1373 = vsel %vm1134, %v1368, 0
        %v1376 = vsel %vm1134, %v1371, 0
        %1378 = vmatpush.bf16.xpose.msra.mxu0 0
        %1379 = vmatpush.bf16.xpose.msra.mxu0 0
        %1380 = vmatpush.bf16.xpose.msra.mxu0 0
        %1381 = vmatpush.bf16.xpose.msra.mxu0 0
        %1382 = vmatpush.bf16.xpose.msra.mxu0 0
        %1383 = vmatpush.bf16.xpose.msra.mxu0 0
        %1384 = vmatpush.bf16.xpose.msra.mxu0 0
        %1385 = vmatpush.bf16.xpose.msra.mxu0 %v1376
        %1386 = vmatmul.bf16.gmra.mxu0 %v1373
        %v1387 = vpop.f32.mrf.mxu0
        %v1388 = vadd.f32 0.0, %v1387
        %v1389 = vpop.f32.mrf.mxu0
        %v1390 = vadd.f32 0.0, %v1389
        %1391 = vdwg.mxu0
        %v1392 = vsel %vm1195, %v1334, -inf
        %1393 = vmax.xlane.f32.xlu0 %v1392
        %v1394 = vpop.xlane.xlu0 %1393
        %v1395 = vsel %vm1195, %v1363, -inf
        %1396 = vmax.xlane.f32.xlu0 %v1395
        %v1397 = vpop.xlane.xlu0 %1396
        %v1398 = vsel %vm1202, %v1388, -inf
        %1399 = vmax.xlane.f32.xlu0 %v1398
        %v1400 = vpop.xlane.xlu0 %1399
        %v1401 = vsel %vm1202, %v1390, -inf
        %1402 = vmax.xlane.f32.xlu0 %v1401
        %v1403 = vpop.xlane.xlu0 %1402
        %v1404 = vmax.f32 %v1394, %v1400
        %v1405 = vmax.f32 %v1397, %v1403
        %v1406 = vsub.f32 %v1334, %v1404
        %v1407 = vsub.f32 %v1363, %v1405
        %v1408 = vmul.f32 %v1406, 1.442695
        %v1409 = vpow.pop %v1408
        %v1410 = vmul.f32 %v1407, 1.442695
        %v1411 = vpow.pop %v1410
        %v1412 = vsub.f32 %v1388, %v1404
        %v1413 = vsub.f32 %v1390, %v1405
        %v1414 = vmul.f32 %v1412, 1.442695
        %v1415 = vpow.pop %v1414
        %v1416 = vmul.f32 %v1413, 1.442695
        %v1417 = vpow.pop %v1416
        %v1418 = vsel %vm1195, %v1409, 0.0
        %1419 = vadd.xlane.f32.xlu0 %v1418
        %v1420 = vpop.xlane.xlu0 %1419
        %v1421 = vsel %vm1195, %v1411, 0.0
        %1422 = vadd.xlane.f32.xlu0 %v1421
        %v1423 = vpop.xlane.xlu0 %1422
        %v1424 = vsel %vm1202, %v1415, 0.0
        %1425 = vadd.xlane.f32.xlu0 %v1424
        %v1426 = vpop.xlane.xlu0 %1425
        %v1427 = vsel %vm1202, %v1417, 0.0
        %1428 = vadd.xlane.f32.xlu0 %v1427
        %v1429 = vpop.xlane.xlu0 %1428
        %v1430 = vadd.f32 %v1420, %v1426
        %v1431 = vadd.f32 %v1423, %v1429
        %v1432 = vpack.c.bf16 %v1409, %v1409
        %v1433 = vpack.c.bf16 %v1411, %v1411
        %v1434 = vpack.c.bf16 %v1417, %v1415
        %1436 = vrot.lane.b32.xlu0 %v1242, 96
        %v1437 = vpop.permute.xlu0 %1436
        %v1439 = vsel %vm1202, %v1434, 0
        %v1442 = vsel %vm1246, %v1437, 0
        %1444 = vmatpush.bf16.msra.mxu0 0
        %1445 = vmatpush.bf16.msra.mxu0 0
        %1446 = vmatpush.bf16.msra.mxu0 0
        %1447 = vmatpush.bf16.msra.mxu0 0
        %1448 = vmatpush.bf16.msra.mxu0 0
        %1449 = vmatpush.bf16.msra.mxu0 0
        %1450 = vmatpush.bf16.msra.mxu0 0
        %1451 = vmatpush.bf16.msra.mxu0 %v1442
        %1452 = vmatmul.bf16.gmra.mxu0 %v1439
        %v1453 = vpop.f32.mrf.mxu0
        %v1454 = vadd.f32 0.0, %v1453
        %v1455 = vpop.f32.mrf.mxu0
        %v1456 = vadd.f32 0.0, %v1455
        %1457 = vdwg.mxu0
        %v1459 = vunpack.c.l.b16 %v1239
        %v1460 = vpack.c.b16 %v1459, %v1459
        %1461 = vrot.lane.b32.xlu0 %v1460, 96
        %v1462 = vpop.permute.xlu0 %1461
        %v1464 = vsel %vm1195, %v1432, 0
        %v1467 = vsel %vm1267, %v1462, 0
        %1469 = vmatpush.bf16.msra.mxu0 0
        %1470 = vmatpush.bf16.msra.mxu0 0
        %1471 = vmatpush.bf16.msra.mxu0 0
        %1472 = vmatpush.bf16.msra.mxu0 0
        %1473 = vmatpush.bf16.msra.mxu0 0
        %1474 = vmatpush.bf16.msra.mxu0 0
        %1475 = vmatpush.bf16.msra.mxu0 0
        %1476 = vmatpush.bf16.msra.mxu0 %v1467
        %1477 = vmatmul.bf16.gmra.mxu0 %v1464
        %v1478 = vpop.f32.mrf.mxu0
        %v1479 = vadd.f32 %v1454, %v1478
        %v1480 = vpop.f32.mrf.mxu0
        %1481 = vdwg.mxu0
        %v1483 = vunpack.c.l.b16 %v1240
        %v1484 = vpack.c.b16 %v1483, %v1483
        %1485 = vrot.lane.b32.xlu0 %v1484, 96
        %v1486 = vpop.permute.xlu0 %1485
        %v1488 = vsel %vm1195, %v1433, 0
        %v1491 = vsel %vm1267, %v1486, 0
        %1493 = vmatpush.bf16.msra.mxu0 0
        %1494 = vmatpush.bf16.msra.mxu0 0
        %1495 = vmatpush.bf16.msra.mxu0 0
        %1496 = vmatpush.bf16.msra.mxu0 0
        %1497 = vmatpush.bf16.msra.mxu0 0
        %1498 = vmatpush.bf16.msra.mxu0 0
        %1499 = vmatpush.bf16.msra.mxu0 0
        %1500 = vmatpush.bf16.msra.mxu0 %v1491
        %1501 = vmatmul.bf16.gmra.mxu0 %v1488
        %v1502 = vpop.f32.mrf.mxu0
        %v1503 = vadd.f32 %v1456, %v1502
        %v1504 = vpop.f32.mrf.mxu0
        %1505 = vdwg.mxu0
        %v1506 = vrcp.pop %v1430
        %v1507 = vrcp.pop %v1431
        %v1508 = vmul.f32 %v1479, %v1506
        %v1509 = vmul.f32 %v1503, %v1507
        %v1510 = vpack.c.bf16 %v1509, %v1508
        %v1515 = vunpack.c.l.b16 %v1118
        %v1516 = vunpack.c.l.b16 %v1119
        %v1517 = vunpack.c.l.b16 %v1120
        %v1518 = vunpack.c.l.b16 %v1121
        %v1519 = vpack.c.b16 %v1516, %v1515
        %v1520 = vpack.c.b16 %v1518, %v1517
        %v1524 = vsel %vm1134, %v1510, 0
        %1526 = vmatpush.bf16.msra.mxu0 0
        %1527 = vmatpush.bf16.msra.mxu0 0
        %1528 = vmatpush.bf16.msra.mxu0 0
        %1529 = vmatpush.bf16.msra.mxu0 0
        %1530 = vmatpush.bf16.msra.mxu0 0
        %1531 = vmatpush.bf16.msra.mxu0 0
        %1532 = vmatpush.bf16.msra.mxu0 %v1520
        %1533 = vmatpush.bf16.msra.mxu0 %v1519
        %1534 = vmatmul.bf16.gmra.mxu0 %v1524
        %v1535 = vpop.f32.mrf.mxu0
        %v1536 = vadd.f32 0.0, %v1535
        %v1537 = vpop.f32.mrf.mxu0
        %v1538 = vadd.f32 0.0, %v1537
        %1539 = vdwg.mxu0
        %v1544 = vunpack.c.l.b16 %v1114
        %v1545 = vunpack.c.l.b16 %v1115
        %v1546 = vunpack.c.l.b16 %v1116
        %v1547 = vunpack.c.l.b16 %v1117
        %v1548 = vpack.c.b16 %v1545, %v1544
        %v1549 = vpack.c.b16 %v1547, %v1546
        %v1553 = vsel %vm1134, %v1307, 0
        %1555 = vmatpush.bf16.msra.mxu0 0
        %1556 = vmatpush.bf16.msra.mxu0 0
        %1557 = vmatpush.bf16.msra.mxu0 0
        %1558 = vmatpush.bf16.msra.mxu0 0
        %1559 = vmatpush.bf16.msra.mxu0 0
        %1560 = vmatpush.bf16.msra.mxu0 0
        %1561 = vmatpush.bf16.msra.mxu0 %v1549
        %1562 = vmatpush.bf16.msra.mxu0 %v1548
        %1563 = vmatmul.bf16.gmra.mxu0 %v1553
        %v1564 = vpop.f32.mrf.mxu0
        %v1565 = vadd.f32 %v1536, %v1564
        %v1566 = vpop.f32.mrf.mxu0
        %v1567 = vadd.f32 %v1538, %v1566
        %1568 = vdwg.mxu0
        %1569 = vrot.lane.b32.xlu0 %v1310, 64
        %v1570 = vpop.permute.xlu0 %1569
        %1571 = vrot.lane.b32.xlu0 %v1315, 64
        %v1572 = vpop.permute.xlu0 %1571
        %v1574 = vsel %vm1134, %v1570, 0
        %v1577 = vsel %vm1134, %v1572, 0
        %1579 = vmatpush.bf16.xpose.msra.mxu0 0
        %1580 = vmatpush.bf16.xpose.msra.mxu0 0
        %1581 = vmatpush.bf16.xpose.msra.mxu0 0
        %1582 = vmatpush.bf16.xpose.msra.mxu0 0
        %1583 = vmatpush.bf16.xpose.msra.mxu0 0
        %1584 = vmatpush.bf16.xpose.msra.mxu0 0
        %1585 = vmatpush.bf16.xpose.msra.mxu0 0
        %1586 = vmatpush.bf16.xpose.msra.mxu0 %v1577
        %1587 = vmatmul.bf16.gmra.mxu0 %v1574
        %v1588 = vpop.f32.mrf.mxu0
        %v1589 = vadd.f32 0.0, %v1588
        %v1590 = vpop.f32.mrf.mxu0
        %1591 = vdwg.mxu0
        %1592 = vrot.lane.b32.xlu0 %v1339, 64
        %v1593 = vpop.permute.xlu0 %1592
        %1594 = vrot.lane.b32.xlu0 %v1344, 64
        %v1595 = vpop.permute.xlu0 %1594
        %v1597 = vsel %vm1134, %v1593, 0
        %v1600 = vsel %vm1134, %v1595, 0
        %1602 = vmatpush.bf16.xpose.msra.mxu0 0
        %1603 = vmatpush.bf16.xpose.msra.mxu0 0
        %1604 = vmatpush.bf16.xpose.msra.mxu0 0
        %1605 = vmatpush.bf16.xpose.msra.mxu0 0
        %1606 = vmatpush.bf16.xpose.msra.mxu0 0
        %1607 = vmatpush.bf16.xpose.msra.mxu0 0
        %1608 = vmatpush.bf16.xpose.msra.mxu0 0
        %1609 = vmatpush.bf16.xpose.msra.mxu0 %v1600
        %1610 = vmatmul.bf16.gmra.mxu0 %v1597
        %v1611 = vpop.f32.mrf.mxu0
        %v1612 = vadd.f32 0.0, %v1611
        %v1613 = vpop.f32.mrf.mxu0
        %1614 = vdwg.mxu0
        %1615 = vrot.lane.b32.xlu0 %v1173, 64
        %v1616 = vpop.permute.xlu0 %1615
        %1617 = vrot.lane.b32.xlu0 %v1174, 64
        %v1618 = vpop.permute.xlu0 %1617
        %v1620 = vsel %vm1134, %v1616, 0
        %v1623 = vsel %vm1134, %v1618, 0
        %1625 = vmatpush.bf16.xpose.msra.mxu0 0
        %1626 = vmatpush.bf16.xpose.msra.mxu0 0
        %1627 = vmatpush.bf16.xpose.msra.mxu0 0
        %1628 = vmatpush.bf16.xpose.msra.mxu0 0
        %1629 = vmatpush.bf16.xpose.msra.mxu0 0
        %1630 = vmatpush.bf16.xpose.msra.mxu0 0
        %1631 = vmatpush.bf16.xpose.msra.mxu0 0
        %1632 = vmatpush.bf16.xpose.msra.mxu0 %v1623
        %1633 = vmatmul.bf16.gmra.mxu0 %v1620
        %v1634 = vpop.f32.mrf.mxu0
        %v1635 = vadd.f32 0.0, %v1634
        %v1636 = vpop.f32.mrf.mxu0
        %v1637 = vadd.f32 0.0, %v1636
        %1638 = vdwg.mxu0
        %v1639 = vsel %vm1195, %v1589, -inf
        %1640 = vmax.xlane.f32.xlu0 %v1639
        %v1641 = vpop.xlane.xlu0 %1640
        %v1642 = vsel %vm1195, %v1612, -inf
        %1643 = vmax.xlane.f32.xlu0 %v1642
        %v1644 = vpop.xlane.xlu0 %1643
        %v1645 = vsel %vm1202, %v1635, -inf
        %1646 = vmax.xlane.f32.xlu0 %v1645
        %v1647 = vpop.xlane.xlu0 %1646
        %v1648 = vsel %vm1202, %v1637, -inf
        %1649 = vmax.xlane.f32.xlu0 %v1648
        %v1650 = vpop.xlane.xlu0 %1649
        %v1651 = vmax.f32 %v1641, %v1647
        %v1652 = vmax.f32 %v1644, %v1650
        %v1653 = vsub.f32 %v1589, %v1651
        %v1654 = vsub.f32 %v1612, %v1652
        %v1655 = vmul.f32 %v1653, 1.442695
        %v1656 = vpow.pop %v1655
        %v1657 = vmul.f32 %v1654, 1.442695
        %v1658 = vpow.pop %v1657
        %v1659 = vsub.f32 %v1635, %v1651
        %v1660 = vsub.f32 %v1637, %v1652
        %v1661 = vmul.f32 %v1659, 1.442695
        %v1662 = vpow.pop %v1661
        %v1663 = vmul.f32 %v1660, 1.442695
        %v1664 = vpow.pop %v1663
        %v1665 = vsel %vm1195, %v1656, 0.0
        %1666 = vadd.xlane.f32.xlu0 %v1665
        %v1667 = vpop.xlane.xlu0 %1666
        %v1668 = vsel %vm1195, %v1658, 0.0
        %1669 = vadd.xlane.f32.xlu0 %v1668
        %v1670 = vpop.xlane.xlu0 %1669
        %v1671 = vsel %vm1202, %v1662, 0.0
        %1672 = vadd.xlane.f32.xlu0 %v1671
        %v1673 = vpop.xlane.xlu0 %1672
        %v1674 = vsel %vm1202, %v1664, 0.0
        %1675 = vadd.xlane.f32.xlu0 %v1674
        %v1676 = vpop.xlane.xlu0 %1675
        %v1677 = vadd.f32 %v1667, %v1673
        %v1678 = vadd.f32 %v1670, %v1676
        %v1679 = vpack.c.bf16 %v1656, %v1656
        %v1680 = vpack.c.bf16 %v1658, %v1658
        %v1681 = vpack.c.bf16 %v1664, %v1662
        %1682 = vrot.lane.b32.xlu0 %v1242, 64
        %v1683 = vpop.permute.xlu0 %1682
        %v1685 = vsel %vm1202, %v1681, 0
        %v1688 = vsel %vm1246, %v1683, 0
        %1690 = vmatpush.bf16.msra.mxu0 0
        %1691 = vmatpush.bf16.msra.mxu0 0
        %1692 = vmatpush.bf16.msra.mxu0 0
        %1693 = vmatpush.bf16.msra.mxu0 0
        %1694 = vmatpush.bf16.msra.mxu0 0
        %1695 = vmatpush.bf16.msra.mxu0 0
        %1696 = vmatpush.bf16.msra.mxu0 0
        %1697 = vmatpush.bf16.msra.mxu0 %v1688
        %1698 = vmatmul.bf16.gmra.mxu0 %v1685
        %v1699 = vpop.f32.mrf.mxu0
        %v1700 = vadd.f32 0.0, %v1699
        %v1701 = vpop.f32.mrf.mxu0
        %v1702 = vadd.f32 0.0, %v1701
        %1703 = vdwg.mxu0
        %1704 = vrot.lane.b32.xlu0 %v1460, 64
        %v1705 = vpop.permute.xlu0 %1704
        %v1707 = vsel %vm1195, %v1679, 0
        %v1710 = vsel %vm1267, %v1705, 0
        %1712 = vmatpush.bf16.msra.mxu0 0
        %1713 = vmatpush.bf16.msra.mxu0 0
        %1714 = vmatpush.bf16.msra.mxu0 0
        %1715 = vmatpush.bf16.msra.mxu0 0
        %1716 = vmatpush.bf16.msra.mxu0 0
        %1717 = vmatpush.bf16.msra.mxu0 0
        %1718 = vmatpush.bf16.msra.mxu0 0
        %1719 = vmatpush.bf16.msra.mxu0 %v1710
        %1720 = vmatmul.bf16.gmra.mxu0 %v1707
        %v1721 = vpop.f32.mrf.mxu0
        %v1722 = vadd.f32 %v1700, %v1721
        %v1723 = vpop.f32.mrf.mxu0
        %1724 = vdwg.mxu0
        %1725 = vrot.lane.b32.xlu0 %v1484, 64
        %v1726 = vpop.permute.xlu0 %1725
        %v1728 = vsel %vm1195, %v1680, 0
        %v1731 = vsel %vm1267, %v1726, 0
        %1733 = vmatpush.bf16.msra.mxu0 0
        %1734 = vmatpush.bf16.msra.mxu0 0
        %1735 = vmatpush.bf16.msra.mxu0 0
        %1736 = vmatpush.bf16.msra.mxu0 0
        %1737 = vmatpush.bf16.msra.mxu0 0
        %1738 = vmatpush.bf16.msra.mxu0 0
        %1739 = vmatpush.bf16.msra.mxu0 0
        %1740 = vmatpush.bf16.msra.mxu0 %v1731
        %1741 = vmatmul.bf16.gmra.mxu0 %v1728
        %v1742 = vpop.f32.mrf.mxu0
        %v1743 = vadd.f32 %v1702, %v1742
        %v1744 = vpop.f32.mrf.mxu0
        %1745 = vdwg.mxu0
        %v1746 = vrcp.pop %v1677
        %v1747 = vrcp.pop %v1678
        %v1748 = vmul.f32 %v1722, %v1746
        %v1749 = vmul.f32 %v1743, %v1747
        %v1750 = vpack.c.bf16 %v1749, %v1748
        %v1755 = vunpack.c.l.b16 %v1122
        %v1756 = vunpack.c.l.b16 %v1123
        %v1757 = vunpack.c.l.b16 %v1124
        %v1758 = vunpack.c.l.b16 %v1125
        %v1759 = vpack.c.b16 %v1756, %v1755
        %v1760 = vpack.c.b16 %v1758, %v1757
        %v1764 = vsel %vm1134, %v1750, 0
        %1766 = vmatpush.bf16.msra.mxu0 0
        %1767 = vmatpush.bf16.msra.mxu0 0
        %1768 = vmatpush.bf16.msra.mxu0 0
        %1769 = vmatpush.bf16.msra.mxu0 0
        %1770 = vmatpush.bf16.msra.mxu0 0
        %1771 = vmatpush.bf16.msra.mxu0 0
        %1772 = vmatpush.bf16.msra.mxu0 %v1760
        %1773 = vmatpush.bf16.msra.mxu0 %v1759
        %1774 = vmatmul.bf16.gmra.mxu0 %v1764
        %v1775 = vpop.f32.mrf.mxu0
        %v1776 = vadd.f32 0.0, %v1775
        %v1777 = vpop.f32.mrf.mxu0
        %v1778 = vadd.f32 0.0, %v1777
        %1779 = vdwg.mxu0
        %v1780 = vadd.f32 %v1565, %v1776
        %v1781 = vadd.f32 %v1567, %v1778
        %1782 = vrot.lane.b32.xlu0 %v1310, 32
        %v1783 = vpop.permute.xlu0 %1782
        %1784 = vrot.lane.b32.xlu0 %v1315, 32
        %v1785 = vpop.permute.xlu0 %1784
        %v1787 = vsel %vm1134, %v1783, 0
        %v1790 = vsel %vm1134, %v1785, 0
        %1792 = vmatpush.bf16.xpose.msra.mxu0 0
        %1793 = vmatpush.bf16.xpose.msra.mxu0 0
        %1794 = vmatpush.bf16.xpose.msra.mxu0 0
        %1795 = vmatpush.bf16.xpose.msra.mxu0 0
        %1796 = vmatpush.bf16.xpose.msra.mxu0 0
        %1797 = vmatpush.bf16.xpose.msra.mxu0 0
        %1798 = vmatpush.bf16.xpose.msra.mxu0 0
        %1799 = vmatpush.bf16.xpose.msra.mxu0 %v1790
        %1800 = vmatmul.bf16.gmra.mxu0 %v1787
        %v1801 = vpop.f32.mrf.mxu0
        %v1802 = vadd.f32 0.0, %v1801
        %v1803 = vpop.f32.mrf.mxu0
        %1804 = vdwg.mxu0
        %1805 = vrot.lane.b32.xlu0 %v1339, 32
        %v1806 = vpop.permute.xlu0 %1805
        %1807 = vrot.lane.b32.xlu0 %v1344, 32
        %v1808 = vpop.permute.xlu0 %1807
        %v1810 = vsel %vm1134, %v1806, 0
        %v1813 = vsel %vm1134, %v1808, 0
        %1815 = vmatpush.bf16.xpose.msra.mxu0 0
        %1816 = vmatpush.bf16.xpose.msra.mxu0 0
        %1817 = vmatpush.bf16.xpose.msra.mxu0 0
        %1818 = vmatpush.bf16.xpose.msra.mxu0 0
        %1819 = vmatpush.bf16.xpose.msra.mxu0 0
        %1820 = vmatpush.bf16.xpose.msra.mxu0 0
        %1821 = vmatpush.bf16.xpose.msra.mxu0 0
        %1822 = vmatpush.bf16.xpose.msra.mxu0 %v1813
        %1823 = vmatmul.bf16.gmra.mxu0 %v1810
        %v1824 = vpop.f32.mrf.mxu0
        %v1825 = vadd.f32 0.0, %v1824
        %v1826 = vpop.f32.mrf.mxu0
        %1827 = vdwg.mxu0
        %1828 = vrot.lane.b32.xlu0 %v1173, 32
        %v1829 = vpop.permute.xlu0 %1828
        %1830 = vrot.lane.b32.xlu0 %v1174, 32
        %v1831 = vpop.permute.xlu0 %1830
        %v1833 = vsel %vm1134, %v1829, 0
        %v1836 = vsel %vm1134, %v1831, 0
        %1838 = vmatpush.bf16.xpose.msra.mxu0 0
        %1839 = vmatpush.bf16.xpose.msra.mxu0 0
        %1840 = vmatpush.bf16.xpose.msra.mxu0 0
        %1841 = vmatpush.bf16.xpose.msra.mxu0 0
        %1842 = vmatpush.bf16.xpose.msra.mxu0 0
        %1843 = vmatpush.bf16.xpose.msra.mxu0 0
        %1844 = vmatpush.bf16.xpose.msra.mxu0 0
        %1845 = vmatpush.bf16.xpose.msra.mxu0 %v1836
        %1846 = vmatmul.bf16.gmra.mxu0 %v1833
        %v1847 = vpop.f32.mrf.mxu0
        %v1848 = vadd.f32 0.0, %v1847
        %v1849 = vpop.f32.mrf.mxu0
        %v1850 = vadd.f32 0.0, %v1849
        %1851 = vdwg.mxu0
        %v1852 = vsel %vm1195, %v1802, -inf
        %1853 = vmax.xlane.f32.xlu0 %v1852
        %v1854 = vpop.xlane.xlu0 %1853
        %v1855 = vsel %vm1195, %v1825, -inf
        %1856 = vmax.xlane.f32.xlu0 %v1855
        %v1857 = vpop.xlane.xlu0 %1856
        %v1858 = vsel %vm1202, %v1848, -inf
        %1859 = vmax.xlane.f32.xlu0 %v1858
        %v1860 = vpop.xlane.xlu0 %1859
        %v1861 = vsel %vm1202, %v1850, -inf
        %1862 = vmax.xlane.f32.xlu0 %v1861
        %v1863 = vpop.xlane.xlu0 %1862
        %v1864 = vmax.f32 %v1854, %v1860
        %v1865 = vmax.f32 %v1857, %v1863
        %v1866 = vsub.f32 %v1802, %v1864
        %v1867 = vsub.f32 %v1825, %v1865
        %v1868 = vmul.f32 %v1866, 1.442695
        %v1869 = vpow.pop %v1868
        %v1870 = vmul.f32 %v1867, 1.442695
        %v1871 = vpow.pop %v1870
        %v1872 = vsub.f32 %v1848, %v1864
        %v1873 = vsub.f32 %v1850, %v1865
        %v1874 = vmul.f32 %v1872, 1.442695
        %v1875 = vpow.pop %v1874
        %v1876 = vmul.f32 %v1873, 1.442695
        %v1877 = vpow.pop %v1876
        %v1878 = vsel %vm1195, %v1869, 0.0
        %1879 = vadd.xlane.f32.xlu0 %v1878
        %v1880 = vpop.xlane.xlu0 %1879
        %v1881 = vsel %vm1195, %v1871, 0.0
        %1882 = vadd.xlane.f32.xlu0 %v1881
        %v1883 = vpop.xlane.xlu0 %1882
        %v1884 = vsel %vm1202, %v1875, 0.0
        %1885 = vadd.xlane.f32.xlu0 %v1884
        %v1886 = vpop.xlane.xlu0 %1885
        %v1887 = vsel %vm1202, %v1877, 0.0
        %1888 = vadd.xlane.f32.xlu0 %v1887
        %v1889 = vpop.xlane.xlu0 %1888
        %v1890 = vadd.f32 %v1880, %v1886
        %v1891 = vadd.f32 %v1883, %v1889
        %v1892 = vpack.c.bf16 %v1869, %v1869
        %v1893 = vpack.c.bf16 %v1871, %v1871
        %v1894 = vpack.c.bf16 %v1877, %v1875
        %1895 = vrot.lane.b32.xlu0 %v1242, 32
        %v1896 = vpop.permute.xlu0 %1895
        %v1898 = vsel %vm1202, %v1894, 0
        %v1901 = vsel %vm1246, %v1896, 0
        %1903 = vmatpush.bf16.msra.mxu0 0
        %1904 = vmatpush.bf16.msra.mxu0 0
        %1905 = vmatpush.bf16.msra.mxu0 0
        %1906 = vmatpush.bf16.msra.mxu0 0
        %1907 = vmatpush.bf16.msra.mxu0 0
        %1908 = vmatpush.bf16.msra.mxu0 0
        %1909 = vmatpush.bf16.msra.mxu0 0
        %1910 = vmatpush.bf16.msra.mxu0 %v1901
        %1911 = vmatmul.bf16.gmra.mxu0 %v1898
        %v1912 = vpop.f32.mrf.mxu0
        %v1913 = vadd.f32 0.0, %v1912
        %v1914 = vpop.f32.mrf.mxu0
        %v1915 = vadd.f32 0.0, %v1914
        %1916 = vdwg.mxu0
        %1917 = vrot.lane.b32.xlu0 %v1460, 32
        %v1918 = vpop.permute.xlu0 %1917
        %v1920 = vsel %vm1195, %v1892, 0
        %v1923 = vsel %vm1267, %v1918, 0
        %1925 = vmatpush.bf16.msra.mxu0 0
        %1926 = vmatpush.bf16.msra.mxu0 0
        %1927 = vmatpush.bf16.msra.mxu0 0
        %1928 = vmatpush.bf16.msra.mxu0 0
        %1929 = vmatpush.bf16.msra.mxu0 0
        %1930 = vmatpush.bf16.msra.mxu0 0
        %1931 = vmatpush.bf16.msra.mxu0 0
        %1932 = vmatpush.bf16.msra.mxu0 %v1923
        %1933 = vmatmul.bf16.gmra.mxu0 %v1920
        %v1934 = vpop.f32.mrf.mxu0
        %v1935 = vadd.f32 %v1913, %v1934
        %v1936 = vpop.f32.mrf.mxu0
        %1937 = vdwg.mxu0
        %1938 = vrot.lane.b32.xlu0 %v1484, 32
        %v1939 = vpop.permute.xlu0 %1938
        %v1941 = vsel %vm1195, %v1893, 0
        %v1944 = vsel %vm1267, %v1939, 0
        %1946 = vmatpush.bf16.msra.mxu0 0
        %1947 = vmatpush.bf16.msra.mxu0 0
        %1948 = vmatpush.bf16.msra.mxu0 0
        %1949 = vmatpush.bf16.msra.mxu0 0
        %1950 = vmatpush.bf16.msra.mxu0 0
        %1951 = vmatpush.bf16.msra.mxu0 0
        %1952 = vmatpush.bf16.msra.mxu0 0
        %1953 = vmatpush.bf16.msra.mxu0 %v1944
        %1954 = vmatmul.bf16.gmra.mxu0 %v1941
        %v1955 = vpop.f32.mrf.mxu0
        %v1956 = vadd.f32 %v1915, %v1955
        %v1957 = vpop.f32.mrf.mxu0
        %1958 = vdwg.mxu0
        %v1959 = vrcp.pop %v1890
        %v1960 = vrcp.pop %v1891
        %v1961 = vmul.f32 %v1935, %v1959
        %v1962 = vmul.f32 %v1956, %v1960
        %v1963 = vpack.c.bf16 %v1962, %v1961
        %v1968 = vunpack.c.l.b16 %v1126
        %v1969 = vunpack.c.l.b16 %v1127
        %v1970 = vunpack.c.l.b16 %v1128
        %v1971 = vunpack.c.l.b16 %v1129
        %v1972 = vpack.c.b16 %v1969, %v1968
        %v1973 = vpack.c.b16 %v1971, %v1970
        %v1977 = vsel %vm1134, %v1963, 0
        %1979 = vmatpush.bf16.msra.mxu0 0
        %1980 = vmatpush.bf16.msra.mxu0 0
        %1981 = vmatpush.bf16.msra.mxu0 0
        %1982 = vmatpush.bf16.msra.mxu0 0
        %1983 = vmatpush.bf16.msra.mxu0 0
        %1984 = vmatpush.bf16.msra.mxu0 0
        %1985 = vmatpush.bf16.msra.mxu0 %v1973
        %1986 = vmatpush.bf16.msra.mxu0 %v1972
        %1987 = vmatmul.bf16.gmra.mxu0 %v1977
        %v1988 = vpop.f32.mrf.mxu0
        %v1989 = vadd.f32 0.0, %v1988
        %v1990 = vpop.f32.mrf.mxu0
        %v1991 = vadd.f32 0.0, %v1990
        %1992 = vdwg.mxu0
        %v1993 = vadd.f32 %v1780, %v1989
        %v1994 = vadd.f32 %v1781, %v1991
        %v1995 = vld [vmem:[%s752] sm:$0x1]
        %v1997 = vperm.slane %v1995, 0
        %v1999 = vadd.f32 %v1993, %v1997
        %v2000 = vadd.f32 %v1994, %v1997
        %v2001 = vadd.f32 %v789, %v1999
        %v2002 = vadd.f32 %v790, %v2000
        %v2003 = vld [vmem:[%s755] sm:$0x1]
        %v2004 = vld [vmem:[%s758] sm:$0x1]
        %2005 = vadd.xlane.f32.xlu0 %v2001
        %v2006 = vpop.xlane.xlu0 %2005
        %2007 = vadd.xlane.f32.xlu0 %v2002
        %v2008 = vpop.xlane.xlu0 %2007
        %v2009 = vmul.f32 %v2006, %v803
        %v2010 = vmul.f32 %v2008, %v803
        %v2011 = vsub.f32 %v2001, %v2009
        %v2012 = vsub.f32 %v2002, %v2010
        %v2013 = vmul.f32 %v2011, %v2011
        %v2014 = vmul.f32 %v2012, %v2012
        %2015 = vadd.xlane.f32.xlu0 %v2013
        %v2016 = vpop.xlane.xlu0 %2015
        %2017 = vadd.xlane.f32.xlu0 %v2014
        %v2018 = vpop.xlane.xlu0 %2017
        %v2019 = vmul.f32 %v2016, %v803
        %v2020 = vmul.f32 %v2018, %v803
        %v2021 = vadd.f32 %v2019, 1e-06
        %v2022 = vadd.f32 %v2020, 1e-06
        %v2023 = vrsqrt.pop %v2021
        %v2024 = vmul.f32 %v2023, %v2021
        %v2025 = vmul.f32 %v2024, %v2023
        %v2026 = vmul.f32 0.5, %v2025
        %v2027 = vsub.f32 1.5, %v2026
        %v2028 = vmul.f32 %v2023, %v2027
        %vm2029 = vweird.f32 %v2021
        %vm2030 = vweird.f32 %v2023
        %vm2031 = vmor %vm2029, %vm2030
        %v2032 = vsel %vm2031, %v2023, %v2028
        %v2033 = vrsqrt.pop %v2022
        %v2034 = vmul.f32 %v2033, %v2022
        %v2035 = vmul.f32 %v2034, %v2033
        %v2036 = vmul.f32 0.5, %v2035
        %v2037 = vsub.f32 1.5, %v2036
        %v2038 = vmul.f32 %v2033, %v2037
        %vm2039 = vweird.f32 %v2022
        %vm2040 = vweird.f32 %v2033
        %vm2041 = vmor %vm2039, %vm2040
        %v2042 = vsel %vm2041, %v2033, %v2038
        %v2043 = vmul.f32 %v2011, %v2032
        %v2044 = vmul.f32 %v2012, %v2042
        %v2046 = vperm.slane %v2003, 0
        %v2048 = vmul.f32 %v2043, %v2046
        %v2049 = vmul.f32 %v2044, %v2046
        %v2051 = vperm.slane %v2004, 0
        %v2053 = vadd.f32 %v2048, %v2051
        %v2054 = vadd.f32 %v2049, %v2051
        %v2055 = vld [vmem:[%s763] sm:$0xff]
        %v2056 = vld [vmem:[%s763 + $0x8] sm:$0xff]
        %v2057 = vld [vmem:[%s763 + $0x10] sm:$0xff]
        %v2058 = vld [vmem:[%s763 + $0x18] sm:$0xff]
        %v2059 = vld [vmem:[%s763 + $0x20] sm:$0xff]
        %v2060 = vld [vmem:[%s763 + $0x28] sm:$0xff]
        %v2061 = vld [vmem:[%s763 + $0x30] sm:$0xff]
        %v2062 = vld [vmem:[%s763 + $0x38] sm:$0xff]
        %v2063 = vld [vmem:[%s763 + $0x40] sm:$0xff]
        %v2064 = vld [vmem:[%s763 + $0x48] sm:$0xff]
        %v2065 = vld [vmem:[%s763 + $0x50] sm:$0xff]
        %v2066 = vld [vmem:[%s763 + $0x58] sm:$0xff]
        %v2067 = vld [vmem:[%s763 + $0x60] sm:$0xff]
        %v2068 = vld [vmem:[%s763 + $0x68] sm:$0xff]
        %v2069 = vld [vmem:[%s763 + $0x70] sm:$0xff]
        %v2070 = vld [vmem:[%s763 + $0x78] sm:$0xff]
        %v2071 = vpack.c.bf16 %v2054, %v2053
        %v2072 = vld [vmem:[%s767] sm:$0x3]
        %v2074 = vperm.slane %v2072, 0
        %v2075 = vperm.slane %v2072, 1
        %v2094 = vunpack.c.l.b16 %v2055
        %v2095 = vunpack.c.h.b16 %v2055
        %v2096 = vunpack.c.l.b16 %v2056
        %v2097 = vunpack.c.h.b16 %v2056
        %v2098 = vunpack.c.l.b16 %v2057
        %v2099 = vunpack.c.h.b16 %v2057
        %v2100 = vunpack.c.l.b16 %v2058
        %v2101 = vunpack.c.h.b16 %v2058
        %v2102 = vunpack.c.l.b16 %v2059
        %v2103 = vunpack.c.h.b16 %v2059
        %v2104 = vunpack.c.l.b16 %v2060
        %v2105 = vunpack.c.h.b16 %v2060
        %v2106 = vunpack.c.l.b16 %v2061
        %v2107 = vunpack.c.h.b16 %v2061
        %v2108 = vunpack.c.l.b16 %v2062
        %v2109 = vunpack.c.h.b16 %v2062
        %v2110 = vunpack.c.l.b16 %v2063
        %v2111 = vunpack.c.h.b16 %v2063
        %v2112 = vunpack.c.l.b16 %v2064
        %v2113 = vunpack.c.h.b16 %v2064
        %v2114 = vunpack.c.l.b16 %v2065
        %v2115 = vunpack.c.h.b16 %v2065
        %v2116 = vunpack.c.l.b16 %v2066
        %v2117 = vunpack.c.h.b16 %v2066
        %v2118 = vunpack.c.l.b16 %v2067
        %v2119 = vunpack.c.h.b16 %v2067
        %v2120 = vunpack.c.l.b16 %v2068
        %v2121 = vunpack.c.h.b16 %v2068
        %v2122 = vunpack.c.l.b16 %v2069
        %v2123 = vunpack.c.h.b16 %v2069
        %v2124 = vunpack.c.l.b16 %v2070
        %v2125 = vunpack.c.h.b16 %v2070
        %v2126 = vpack.c.b16 %v2096, %v2094
        %v2127 = vpack.c.b16 %v2097, %v2095
        %v2128 = vpack.c.b16 %v2100, %v2098
        %v2129 = vpack.c.b16 %v2101, %v2099
        %v2130 = vpack.c.b16 %v2104, %v2102
        %v2131 = vpack.c.b16 %v2105, %v2103
        %v2132 = vpack.c.b16 %v2108, %v2106
        %v2133 = vpack.c.b16 %v2109, %v2107
        %v2134 = vpack.c.b16 %v2112, %v2110
        %v2135 = vpack.c.b16 %v2113, %v2111
        %v2136 = vpack.c.b16 %v2116, %v2114
        %v2137 = vpack.c.b16 %v2117, %v2115
        %v2138 = vpack.c.b16 %v2120, %v2118
        %v2139 = vpack.c.b16 %v2121, %v2119
        %v2140 = vpack.c.b16 %v2124, %v2122
        %v2141 = vpack.c.b16 %v2125, %v2123
        %2158 = vmatpush.bf16.msra.mxu0 %v2140
        %2159 = vmatpush.bf16.msra.mxu0 %v2138
        %2160 = vmatpush.bf16.msra.mxu0 %v2136
        %2161 = vmatpush.bf16.msra.mxu0 %v2134
        %2162 = vmatpush.bf16.msra.mxu0 %v2132
        %2163 = vmatpush.bf16.msra.mxu0 %v2130
        %2164 = vmatpush.bf16.msra.mxu0 %v2128
        %2165 = vmatpush.bf16.msra.mxu0 %v2126
        %2166 = vmatmul.bf16.gmra.mxu0 %v2071
        %v2167 = vpop.f32.mrf.mxu0
        %v2168 = vadd.f32 %v2074, %v2167
        %v2169 = vpop.f32.mrf.mxu0
        %v2170 = vadd.f32 %v2074, %v2169
        %2171 = vdwg.mxu0
        %2172 = vmatpush.bf16.msra.mxu0 %v2141
        %2173 = vmatpush.bf16.msra.mxu0 %v2139
        %2174 = vmatpush.bf16.msra.mxu0 %v2137
        %2175 = vmatpush.bf16.msra.mxu0 %v2135
        %2176 = vmatpush.bf16.msra.mxu0 %v2133
        %2177 = vmatpush.bf16.msra.mxu0 %v2131
        %2178 = vmatpush.bf16.msra.mxu0 %v2129
        %2179 = vmatpush.bf16.msra.mxu0 %v2127
        %2180 = vmatmul.bf16.gmra.mxu0 %v2071
        %v2181 = vpop.f32.mrf.mxu0
        %v2182 = vadd.f32 %v2075, %v2181
        %v2183 = vpop.f32.mrf.mxu0
        %v2184 = vadd.f32 %v2075, %v2183
        %2185 = vdwg.mxu0
        %v2186 = vmul.f32 %v2168, 0.5
        %v2187 = vmul.f32 %v2182, 0.5
        %v2188 = vmul.f32 %v2170, 0.5
        %v2189 = vmul.f32 %v2184, 0.5
        %v2190 = vmul.f32 %v2168, 0.70710677
        %v2191 = vmul.f32 %v2182, 0.70710677
        %v2192 = vmul.f32 %v2170, 0.70710677
        %v2193 = vmul.f32 %v2184, 0.70710677
        %v2194 = vand.u32 2147483647, %v2190
        %v2195 = vand.u32 2147483647, %v2191
        %v2196 = vand.u32 2147483647, %v2192
        %v2197 = vand.u32 2147483647, %v2193
        %v2198 = vmul.f32 %v2194, 0.5
        %v2199 = vmul.f32 %v2195, 0.5
        %v2200 = vmul.f32 %v2196, 0.5
        %v2201 = vmul.f32 %v2197, 0.5
        %v2202 = vadd.f32 %v2198, 1.0
        %v2203 = vadd.f32 %v2199, 1.0
        %v2204 = vadd.f32 %v2200, 1.0
        %v2205 = vadd.f32 %v2201, 1.0
        %v2206 = vrcp.pop %v2202
        %v2207 = vmul.f32 %v2202, %v2206
        %v2208 = vsub.f32 1.0, %v2207
        %v2209 = vmul.f32 %v2206, %v2208
        %v2210 = vadd.f32 %v2206, %v2209
        %vm2211 = vweird.f32 %v2202
        %vm2212 = vweird.f32 %v2206
        %vm2213 = vmor %vm2211, %vm2212
        %v2214 = vsel %vm2213, %v2206, %v2210
        %v2215 = vand.u32 2147483647, %v2202
        %vm2216 = vcmp.eq.f32.partialorder %v2215, 8.507059e+37
        %v2217 = vand.u32 %v2202, 2147483648
        %v2218 = vor.u32 1.1754944e-38, %v2217
        %v2219 = vsel %vm2216, %v2218, %v2214
        %v2220 = vmul.f32 1.0, %v2219
        %v2221 = vrcp.pop %v2203
        %v2222 = vmul.f32 %v2203, %v2221
        %v2223 = vsub.f32 1.0, %v2222
        %v2224 = vmul.f32 %v2221, %v2223
        %v2225 = vadd.f32 %v2221, %v2224
        %vm2226 = vweird.f32 %v2203
        %vm2227 = vweird.f32 %v2221
        %vm2228 = vmor %vm2226, %vm2227
        %v2229 = vsel %vm2228, %v2221, %v2225
        %v2230 = vand.u32 2147483647, %v2203
        %vm2231 = vcmp.eq.f32.partialorder %v2230, 8.507059e+37
        %v2232 = vand.u32 %v2203, 2147483648
        %v2233 = vor.u32 1.1754944e-38, %v2232
        %v2234 = vsel %vm2231, %v2233, %v2229
        %v2235 = vmul.f32 1.0, %v2234
        %v2236 = vrcp.pop %v2204
        %v2237 = vmul.f32 %v2204, %v2236
        %v2238 = vsub.f32 1.0, %v2237
        %v2239 = vmul.f32 %v2236, %v2238
        %v2240 = vadd.f32 %v2236, %v2239
        %vm2241 = vweird.f32 %v2204
        %vm2242 = vweird.f32 %v2236
        %vm2243 = vmor %vm2241, %vm2242
        %v2244 = vsel %vm2243, %v2236, %v2240
        %v2245 = vand.u32 2147483647, %v2204
        %vm2246 = vcmp.eq.f32.partialorder %v2245, 8.507059e+37
        %v2247 = vand.u32 %v2204, 2147483648
        %v2248 = vor.u32 1.1754944e-38, %v2247
        %v2249 = vsel %vm2246, %v2248, %v2244
        %v2250 = vmul.f32 1.0, %v2249
        %v2251 = vrcp.pop %v2205
        %v2252 = vmul.f32 %v2205, %v2251
        %v2253 = vsub.f32 1.0, %v2252
        %v2254 = vmul.f32 %v2251, %v2253
        %v2255 = vadd.f32 %v2251, %v2254
        %vm2256 = vweird.f32 %v2205
        %vm2257 = vweird.f32 %v2251
        %vm2258 = vmor %vm2256, %vm2257
        %v2259 = vsel %vm2258, %v2251, %v2255
        %v2260 = vand.u32 2147483647, %v2205
        %vm2261 = vcmp.eq.f32.partialorder %v2260, 8.507059e+37
        %v2262 = vand.u32 %v2205, 2147483648
        %v2263 = vor.u32 1.1754944e-38, %v2262
        %v2264 = vsel %vm2261, %v2263, %v2259
        %v2265 = vmul.f32 1.0, %v2264
        %v2266 = vmul.f32 %v2220, 0.17087276
        %v2267 = vmul.f32 %v2235, 0.17087276
        %v2268 = vmul.f32 %v2250, 0.17087276
        %v2269 = vmul.f32 %v2265, 0.17087276
        %v2270 = vadd.f32 %v2266, -0.82215226
        %v2271 = vadd.f32 %v2267, -0.82215226
        %v2272 = vadd.f32 %v2268, -0.82215226
        %v2273 = vadd.f32 %v2269, -0.82215226
        %v2274 = vmul.f32 %v2220, %v2270
        %v2275 = vmul.f32 %v2235, %v2271
        %v2276 = vmul.f32 %v2250, %v2272
        %v2277 = vmul.f32 %v2265, %v2273
        %v2278 = vadd.f32 %v2274, 1.4885159
        %v2279 = vadd.f32 %v2275, 1.4885159
        %v2280 = vadd.f32 %v2276, 1.4885159
        %v2281 = vadd.f32 %v2277, 1.4885159
        %v2282 = vmul.f32 %v2220, %v2278
        %v2283 = vmul.f32 %v2235, %v2279
        %v2284 = vmul.f32 %v2250, %v2280
        %v2285 = vmul.f32 %v2265, %v2281
        %v2286 = vadd.f32 %v2282, -1.135204
        %v2287 = vadd.f32 %v2283, -1.135204
        %v2288 = vadd.f32 %v2284, -1.135204
        %v2289 = vadd.f32 %v2285, -1.135204
        %v2290 = vmul.f32 %v2220, %v2286
        %v2291 = vmul.f32 %v2235, %v2287
        %v2292 = vmul.f32 %v2250, %v2288
        %v2293 = vmul.f32 %v2265, %v2289
        %v2294 = vadd.f32 %v2290, 0.27886808
        %v2295 = vadd.f32 %v2291, 0.27886808
        %v2296 = vadd.f32 %v2292, 0.27886808
        %v2297 = vadd.f32 %v2293, 0.27886808
        %v2298 = vmul.f32 %v2220, %v2294
        %v2299 = vmul.f32 %v2235, %v2295
        %v2300 = vmul.f32 %v2250, %v2296
        %v2301 = vmul.f32 %v2265, %v2297
        %v2302 = vadd.f32 %v2298, -0.18628806
        %v2303 = vadd.f32 %v2299, -0.18628806
        %v2304 = vadd.f32 %v2300, -0.18628806
        %v2305 = vadd.f32 %v2301, -0.18628806
        %v2306 = vmul.f32 %v2220, %v2302
        %v2307 = vmul.f32 %v2235, %v2303
        %v2308 = vmul.f32 %v2250, %v2304
        %v2309 = vmul.f32 %v2265, %v2305
        %v2310 = vadd.f32 %v2306, 0.09678418
        %v2311 = vadd.f32 %v2307, 0.09678418
        %v2312 = vadd.f32 %v2308, 0.09678418
        %v2313 = vadd.f32 %v2309, 0.09678418
        %v2314 = vmul.f32 %v2220, %v2310
        %v2315 = vmul.f32 %v2235, %v2311
        %v2316 = vmul.f32 %v2250, %v2312
        %v2317 = vmul.f32 %v2265, %v2313
        %v2318 = vadd.f32 %v2314, 0.37409195
        %v2319 = vadd.f32 %v2315, 0.37409195
        %v2320 = vadd.f32 %v2316, 0.37409195
        %v2321 = vadd.f32 %v2317, 0.37409195
        %v2322 = vmul.f32 %v2220, %v2318
        %v2323 = vmul.f32 %v2235, %v2319
        %v2324 = vmul.f32 %v2250, %v2320
        %v2325 = vmul.f32 %v2265, %v2321
        %v2326 = vadd.f32 %v2322, 1.0000237
        %v2327 = vadd.f32 %v2323, 1.0000237
        %v2328 = vadd.f32 %v2324, 1.0000237
        %v2329 = vadd.f32 %v2325, 1.0000237
        %v2330 = vmul.f32 %v2220, %v2326
        %v2331 = vmul.f32 %v2235, %v2327
        %v2332 = vmul.f32 %v2250, %v2328
        %v2333 = vmul.f32 %v2265, %v2329
        %v2334 = vadd.f32 %v2330, -1.2655122
        %v2335 = vadd.f32 %v2331, -1.2655122
        %v2336 = vadd.f32 %v2332, -1.2655122
        %v2337 = vadd.f32 %v2333, -1.2655122
        %v2338 = vsub.f32 0.0, %v2194
        %v2339 = vsub.f32 0.0, %v2195
        %v2340 = vsub.f32 0.0, %v2196
        %v2341 = vsub.f32 0.0, %v2197
        %v2342 = vmul.f32 %v2338, %v2194
        %v2343 = vmul.f32 %v2339, %v2195
        %v2344 = vmul.f32 %v2340, %v2196
        %v2345 = vmul.f32 %v2341, %v2197
        %v2346 = vadd.f32 %v2342, %v2334
        %v2347 = vadd.f32 %v2343, %v2335
        %v2348 = vadd.f32 %v2344, %v2336
        %v2349 = vadd.f32 %v2345, %v2337
        %v2350 = vmul.f32 %v2346, 1.442695
        %v2351 = vpow.pop %v2350
        %v2352 = vmul.f32 %v2347, 1.442695
        %v2353 = vpow.pop %v2352
        %v2354 = vmul.f32 %v2348, 1.442695
        %v2355 = vpow.pop %v2354
        %v2356 = vmul.f32 %v2349, 1.442695
        %v2357 = vpow.pop %v2356
        %v2358 = vmul.f32 %v2220, %v2351
        %v2359 = vmul.f32 %v2235, %v2353
        %v2360 = vmul.f32 %v2250, %v2355
        %v2361 = vmul.f32 %v2265, %v2357
        %vm2362 = vcmp.ge.f32.partialorder %v2190, 0.0
        %vm2363 = vcmp.ge.f32.partialorder %v2191, 0.0
        %vm2364 = vcmp.ge.f32.partialorder %v2192, 0.0
        %vm2365 = vcmp.ge.f32.partialorder %v2193, 0.0
        %v2366 = vsub.f32 1.0, %v2358
        %v2367 = vsub.f32 1.0, %v2359
        %v2368 = vsub.f32 1.0, %v2360
        %v2369 = vsub.f32 1.0, %v2361
        %v2370 = vsub.f32 %v2358, 1.0
        %v2371 = vsub.f32 %v2359, 1.0
        %v2372 = vsub.f32 %v2360, 1.0
        %v2373 = vsub.f32 %v2361, 1.0
        %v2374 = vsel %vm2362, %v2366, %v2370
        %v2375 = vsel %vm2363, %v2367, %v2371
        %v2376 = vsel %vm2364, %v2368, %v2372
        %v2377 = vsel %vm2365, %v2369, %v2373
        %v2378 = vadd.f32 %v2374, 1.0
        %v2379 = vadd.f32 %v2375, 1.0
        %v2380 = vadd.f32 %v2376, 1.0
        %v2381 = vadd.f32 %v2377, 1.0
        %v2382 = vmul.f32 %v2186, %v2378
        %v2383 = vmul.f32 %v2187, %v2379
        %v2384 = vmul.f32 %v2188, %v2380
        %v2385 = vmul.f32 %v2189, %v2381
        %v2386 = vld [vmem:[%s772] sm:$0xf]
        %v2387 = vld [vmem:[%s772 + $0x4] sm:$0xf]
        %v2388 = vld [vmem:[%s772 + $0x8] sm:$0xf]
        %v2389 = vld [vmem:[%s772 + $0xc] sm:$0xf]
        %v2390 = vld [vmem:[%s772 + $0x10] sm:$0xf]
        %v2391 = vld [vmem:[%s772 + $0x14] sm:$0xf]
        %v2392 = vld [vmem:[%s772 + $0x18] sm:$0xf]
        %v2393 = vld [vmem:[%s772 + $0x1c] sm:$0xf]
        %v2394 = vld [vmem:[%s772 + $0x20] sm:$0xf]
        %v2395 = vld [vmem:[%s772 + $0x24] sm:$0xf]
        %v2396 = vld [vmem:[%s772 + $0x28] sm:$0xf]
        %v2397 = vld [vmem:[%s772 + $0x2c] sm:$0xf]
        %v2398 = vld [vmem:[%s772 + $0x30] sm:$0xf]
        %v2399 = vld [vmem:[%s772 + $0x34] sm:$0xf]
        %v2400 = vld [vmem:[%s772 + $0x38] sm:$0xf]
        %v2401 = vld [vmem:[%s772 + $0x3c] sm:$0xf]
        %v2402 = vld [vmem:[%s772 + $0x40] sm:$0xf]
        %v2403 = vld [vmem:[%s772 + $0x44] sm:$0xf]
        %v2404 = vld [vmem:[%s772 + $0x48] sm:$0xf]
        %v2405 = vld [vmem:[%s772 + $0x4c] sm:$0xf]
        %v2406 = vld [vmem:[%s772 + $0x50] sm:$0xf]
        %v2407 = vld [vmem:[%s772 + $0x54] sm:$0xf]
        %v2408 = vld [vmem:[%s772 + $0x58] sm:$0xf]
        %v2409 = vld [vmem:[%s772 + $0x5c] sm:$0xf]
        %v2410 = vld [vmem:[%s772 + $0x60] sm:$0xf]
        %v2411 = vld [vmem:[%s772 + $0x64] sm:$0xf]
        %v2412 = vld [vmem:[%s772 + $0x68] sm:$0xf]
        %v2413 = vld [vmem:[%s772 + $0x6c] sm:$0xf]
        %v2414 = vld [vmem:[%s772 + $0x70] sm:$0xf]
        %v2415 = vld [vmem:[%s772 + $0x74] sm:$0xf]
        %v2416 = vld [vmem:[%s772 + $0x78] sm:$0xf]
        %v2417 = vld [vmem:[%s772 + $0x7c] sm:$0xf]
        %v2418 = vpack.c.bf16 %v2384, %v2382
        %v2419 = vpack.c.bf16 %v2385, %v2383
        %v2420 = vld [vmem:[%s775] sm:$0x1]
        %v2422 = vperm.slane %v2420, 0
        %v2456 = vunpack.c.l.b16 %v2386
        %v2457 = vunpack.c.l.b16 %v2387
        %v2458 = vunpack.c.l.b16 %v2388
        %v2459 = vunpack.c.l.b16 %v2389
        %v2460 = vunpack.c.l.b16 %v2390
        %v2461 = vunpack.c.l.b16 %v2391
        %v2462 = vunpack.c.l.b16 %v2392
        %v2463 = vunpack.c.l.b16 %v2393
        %v2464 = vunpack.c.l.b16 %v2394
        %v2465 = vunpack.c.l.b16 %v2395
        %v2466 = vunpack.c.l.b16 %v2396
        %v2467 = vunpack.c.l.b16 %v2397
        %v2468 = vunpack.c.l.b16 %v2398
        %v2469 = vunpack.c.l.b16 %v2399
        %v2470 = vunpack.c.l.b16 %v2400
        %v2471 = vunpack.c.l.b16 %v2401
        %v2472 = vunpack.c.l.b16 %v2402
        %v2473 = vunpack.c.l.b16 %v2403
        %v2474 = vunpack.c.l.b16 %v2404
        %v2475 = vunpack.c.l.b16 %v2405
        %v2476 = vunpack.c.l.b16 %v2406
        %v2477 = vunpack.c.l.b16 %v2407
        %v2478 = vunpack.c.l.b16 %v2408
        %v2479 = vunpack.c.l.b16 %v2409
        %v2480 = vunpack.c.l.b16 %v2410
        %v2481 = vunpack.c.l.b16 %v2411
        %v2482 = vunpack.c.l.b16 %v2412
        %v2483 = vunpack.c.l.b16 %v2413
        %v2484 = vunpack.c.l.b16 %v2414
        %v2485 = vunpack.c.l.b16 %v2415
        %v2486 = vunpack.c.l.b16 %v2416
        %v2487 = vunpack.c.l.b16 %v2417
        %v2488 = vpack.c.b16 %v2457, %v2456
        %v2489 = vpack.c.b16 %v2459, %v2458
        %v2490 = vpack.c.b16 %v2461, %v2460
        %v2491 = vpack.c.b16 %v2463, %v2462
        %v2492 = vpack.c.b16 %v2465, %v2464
        %v2493 = vpack.c.b16 %v2467, %v2466
        %v2494 = vpack.c.b16 %v2469, %v2468
        %v2495 = vpack.c.b16 %v2471, %v2470
        %v2496 = vpack.c.b16 %v2473, %v2472
        %v2497 = vpack.c.b16 %v2475, %v2474
        %v2498 = vpack.c.b16 %v2477, %v2476
        %v2499 = vpack.c.b16 %v2479, %v2478
        %v2500 = vpack.c.b16 %v2481, %v2480
        %v2501 = vpack.c.b16 %v2483, %v2482
        %v2502 = vpack.c.b16 %v2485, %v2484
        %v2503 = vpack.c.b16 %v2487, %v2486
        %2520 = vmatpush.bf16.msra.mxu0 %v2495
        %2521 = vmatpush.bf16.msra.mxu0 %v2494
        %2522 = vmatpush.bf16.msra.mxu0 %v2493
        %2523 = vmatpush.bf16.msra.mxu0 %v2492
        %2524 = vmatpush.bf16.msra.mxu0 %v2491
        %2525 = vmatpush.bf16.msra.mxu0 %v2490
        %2526 = vmatpush.bf16.msra.mxu0 %v2489
        %2527 = vmatpush.bf16.msra.mxu0 %v2488
        %2528 = vmatmul.bf16.gmra.mxu0 %v2418
        %v2529 = vpop.f32.mrf.mxu0
        %v2530 = vadd.f32 %v2422, %v2529
        %v2531 = vpop.f32.mrf.mxu0
        %v2532 = vadd.f32 %v2422, %v2531
        %2533 = vdwg.mxu0
        %2534 = vmatpush.bf16.msra.mxu0 %v2503
        %2535 = vmatpush.bf16.msra.mxu0 %v2502
        %2536 = vmatpush.bf16.msra.mxu0 %v2501
        %2537 = vmatpush.bf16.msra.mxu0 %v2500
        %2538 = vmatpush.bf16.msra.mxu0 %v2499
        %2539 = vmatpush.bf16.msra.mxu0 %v2498
        %2540 = vmatpush.bf16.msra.mxu0 %v2497
        %2541 = vmatpush.bf16.msra.mxu0 %v2496
        %2542 = vmatmul.bf16.gmra.mxu0 %v2419
        %v2543 = vpop.f32.mrf.mxu0
        %v2544 = vadd.f32 %v2530, %v2543
        %v2545 = vpop.f32.mrf.mxu0
        %v2546 = vadd.f32 %v2532, %v2545
        %2547 = vdwg.mxu0
        %v2548 = vadd.f32 %v2001, %v2544
        %v2549 = vadd.f32 %v2002, %v2546
        %2550 = vst [vmem:[#allocation2] sm:$0xff] %v2548
        %2551 = vst [vmem:[#allocation2 + $0x8] sm:$0xff] %v2549
        %p2552 = scmp.eq.s32.totalorder %s36, 1
        // Predicated region
        $region93: #{encoder_forward.1} parent=87 // pred_check
          %p2553 = pneg %p2552
        $region94: #{encoder_forward.1} parent=87 // pred_check_branch
          %2555 = sbr.rel (%p2553) target = $region96
        $region95: #{encoder_forward.1} parent=87 // pred_region
          %v2556 = vld [vmem:[%s15] sm:$0x1]
          %v2557 = vld [vmem:[%s16] sm:$0x1]
          %2558 = vadd.xlane.f32.xlu0 %v2548
          %v2559 = vpop.xlane.xlu0 %2558
          %2560 = vadd.xlane.f32.xlu0 %v2549
          %v2561 = vpop.xlane.xlu0 %2560
          %v2562 = vmul.f32 %v2559, %v803
          %v2563 = vmul.f32 %v2561, %v803
          %v2564 = vsub.f32 %v2548, %v2562
          %v2565 = vsub.f32 %v2549, %v2563
          %v2566 = vmul.f32 %v2564, %v2564
          %v2567 = vmul.f32 %v2565, %v2565
          %2568 = vadd.xlane.f32.xlu0 %v2566
          %v2569 = vpop.xlane.xlu0 %2568
          %2570 = vadd.xlane.f32.xlu0 %v2567
          %v2571 = vpop.xlane.xlu0 %2570
          %v2572 = vmul.f32 %v2569, %v803
          %v2573 = vmul.f32 %v2571, %v803
          %v2574 = vadd.f32 %v2572, 1e-06
          %v2575 = vadd.f32 %v2573, 1e-06
          %v2576 = vrsqrt.pop %v2574
          %v2577 = vmul.f32 %v2576, %v2574
          %v2578 = vmul.f32 %v2577, %v2576
          %v2579 = vmul.f32 0.5, %v2578
          %v2580 = vsub.f32 1.5, %v2579
          %v2581 = vmul.f32 %v2576, %v2580
          %vm2582 = vweird.f32 %v2574
          %vm2583 = vweird.f32 %v2576
          %vm2584 = vmor %vm2582, %vm2583
          %v2585 = vsel %vm2584, %v2576, %v2581
          %v2586 = vrsqrt.pop %v2575
          %v2587 = vmul.f32 %v2586, %v2575
          %v2588 = vmul.f32 %v2587, %v2586
          %v2589 = vmul.f32 0.5, %v2588
          %v2590 = vsub.f32 1.5, %v2589
          %v2591 = vmul.f32 %v2586, %v2590
          %vm2592 = vweird.f32 %v2575
          %vm2593 = vweird.f32 %v2586
          %vm2594 = vmor %vm2592, %vm2593
          %v2595 = vsel %vm2594, %v2586, %v2591
          %v2596 = vmul.f32 %v2564, %v2585
          %v2597 = vmul.f32 %v2565, %v2595
          %v2599 = vperm.slane %v2556, 0
          %v2601 = vmul.f32 %v2596, %v2599
          %v2602 = vmul.f32 %v2597, %v2599
          %v2604 = vperm.slane %v2557, 0
          %v2606 = vadd.f32 %v2601, %v2604
          %v2607 = vadd.f32 %v2602, %v2604
          %2608 = vst [vmem:[%s719] sm:$0xff] %v2606
          %2609 = vst [vmem:[%s719 + $0x8] sm:$0xff] %v2607
        $region96: #{encoder_forward.1} parent=87 // pred_fallthru
          _
        %s2610 = sand.u32 %s478, 1
        %s2611 = scalar_lea.sflag [#allocation4], %s2610
        %s2612 = sand.u32 %s478, 1
        %s2613 = smul.addr %s2612, 16
        %s2614 = scalar_lea.vmem [#allocation3], %s2613
        // Predicated region
        $region97: #{encoder_forward.1} parent=87 // pred_check
          %p2615 = pneg %p488
        $region98: #{encoder_forward.1} parent=87 // pred_check_branch
          %2617 = sbr.rel (%p2615) target = $region100
        $region99: #{encoder_forward.1} parent=87 // pred_region
          %s2618 = smul.u32 2, %s35
          %2620 = vsyncadd %s2611, 0
          %s2621 = smul.addr %s2618, 8
          %s2622 = scalar_lea.hbm %s17, %s2621
          %s2623 = sshll.u32 %s2614, 4
          %s2624 = int_to_ptr.vmem [resolvable:$true] %s2623
          %s2625 = sshll.u32 %s2622, 4
          %s2626 = int_to_ptr.hbm [resolvable:$true] %s2625
          %2631 = dma.vmem_to_hbm [thread:$0]  %s2624, 256, %s2626, %s2611, 128, 128, 8
        $region100: #{encoder_forward.1} parent=87 // pred_fallthru
          _
      $region88: #{encoder_forward.1} parent=5 // pred_fallthru
        _
      %p2632 = scmp.le.s32.totalorder 2, %s26
      // Predicated region
      $region101: #{encoder_forward.1} parent=5 // pred_check
        %p2633 = pneg %p2632
      $region102: #{encoder_forward.1} parent=5 // pred_check_branch
        %2635 = sbr.rel (%p2633) target = $region104
      $region103: #{encoder_forward.1} parent=5 // pred_region
        %s2636 = ssub.s32 %s26, 2
        // Predicated region
        $region105: #{encoder_forward.1} parent=103 // pred_check
          %p2637 = pneg %p494
        $region106: #{encoder_forward.1} parent=103 // pred_check_branch
          %2639 = sbr.rel (%p2637) target = $region108
        $region107: #{encoder_forward.1} parent=103 // pred_region
          %s2640 = sand.u32 %s479, 1
          %s2641 = scalar_lea.sflag [#allocation4], %s2640
          %s2642 = sand.u32 %s479, 1
          %s2643 = smul.addr %s2642, 16
          %s2644 = scalar_lea.vmem [#allocation3], %s2643
          %2646 = dma.done %s2641, 256
        $region108: #{encoder_forward.1} parent=103 // pred_fallthru
          _
      $region104: #{encoder_forward.1} parent=5 // pred_fallthru
        _
    $region6: #{encoder_forward.1} parent=1 // loop_footer
      %s30 = sadd.s32 1, %s26
    $region7: #{encoder_forward.1} parent=1 // loop_footer_branch
      %25 = sbr.rel target = $region3
    $region8: #{encoder_forward.1} parent=1 // loop_exit
      _
    %2647 = vsyncpa [#allocation4], 1
    %s2648 = scalar_lea.sflag [#allocation4], 1
    %2649 = vsyncpa %s2648, 1

</llo_original>
